<compile_context>
chip_gen: v6e
topology: v6e:2x2x1
jax: 0.10.0
libtpu: 0.0.40
codegen_flags: <defaults>
</compile_context>

<pallas_src>
import math

import jax
import jax.numpy as jnp
from jax import lax
from jax.experimental import pallas as pl


# ----------------------------- Pallas kernels ------------------------------

def conv1_relu_pool_kernel(p1_ref, w1_ref, b1_ref, o_ref):
    # p1_ref: (4, N*14*14, 25) bf16 -- im2col patches, one block per 2x2 pool position.
    # Fused: conv1 matmul + bias + ReLU + MaxPool2d(2,2) (elementwise max over blocks).
    w = w1_ref[...]                       # (25, 6) bf16
    b = b1_ref[...]                       # (1, 6)  f32
    acc = None
    for s in range(4):
        a = jnp.dot(p1_ref[s], w, preferred_element_type=jnp.float32) + b
        a = jnp.maximum(a, 0.0)
        acc = a if acc is None else jnp.maximum(acc, a)
    o_ref[...] = acc                      # (N*14*14, 6), rows ordered (n, i, j)


def conv2_bn_pool_fc_kernel(p2_ref, w2_ref, b2_ref, gamma_ref, beta_ref,
                            wf1_ref, bf1_ref, wf2_ref, bf2_ref, wf3_ref, bf3_ref,
                            o_ref):
    # p2_ref: (4, 25*N, 150) bf16 -- conv2 im2col patches, one block per pool position,
    #         rows ordered (i, j, n).  Everything below stays resident in VMEM/vregs.
    w2 = w2_ref[...]                      # (150, 16) bf16
    b2 = b2_ref[...]                      # (1, 16)   f32

    # conv2 + bias for each of the 4 pool-window positions (f32 accumulation).
    zs = [jnp.dot(p2_ref[s], w2, preferred_element_type=jnp.float32) + b2
          for s in range(4)]              # 4 x (25*N, 16)

    # BatchNorm2d, training-mode forward: biased batch statistics over N*10*10.
    rows = zs[0].shape[0]
    count = 4.0 * rows
    mean = sum([jnp.sum(z, axis=0, keepdims=True) for z in zs]) / count
    var = sum([jnp.sum((z - mean) ** 2, axis=0, keepdims=True) for z in zs]) / count
    scale = gamma_ref[...] * lax.rsqrt(var + 1e-5)
    beta = beta_ref[...]

    # affine + ReLU, then MaxPool2d(2,2) as an elementwise max over the 4 blocks.
    ys = [jnp.maximum((z - mean) * scale + beta, 0.0) for z in zs]
    pool2 = jnp.maximum(jnp.maximum(ys[0], ys[1]), jnp.maximum(ys[2], ys[3]))  # (25*N, 16)

    # fc1: torch.flatten(NCHW) order is folded into per-(i,j) weight blocks (16,120).
    n = rows // 25
    acc = jnp.zeros((n, 120), jnp.float32)
    for r in range(25):                   # r = i*5 + j ; rows r*n:(r+1)*n hold samples 0..n-1
        xr = pool2[r * n:(r + 1) * n, :]  # (N, 16)
        acc = acc + jnp.dot(xr, wf1_ref[r], preferred_element_type=jnp.float32)
    h1 = jnp.maximum(acc + bf1_ref[...], 0.0)                                   # (N, 120)

    h2 = jnp.dot(h1, wf2_ref[...], preferred_element_type=jnp.float32) + bf2_ref[...]
    h2 = jnp.maximum(h2, 0.0)                                                   # (N, 84)
    o_ref[...] = jnp.dot(h2, wf3_ref[...],
                         preferred_element_type=jnp.float32) + bf3_ref[...]     # (N, 10)


# --------------------- one-time parameter layout prep -----------------------

def prepare_params(params):
    # Hoisted out of the jitted forward: all weights go to their final MXU-friendly
    # layouts exactly once (conv weights as bf16 im2col matrices, fc1 as per-spatial-
    # position blocks encoding the NCHW flatten order).
    bf16, f32 = jnp.bfloat16, jnp.float32
    return {
        "w1m": jnp.transpose(params["w1"], (2, 3, 1, 0)).reshape(25, 6).astype(bf16),
        "b1": params["b1"].reshape(1, 6).astype(f32),
        "w2m": jnp.transpose(params["w2"], (2, 3, 1, 0)).reshape(150, 16).astype(bf16),
        "b2": params["b2"].reshape(1, 16).astype(f32),
        "gamma": params["gamma"].reshape(1, 16).astype(f32),
        "beta": params["beta"].reshape(1, 16).astype(f32),
        # wf1b[r, c, f] = Wfc1[f, c*25 + r]  (r = i*5 + j on the pooled 5x5 grid)
        "wf1b": jnp.transpose(params["wfc1"].reshape(120, 16, 25), (2, 1, 0)).astype(f32),
        "bf1": params["bfc1"].reshape(1, 120).astype(f32),
        "wf2": params["wfc2"].T.astype(f32),
        "bf2": params["bfc2"].reshape(1, 84).astype(f32),
        "wf3": params["wfc3"].T.astype(f32),
        "bf3": params["bfc3"].reshape(1, 10).astype(f32),
    }


# ------------------------------- forward pass --------------------------------

def mnist_toy_forward(pp, x_nchw):
    n = x_nchw.shape[0]
    x = jnp.transpose(x_nchw, (0, 2, 3, 1))[..., 0]            # (N, 32, 32)

    # conv1 im2col, grouped by 2x2 pool-window position so pooling is an in-kernel max.
    cols = jnp.stack([x[:, u:u + 28, v:v + 28]
                      for u in range(5) for v in range(5)], axis=-1)            # (N,28,28,25)
    p1 = jnp.stack([cols[:, sh::2, sw::2, :].reshape(n * 196, 25)
                    for sh in (0, 1) for sw in (0, 1)]).astype(jnp.bfloat16)    # (4, N*196, 25)

    pool1 = pl.pallas_call(
        conv1_relu_pool_kernel,
        out_shape=jax.ShapeDtypeStruct((n * 196, 6), jnp.float32),
    )(p1, pp["w1m"], pp["b1"])
    pool1 = pool1.reshape(n, 14, 14, 6)                         # rows were (n, i, j)

    # conv2 im2col: 5x5 windows over pool1, grouped by pool position, rows ordered (i, j, n).
    pcols = jnp.stack([pool1[:, di:di + 10, dj:dj + 10, :]
                       for di in range(5) for dj in range(5)], axis=3)          # (N,10,10,25,6)
    pcols = pcols.reshape(n, 10, 10, 150)
    p2 = jnp.stack([jnp.transpose(pcols[:, sh::2, sw::2, :], (1, 2, 0, 3)).reshape(25 * n, 150)
                    for sh in (0, 1) for sw in (0, 1)]).astype(jnp.bfloat16)    # (4, 25*N, 150)

    return pl.pallas_call(
        conv2_bn_pool_fc_kernel,
        out_shape=jax.ShapeDtypeStruct((n, 10), jnp.float32),
    )(p2, pp["w2m"], pp["b2"], pp["gamma"], pp["beta"],
      pp["wf1b"], pp["bf1"], pp["wf2"], pp["bf2"], pp["wf3"], pp["bf3"])


# --------------------------- deterministic params ---------------------------

def init_params(key):
    ks = jax.random.split(key, 10)

    def u(k, shape, fan_in):
        bound = 1.0 / math.sqrt(fan_in)
        return jax.random.uniform(k, shape, jnp.float32, -bound, bound)

    return {
        "w1": u(ks[0], (6, 1, 5, 5), 1 * 5 * 5),      # torch layout (C_out, C_in, kh, kw)
        "b1": u(ks[1], (6,), 1 * 5 * 5),
        "w2": u(ks[2], (16, 6, 5, 5), 6 * 5 * 5),
        "b2": u(ks[3], (16,), 6 * 5 * 5),
        "gamma": jnp.ones((16,), jnp.float32),        # BatchNorm2d default init
        "beta": jnp.zeros((16,), jnp.float32),
        "wfc1": u(ks[4], (120, 400), 400),            # torch Linear layout (out, in)
        "bfc1": u(ks[5], (120,), 400),
        "wfc2": u(ks[6], (84, 120), 120),
        "bfc2": u(ks[7], (84,), 120),
        "wfc3": u(ks[8], (10, 84), 84),
        "bfc3": u(ks[9], (10,), 84),
    }


# ------------------------------ pure-JAX reference ---------------------------

def reference_forward(params, x):
    # Mirrors the PyTorch forward directly on NCHW tensors (correctness check only).
    dn = ("NCHW", "OIHW", "NCHW")
    y = lax.conv_general_dilated(x, params["w1"], (1, 1), "VALID", dimension_numbers=dn)
    y = y + params["b1"][None, :, None, None]
    y = jnp.maximum(y, 0.0)
    y = lax.reduce_window(y, -jnp.inf, lax.max, (1, 1, 2, 2), (1, 1, 2, 2), "VALID")
    y = lax.conv_general_dilated(y, params["w2"], (1, 1), "VALID", dimension_numbers=dn)
    y = y + params["b2"][None, :, None, None]
    mean = jnp.mean(y, axis=(0, 2, 3), keepdims=True)
    var = jnp.mean((y - mean) ** 2, axis=(0, 2, 3), keepdims=True)
    y = (params["gamma"][None, :, None, None] * (y - mean) / jnp.sqrt(var + 1e-5)
         + params["beta"][None, :, None, None])
    y = jnp.maximum(y, 0.0)
    y = lax.reduce_window(y, -jnp.inf, lax.max, (1, 1, 2, 2), (1, 1, 2, 2), "VALID")
    y = y.reshape(y.shape[0], -1)
    y = jnp.maximum(y @ params["wfc1"].T + params["bfc1"], 0.0)
    y = jnp.maximum(y @ params["wfc2"].T + params["bfc2"], 0.0)
    return y @ params["wfc3"].T + params["bfc3"]


# ----------------------------------- main ------------------------------------

if __name__ == "__main__":
    key = jax.random.PRNGKey(0)
    pkey, xkey = jax.random.split(key)
    params = init_params(pkey)
    x = jax.random.normal(xkey, (2, 1, 32, 32), jnp.float32)   # NCHW, as in PyTorch

    prepped = prepare_params(params)                 # one-time weight layout prep
    fwd = jax.jit(mnist_toy_forward)
    out = jax.block_until_ready(fwd(prepped, x))

    ref = reference_forward(params, x)
    assert out.shape == (2, 10), out.shape
    assert bool(jnp.all(jnp.isfinite(out)))
    assert bool(jnp.allclose(out, ref, rtol=5e-2, atol=5e-2)), (out, ref)

    print("KERNEL_OK")
</pallas_src>

<mosaic_0001>
module attributes {stable_mosaic.version = 11 : i64} {
  func.func @conv1_relu_pool_kernel(%arg0: memref<4x392x25xbf16, #tpu.memory_space<vmem>>, %arg1: memref<25x6xbf16, #tpu.memory_space<vmem>>, %arg2: memref<1x6xf32, #tpu.memory_space<vmem>>, %arg3: memref<392x6xf32, #tpu.memory_space<vmem>>) attributes {dimension_semantics = [], scalar_prefetch = 0 : i64, scratch_operands = 0 : i64, tpu.core_type = #tpu.core_type<tc>} {
    %c0 = arith.constant 0 : index
    %c0_0 = arith.constant 0 : index
    %0 = vector.load %arg1[%c0, %c0_0] : memref<25x6xbf16, #tpu.memory_space<vmem>>, vector<25x6xbf16>
    %c0_1 = arith.constant 0 : index
    %c0_2 = arith.constant 0 : index
    %1 = vector.load %arg2[%c0_1, %c0_2] : memref<1x6xf32, #tpu.memory_space<vmem>>, vector<1x6xf32>
    %c0_3 = arith.constant 0 : index
    %c0_4 = arith.constant 0 : index
    %c0_5 = arith.constant 0 : index
    %2 = vector.load %arg0[%c0_3, %c0_4, %c0_5] : memref<4x392x25xbf16, #tpu.memory_space<vmem>>, vector<1x392x25xbf16>
    %3 = vector.shape_cast %2 : vector<1x392x25xbf16> to vector<392x25xbf16>
    %cst = arith.constant dense<0.000000e+00> : vector<392x6xf32>
    %4 = tpu.matmul %3, %0, %cst {dimension_numbers = #tpu.dot_dimension_numbers<[1], [0], [0], [1], [0, 0, 1, 1], [], []>} : vector<392x25xbf16>, vector<25x6xbf16>, vector<392x6xf32> -> vector<392x6xf32>
    %5 = vector.broadcast %1 : vector<1x6xf32> to vector<392x6xf32>
    %6 = arith.addf %4, %5 : vector<392x6xf32>
    %cst_6 = arith.constant 0.000000e+00 : f32
    %7 = vector.broadcast %cst_6 : f32 to vector<392x6xf32>
    %8 = arith.maximumf %6, %7 : vector<392x6xf32>
    %c1 = arith.constant 1 : index
    %c0_7 = arith.constant 0 : index
    %c0_8 = arith.constant 0 : index
    %9 = vector.load %arg0[%c1, %c0_7, %c0_8] : memref<4x392x25xbf16, #tpu.memory_space<vmem>>, vector<1x392x25xbf16>
    %10 = vector.shape_cast %9 : vector<1x392x25xbf16> to vector<392x25xbf16>
    %cst_9 = arith.constant dense<0.000000e+00> : vector<392x6xf32>
    %11 = tpu.matmul %10, %0, %cst_9 {dimension_numbers = #tpu.dot_dimension_numbers<[1], [0], [0], [1], [0, 0, 1, 1], [], []>} : vector<392x25xbf16>, vector<25x6xbf16>, vector<392x6xf32> -> vector<392x6xf32>
    %12 = vector.broadcast %1 : vector<1x6xf32> to vector<392x6xf32>
    %13 = arith.addf %11, %12 : vector<392x6xf32>
    %cst_10 = arith.constant 0.000000e+00 : f32
    %14 = vector.broadcast %cst_10 : f32 to vector<392x6xf32>
    %15 = arith.maximumf %13, %14 : vector<392x6xf32>
    %16 = arith.maximumf %8, %15 : vector<392x6xf32>
    %c2 = arith.constant 2 : index
    %c0_11 = arith.constant 0 : index
    %c0_12 = arith.constant 0 : index
    %17 = vector.load %arg0[%c2, %c0_11, %c0_12] : memref<4x392x25xbf16, #tpu.memory_space<vmem>>, vector<1x392x25xbf16>
    %18 = vector.shape_cast %17 : vector<1x392x25xbf16> to vector<392x25xbf16>
    %cst_13 = arith.constant dense<0.000000e+00> : vector<392x6xf32>
    %19 = tpu.matmul %18, %0, %cst_13 {dimension_numbers = #tpu.dot_dimension_numbers<[1], [0], [0], [1], [0, 0, 1, 1], [], []>} : vector<392x25xbf16>, vector<25x6xbf16>, vector<392x6xf32> -> vector<392x6xf32>
    %20 = vector.broadcast %1 : vector<1x6xf32> to vector<392x6xf32>
    %21 = arith.addf %19, %20 : vector<392x6xf32>
    %cst_14 = arith.constant 0.000000e+00 : f32
    %22 = vector.broadcast %cst_14 : f32 to vector<392x6xf32>
    %23 = arith.maximumf %21, %22 : vector<392x6xf32>
    %24 = arith.maximumf %16, %23 : vector<392x6xf32>
    %c3 = arith.constant 3 : index
    %c0_15 = arith.constant 0 : index
    %c0_16 = arith.constant 0 : index
    %25 = vector.load %arg0[%c3, %c0_15, %c0_16] : memref<4x392x25xbf16, #tpu.memory_space<vmem>>, vector<1x392x25xbf16>
    %26 = vector.shape_cast %25 : vector<1x392x25xbf16> to vector<392x25xbf16>
    %cst_17 = arith.constant dense<0.000000e+00> : vector<392x6xf32>
    %27 = tpu.matmul %26, %0, %cst_17 {dimension_numbers = #tpu.dot_dimension_numbers<[1], [0], [0], [1], [0, 0, 1, 1], [], []>} : vector<392x25xbf16>, vector<25x6xbf16>, vector<392x6xf32> -> vector<392x6xf32>
    %28 = vector.broadcast %1 : vector<1x6xf32> to vector<392x6xf32>
    %29 = arith.addf %27, %28 : vector<392x6xf32>
    %cst_18 = arith.constant 0.000000e+00 : f32
    %30 = vector.broadcast %cst_18 : f32 to vector<392x6xf32>
    %31 = arith.maximumf %29, %30 : vector<392x6xf32>
    %32 = arith.maximumf %24, %31 : vector<392x6xf32>
    %c0_19 = arith.constant 0 : index
    %c0_20 = arith.constant 0 : index
    %33 = vector.load %arg3[%c0_19, %c0_20] : memref<392x6xf32, #tpu.memory_space<vmem>>, vector<392x6xf32>
    tpu.vector_store %arg3[%c0_19, %c0_20], %32 {strides = array<i32>} : memref<392x6xf32, #tpu.memory_space<vmem>>, vector<392x6xf32>,
    return
  }
}

module attributes {stable_mosaic.version = 11 : i64} {
  func.func @conv2_bn_pool_fc_kernel(%arg0: memref<4x50x150xbf16, #tpu.memory_space<vmem>>, %arg1: memref<150x16xbf16, #tpu.memory_space<vmem>>, %arg2: memref<1x16xf32, #tpu.memory_space<vmem>>, %arg3: memref<1x16xf32, #tpu.memory_space<vmem>>, %arg4: memref<1x16xf32, #tpu.memory_space<vmem>>, %arg5: memref<25x16x120xf32, #tpu.memory_space<vmem>>, %arg6: memref<1x120xf32, #tpu.memory_space<vmem>>, %arg7: memref<120x84xf32, #tpu.memory_space<vmem>>, %arg8: memref<1x84xf32, #tpu.memory_space<vmem>>, %arg9: memref<84x10xf32, #tpu.memory_space<vmem>>, %arg10: memref<1x10xf32, #tpu.memory_space<vmem>>, %arg11: memref<2x10xf32, #tpu.memory_space<vmem>>) attributes {dimension_semantics = [], scalar_prefetch = 0 : i64, scratch_operands = 0 : i64, tpu.core_type = #tpu.core_type<tc>} {
    %c0 = arith.constant 0 : index
    %c0_0 = arith.constant 0 : index
    %0 = vector.load %arg1[%c0, %c0_0] : memref<150x16xbf16, #tpu.memory_space<vmem>>, vector<150x16xbf16>
    %c0_1 = arith.constant 0 : index
    %c0_2 = arith.constant 0 : index
    %1 = vector.load %arg2[%c0_1, %c0_2] : memref<1x16xf32, #tpu.memory_space<vmem>>, vector<1x16xf32>
    %c0_3 = arith.constant 0 : index
    %c0_4 = arith.constant 0 : index
    %c0_5 = arith.constant 0 : index
    %2 = vector.load %arg0[%c0_3, %c0_4, %c0_5] : memref<4x50x150xbf16, #tpu.memory_space<vmem>>, vector<1x50x150xbf16>
    %3 = vector.shape_cast %2 : vector<1x50x150xbf16> to vector<50x150xbf16>
    %cst = arith.constant dense<0.000000e+00> : vector<50x16xf32>
    %4 = tpu.matmul %3, %0, %cst {dimension_numbers = #tpu.dot_dimension_numbers<[1], [0], [0], [1], [0, 0, 1, 1], [], []>} : vector<50x150xbf16>, vector<150x16xbf16>, vector<50x16xf32> -> vector<50x16xf32>
    %5 = vector.broadcast %1 : vector<1x16xf32> to vector<50x16xf32>
    %6 = arith.addf %4, %5 : vector<50x16xf32>
    %c1 = arith.constant 1 : index
    %c0_6 = arith.constant 0 : index
    %c0_7 = arith.constant 0 : index
    %7 = vector.load %arg0[%c1, %c0_6, %c0_7] : memref<4x50x150xbf16, #tpu.memory_space<vmem>>, vector<1x50x150xbf16>
    %8 = vector.shape_cast %7 : vector<1x50x150xbf16> to vector<50x150xbf16>
    %cst_8 = arith.constant dense<0.000000e+00> : vector<50x16xf32>
    %9 = tpu.matmul %8, %0, %cst_8 {dimension_numbers = #tpu.dot_dimension_numbers<[1], [0], [0], [1], [0, 0, 1, 1], [], []>} : vector<50x150xbf16>, vector<150x16xbf16>, vector<50x16xf32> -> vector<50x16xf32>
    %10 = vector.broadcast %1 : vector<1x16xf32> to vector<50x16xf32>
    %11 = arith.addf %9, %10 : vector<50x16xf32>
    %c2 = arith.constant 2 : index
    %c0_9 = arith.constant 0 : index
    %c0_10 = arith.constant 0 : index
    %12 = vector.load %arg0[%c2, %c0_9, %c0_10] : memref<4x50x150xbf16, #tpu.memory_space<vmem>>, vector<1x50x150xbf16>
    %13 = vector.shape_cast %12 : vector<1x50x150xbf16> to vector<50x150xbf16>
    %cst_11 = arith.constant dense<0.000000e+00> : vector<50x16xf32>
    %14 = tpu.matmul %13, %0, %cst_11 {dimension_numbers = #tpu.dot_dimension_numbers<[1], [0], [0], [1], [0, 0, 1, 1], [], []>} : vector<50x150xbf16>, vector<150x16xbf16>, vector<50x16xf32> -> vector<50x16xf32>
    %15 = vector.broadcast %1 : vector<1x16xf32> to vector<50x16xf32>
    %16 = arith.addf %14, %15 : vector<50x16xf32>
    %c3 = arith.constant 3 : index
    %c0_12 = arith.constant 0 : index
    %c0_13 = arith.constant 0 : index
    %17 = vector.load %arg0[%c3, %c0_12, %c0_13] : memref<4x50x150xbf16, #tpu.memory_space<vmem>>, vector<1x50x150xbf16>
    %18 = vector.shape_cast %17 : vector<1x50x150xbf16> to vector<50x150xbf16>
    %cst_14 = arith.constant dense<0.000000e+00> : vector<50x16xf32>
    %19 = tpu.matmul %18, %0, %cst_14 {dimension_numbers = #tpu.dot_dimension_numbers<[1], [0], [0], [1], [0, 0, 1, 1], [], []>} : vector<50x150xbf16>, vector<150x16xbf16>, vector<50x16xf32> -> vector<50x16xf32>
    %20 = vector.broadcast %1 : vector<1x16xf32> to vector<50x16xf32>
    %21 = arith.addf %19, %20 : vector<50x16xf32>
    %cst_15 = arith.constant dense<0.000000e+00> : vector<16xf32>
    %22 = vector.multi_reduction <add>, %6, %cst_15 [0] : vector<50x16xf32> to vector<16xf32>
    %23 = vector.shape_cast %22 : vector<16xf32> to vector<1x16xf32>
    %cst_16 = arith.constant dense<0.000000e+00> : vector<16xf32>
    %24 = vector.multi_reduction <add>, %11, %cst_16 [0] : vector<50x16xf32> to vector<16xf32>
    %25 = vector.shape_cast %24 : vector<16xf32> to vector<1x16xf32>
    %cst_17 = arith.constant dense<0.000000e+00> : vector<16xf32>
    %26 = vector.multi_reduction <add>, %16, %cst_17 [0] : vector<50x16xf32> to vector<16xf32>
    %27 = vector.shape_cast %26 : vector<16xf32> to vector<1x16xf32>
    %cst_18 = arith.constant dense<0.000000e+00> : vector<16xf32>
    %28 = vector.multi_reduction <add>, %21, %cst_18 [0] : vector<50x16xf32> to vector<16xf32>
    %29 = vector.shape_cast %28 : vector<16xf32> to vector<1x16xf32>
    %cst_19 = arith.constant 0.000000e+00 : f32
    %30 = vector.broadcast %cst_19 : f32 to vector<1x16xf32>
    %31 = arith.addf %30, %23 : vector<1x16xf32>
    %32 = arith.addf %31, %25 : vector<1x16xf32>
    %33 = arith.addf %32, %27 : vector<1x16xf32>
    %34 = arith.addf %33, %29 : vector<1x16xf32>
    %cst_20 = arith.constant 2.000000e+02 : f32
    %35 = vector.broadcast %cst_20 : f32 to vector<1x16xf32>
    %36 = arith.divf %34, %35 : vector<1x16xf32>
    %37 = vector.broadcast %36 : vector<1x16xf32> to vector<50x16xf32>
    %38 = arith.subf %6, %37 : vector<50x16xf32>
    %39 = arith.mulf %38, %38 : vector<50x16xf32>
    %cst_21 = arith.constant dense<0.000000e+00> : vector<16xf32>
    %40 = vector.multi_reduction <add>, %39, %cst_21 [0] : vector<50x16xf32> to vector<16xf32>
    %41 = vector.shape_cast %40 : vector<16xf32> to vector<1x16xf32>
    %42 = vector.broadcast %36 : vector<1x16xf32> to vector<50x16xf32>
    %43 = arith.subf %11, %42 : vector<50x16xf32>
    %44 = arith.mulf %43, %43 : vector<50x16xf32>
    %cst_22 = arith.constant dense<0.000000e+00> : vector<16xf32>
    %45 = vector.multi_reduction <add>, %44, %cst_22 [0] : vector<50x16xf32> to vector<16xf32>
    %46 = vector.shape_cast %45 : vector<16xf32> to vector<1x16xf32>
    %47 = vector.broadcast %36 : vector<1x16xf32> to vector<50x16xf32>
    %48 = arith.subf %16, %47 : vector<50x16xf32>
    %49 = arith.mulf %48, %48 : vector<50x16xf32>
    %cst_23 = arith.constant dense<0.000000e+00> : vector<16xf32>
    %50 = vector.multi_reduction <add>, %49, %cst_23 [0] : vector<50x16xf32> to vector<16xf32>
    %51 = vector.shape_cast %50 : vector<16xf32> to vector<1x16xf32>
    %52 = vector.broadcast %36 : vector<1x16xf32> to vector<50x16xf32>
    %53 = arith.subf %21, %52 : vector<50x16xf32>
    %54 = arith.mulf %53, %53 : vector<50x16xf32>
    %cst_24 = arith.constant dense<0.000000e+00> : vector<16xf32>
    %55 = vector.multi_reduction <add>, %54, %cst_24 [0] : vector<50x16xf32> to vector<16xf32>
    %56 = vector.shape_cast %55 : vector<16xf32> to vector<1x16xf32>
    %cst_25 = arith.constant 0.000000e+00 : f32
    %57 = vector.broadcast %cst_25 : f32 to vector<1x16xf32>
    %58 = arith.addf %57, %41 : vector<1x16xf32>
    %59 = arith.addf %58, %46 : vector<1x16xf32>
    %60 = arith.addf %59, %51 : vector<1x16xf32>
    %61 = arith.addf %60, %56 : vector<1x16xf32>
    %cst_26 = arith.constant 2.000000e+02 : f32
    %62 = vector.broadcast %cst_26 : f32 to vector<1x16xf32>
    %63 = arith.divf %61, %62 : vector<1x16xf32>
    %c0_27 = arith.constant 0 : index
    %c0_28 = arith.constant 0 : index
    %64 = vector.load %arg3[%c0_27, %c0_28] : memref<1x16xf32, #tpu.memory_space<vmem>>, vector<1x16xf32>
    %cst_29 = arith.constant 9.99999974E-6 : f32
    %65 = vector.broadcast %cst_29 : f32 to vector<1x16xf32>
    %66 = arith.addf %63, %65 : vector<1x16xf32>
    %67 = math.rsqrt %66 : vector<1x16xf32>
    %68 = arith.mulf %64, %67 : vector<1x16xf32>
    %c0_30 = arith.constant 0 : index
    %c0_31 = arith.constant 0 : index
    %69 = vector.load %arg4[%c0_30, %c0_31] : memref<1x16xf32, #tpu.memory_space<vmem>>, vector<1x16xf32>
    %70 = vector.broadcast %36 : vector<1x16xf32> to vector<50x16xf32>
    %71 = arith.subf %6, %70 : vector<50x16xf32>
    %72 = vector.broadcast %68 : vector<1x16xf32> to vector<50x16xf32>
    %73 = arith.mulf %71, %72 : vector<50x16xf32>
    %74 = vector.broadcast %69 : vector<1x16xf32> to vector<50x16xf32>
    %75 = arith.addf %73, %74 : vector<50x16xf32>
    %cst_32 = arith.constant 0.000000e+00 : f32
    %76 = vector.broadcast %cst_32 : f32 to vector<50x16xf32>
    %77 = arith.maximumf %75, %76 : vector<50x16xf32>
    %78 = vector.broadcast %36 : vector<1x16xf32> to vector<50x16xf32>
    %79 = arith.subf %11, %78 : vector<50x16xf32>
    %80 = vector.broadcast %68 : vector<1x16xf32> to vector<50x16xf32>
    %81 = arith.mulf %79, %80 : vector<50x16xf32>
    %82 = vector.broadcast %69 : vector<1x16xf32> to vector<50x16xf32>
    %83 = arith.addf %81, %82 : vector<50x16xf32>
    %cst_33 = arith.constant 0.000000e+00 : f32
    %84 = vector.broadcast %cst_33 : f32 to vector<50x16xf32>
    %85 = arith.maximumf %83, %84 : vector<50x16xf32>
    %86 = vector.broadcast %36 : vector<1x16xf32> to vector<50x16xf32>
    %87 = arith.subf %16, %86 : vector<50x16xf32>
    %88 = vector.broadcast %68 : vector<1x16xf32> to vector<50x16xf32>
    %89 = arith.mulf %87, %88 : vector<50x16xf32>
    %90 = vector.broadcast %69 : vector<1x16xf32> to vector<50x16xf32>
    %91 = arith.addf %89, %90 : vector<50x16xf32>
    %cst_34 = arith.constant 0.000000e+00 : f32
    %92 = vector.broadcast %cst_34 : f32 to vector<50x16xf32>
    %93 = arith.maximumf %91, %92 : vector<50x16xf32>
    %94 = vector.broadcast %36 : vector<1x16xf32> to vector<50x16xf32>
    %95 = arith.subf %21, %94 : vector<50x16xf32>
    %96 = vector.broadcast %68 : vector<1x16xf32> to vector<50x16xf32>
    %97 = arith.mulf %95, %96 : vector<50x16xf32>
    %98 = vector.broadcast %69 : vector<1x16xf32> to vector<50x16xf32>
    %99 = arith.addf %97, %98 : vector<50x16xf32>
    %cst_35 = arith.constant 0.000000e+00 : f32
    %100 = vector.broadcast %cst_35 : f32 to vector<50x16xf32>
    %101 = arith.maximumf %99, %100 : vector<50x16xf32>
    %102 = arith.maximumf %77, %85 : vector<50x16xf32>
    %103 = arith.maximumf %93, %101 : vector<50x16xf32>
    %104 = arith.maximumf %102, %103 : vector<50x16xf32>
    %cst_36 = arith.constant 0.000000e+00 : f32
    %105 = vector.broadcast %cst_36 : f32 to vector<2x120xf32>
    %106 = vector.extract_strided_slice %104 {offsets = [0, 0], sizes = [2, 16], strides = [1, 1]} : vector<50x16xf32> to vector<2x16xf32>
    %c0_37 = arith.constant 0 : index
    %c0_38 = arith.constant 0 : index
    %c0_39 = arith.constant 0 : index
    %107 = vector.load %arg5[%c0_37, %c0_38, %c0_39] : memref<25x16x120xf32, #tpu.memory_space<vmem>>, vector<1x16x120xf32>
    %108 = vector.shape_cast %107 : vector<1x16x120xf32> to vector<16x120xf32>
    %cst_40 = arith.constant dense<0.000000e+00> : vector<2x120xf32>
    %109 = tpu.matmul %106, %108, %cst_40 {dimension_numbers = #tpu.dot_dimension_numbers<[1], [0], [0], [1], [0, 0, 1, 1], [], []>} : vector<2x16xf32>, vector<16x120xf32>, vector<2x120xf32> -> vector<2x120xf32>
    %110 = arith.addf %105, %109 : vector<2x120xf32>
    %111 = vector.extract_strided_slice %104 {offsets = [2, 0], sizes = [2, 16], strides = [1, 1]} : vector<50x16xf32> to vector<2x16xf32>
    %c1_41 = arith.constant 1 : index
    %c0_42 = arith.constant 0 : index
    %c0_43 = arith.constant 0 : index
    %112 = vector.load %arg5[%c1_41, %c0_42, %c0_43] : memref<25x16x120xf32, #tpu.memory_space<vmem>>, vector<1x16x120xf32>
    %113 = vector.shape_cast %112 : vector<1x16x120xf32> to vector<16x120xf32>
    %cst_44 = arith.constant dense<0.000000e+00> : vector<2x120xf32>
    %114 = tpu.matmul %111, %113, %cst_44 {dimension_numbers = #tpu.dot_dimension_numbers<[1], [0], [0], [1], [0, 0, 1, 1], [], []>} : vector<2x16xf32>, vector<16x120xf32>, vector<2x120xf32> -> vector<2x120xf32>
    %115 = arith.addf %110, %114 : vector<2x120xf32>
    %116 = vector.extract_strided_slice %104 {offsets = [4, 0], sizes = [2, 16], strides = [1, 1]} : vector<50x16xf32> to vector<2x16xf32>
    %c2_45 = arith.constant 2 : index
    %c0_46 = arith.constant 0 : index
    %c0_47 = arith.constant 0 : index
    %117 = vector.load %arg5[%c2_45, %c0_46, %c0_47] : memref<25x16x120xf32, #tpu.memory_space<vmem>>, vector<1x16x120xf32>
    %118 = vector.shape_cast %117 : vector<1x16x120xf32> to vector<16x120xf32>
    %cst_48 = arith.constant dense<0.000000e+00> : vector<2x120xf32>
    %119 = tpu.matmul %116, %118, %cst_48 {dimension_numbers = #tpu.dot_dimension_numbers<[1], [0], [0], [1], [0, 0, 1, 1], [], []>} : vector<2x16xf32>, vector<16x120xf32>, vector<2x120xf32> -> vector<2x120xf32>
    %120 = arith.addf %115, %119 : vector<2x120xf32>
    %121 = vector.extract_strided_slice %104 {offsets = [6, 0], sizes = [2, 16], strides = [1, 1]} : vector<50x16xf32> to vector<2x16xf32>
    %c3_49 = arith.constant 3 : index
    %c0_50 = arith.constant 0 : index
    %c0_51 = arith.constant 0 : index
    %122 = vector.load %arg5[%c3_49, %c0_50, %c0_51] : memref<25x16x120xf32, #tpu.memory_space<vmem>>, vector<1x16x120xf32>
    %123 = vector.shape_cast %122 : vector<1x16x120xf32> to vector<16x120xf32>
    %cst_52 = arith.constant dense<0.000000e+00> : vector<2x120xf32>
    %124 = tpu.matmul %121, %123, %cst_52 {dimension_numbers = #tpu.dot_dimension_numbers<[1], [0], [0], [1], [0, 0, 1, 1], [], []>} : vector<2x16xf32>, vector<16x120xf32>, vector<2x120xf32> -> vector<2x120xf32>
    %125 = arith.addf %120, %124 : vector<2x120xf32>
    %126 = vector.extract_strided_slice %104 {offsets = [8, 0], sizes = [2, 16], strides = [1, 1]} : vector<50x16xf32> to vector<2x16xf32>
    %c4 = arith.constant 4 : index
    %c0_53 = arith.constant 0 : index
    %c0_54 = arith.constant 0 : index
    %127 = vector.load %arg5[%c4, %c0_53, %c0_54] : memref<25x16x120xf32, #tpu.memory_space<vmem>>, vector<1x16x120xf32>
    %128 = vector.shape_cast %127 : vector<1x16x120xf32> to vector<16x120xf32>
    %cst_55 = arith.constant dense<0.000000e+00> : vector<2x120xf32>
    %129 = tpu.matmul %126, %128, %cst_55 {dimension_numbers = #tpu.dot_dimension_numbers<[1], [0], [0], [1], [0, 0, 1, 1], [], []>} : vector<2x16xf32>, vector<16x120xf32>, vector<2x120xf32> -> vector<2x120xf32>
    %130 = arith.addf %125, %129 : vector<2x120xf32>
    %131 = vector.extract_strided_slice %104 {offsets = [10, 0], sizes = [2, 16], strides = [1, 1]} : vector<50x16xf32> to vector<2x16xf32>
    %c5 = arith.constant 5 : index
    %c0_56 = arith.constant 0 : index
    %c0_57 = arith.constant 0 : index
    %132 = vector.load %arg5[%c5, %c0_56, %c0_57] : memref<25x16x120xf32, #tpu.memory_space<vmem>>, vector<1x16x120xf32>
    %133 = vector.shape_cast %132 : vector<1x16x120xf32> to vector<16x120xf32>
    %cst_58 = arith.constant dense<0.000000e+00> : vector<2x120xf32>
    %134 = tpu.matmul %131, %133, %cst_58 {dimension_numbers = #tpu.dot_dimension_numbers<[1], [0], [0], [1], [0, 0, 1, 1], [], []>} : vector<2x16xf32>, vector<16x120xf32>, vector<2x120xf32> -> vector<2x120xf32>
    %135 = arith.addf %130, %134 : vector<2x120xf32>
    %136 = vector.extract_strided_slice %104 {offsets = [12, 0], sizes = [2, 16], strides = [1, 1]} : vector<50x16xf32> to vector<2x16xf32>
    %c6 = arith.constant 6 : index
    %c0_59 = arith.constant 0 : index
    %c0_60 = arith.constant 0 : index
    %137 = vector.load %arg5[%c6, %c0_59, %c0_60] : memref<25x16x120xf32, #tpu.memory_space<vmem>>, vector<1x16x120xf32>
    %138 = vector.shape_cast %137 : vector<1x16x120xf32> to vector<16x120xf32>
    %cst_61 = arith.constant dense<0.000000e+00> : vector<2x120xf32>
    %139 = tpu.matmul %136, %138, %cst_61 {dimension_numbers = #tpu.dot_dimension_numbers<[1], [0], [0], [1], [0, 0, 1, 1], [], []>} : vector<2x16xf32>, vector<16x120xf32>, vector<2x120xf32> -> vector<2x120xf32>
    %140 = arith.addf %135, %139 : vector<2x120xf32>
    %141 = vector.extract_strided_slice %104 {offsets = [14, 0], sizes = [2, 16], strides = [1, 1]} : vector<50x16xf32> to vector<2x16xf32>
    %c7 = arith.constant 7 : index
    %c0_62 = arith.constant 0 : index
    %c0_63 = arith.constant 0 : index
    %142 = vector.load %arg5[%c7, %c0_62, %c0_63] : memref<25x16x120xf32, #tpu.memory_space<vmem>>, vector<1x16x120xf32>
    %143 = vector.shape_cast %142 : vector<1x16x120xf32> to vector<16x120xf32>
    %cst_64 = arith.constant dense<0.000000e+00> : vector<2x120xf32>
    %144 = tpu.matmul %141, %143, %cst_64 {dimension_numbers = #tpu.dot_dimension_numbers<[1], [0], [0], [1], [0, 0, 1, 1], [], []>} : vector<2x16xf32>, vector<16x120xf32>, vector<2x120xf32> -> vector<2x120xf32>
    %145 = arith.addf %140, %144 : vector<2x120xf32>
    %146 = vector.extract_strided_slice %104 {offsets = [16, 0], sizes = [2, 16], strides = [1, 1]} : vector<50x16xf32> to vector<2x16xf32>
    %c8 = arith.constant 8 : index
    %c0_65 = arith.constant 0 : index
    %c0_66 = arith.constant 0 : index
    %147 = vector.load %arg5[%c8, %c0_65, %c0_66] : memref<25x16x120xf32, #tpu.memory_space<vmem>>, vector<1x16x120xf32>
    %148 = vector.shape_cast %147 : vector<1x16x120xf32> to vector<16x120xf32>
    %cst_67 = arith.constant dense<0.000000e+00> : vector<2x120xf32>
    %149 = tpu.matmul %146, %148, %cst_67 {dimension_numbers = #tpu.dot_dimension_numbers<[1], [0], [0], [1], [0, 0, 1, 1], [], []>} : vector<2x16xf32>, vector<16x120xf32>, vector<2x120xf32> -> vector<2x120xf32>
    %150 = arith.addf %145, %149 : vector<2x120xf32>
    %151 = vector.extract_strided_slice %104 {offsets = [18, 0], sizes = [2, 16], strides = [1, 1]} : vector<50x16xf32> to vector<2x16xf32>
    %c9 = arith.constant 9 : index
    %c0_68 = arith.constant 0 : index
    %c0_69 = arith.constant 0 : index
    %152 = vector.load %arg5[%c9, %c0_68, %c0_69] : memref<25x16x120xf32, #tpu.memory_space<vmem>>, vector<1x16x120xf32>
    %153 = vector.shape_cast %152 : vector<1x16x120xf32> to vector<16x120xf32>
    %cst_70 = arith.constant dense<0.000000e+00> : vector<2x120xf32>
    %154 = tpu.matmul %151, %153, %cst_70 {dimension_numbers = #tpu.dot_dimension_numbers<[1], [0], [0], [1], [0, 0, 1, 1], [], []>} : vector<2x16xf32>, vector<16x120xf32>, vector<2x120xf32> -> vector<2x120xf32>
    %155 = arith.addf %150, %154 : vector<2x120xf32>
    %156 = vector.extract_strided_slice %104 {offsets = [20, 0], sizes = [2, 16], strides = [1, 1]} : vector<50x16xf32> to vector<2x16xf32>
    %c10 = arith.constant 10 : index
    %c0_71 = arith.constant 0 : index
    %c0_72 = arith.constant 0 : index
    %157 = vector.load %arg5[%c10, %c0_71, %c0_72] : memref<25x16x120xf32, #tpu.memory_space<vmem>>, vector<1x16x120xf32>
    %158 = vector.shape_cast %157 : vector<1x16x120xf32> to vector<16x120xf32>
    %cst_73 = arith.constant dense<0.000000e+00> : vector<2x120xf32>
    %159 = tpu.matmul %156, %158, %cst_73 {dimension_numbers = #tpu.dot_dimension_numbers<[1], [0], [0], [1], [0, 0, 1, 1], [], []>} : vector<2x16xf32>, vector<16x120xf32>, vector<2x120xf32> -> vector<2x120xf32>
    %160 = arith.addf %155, %159 : vector<2x120xf32>
    %161 = vector.extract_strided_slice %104 {offsets = [22, 0], sizes = [2, 16], strides = [1, 1]} : vector<50x16xf32> to vector<2x16xf32>
    %c11 = arith.constant 11 : index
    %c0_74 = arith.constant 0 : index
    %c0_75 = arith.constant 0 : index
    %162 = vector.load %arg5[%c11, %c0_74, %c0_75] : memref<25x16x120xf32, #tpu.memory_space<vmem>>, vector<1x16x120xf32>
    %163 = vector.shape_cast %162 : vector<1x16x120xf32> to vector<16x120xf32>
    %cst_76 = arith.constant dense<0.000000e+00> : vector<2x120xf32>
    %164 = tpu.matmul %161, %163, %cst_76 {dimension_numbers = #tpu.dot_dimension_numbers<[1], [0], [0], [1], [0, 0, 1, 1], [], []>} : vector<2x16xf32>, vector<16x120xf32>, vector<2x120xf32> -> vector<2x120xf32>
    %165 = arith.addf %160, %164 : vector<2x120xf32>
    %166 = vector.extract_strided_slice %104 {offsets = [24, 0], sizes = [2, 16], strides = [1, 1]} : vector<50x16xf32> to vector<2x16xf32>
    %c12 = arith.constant 12 : index
    %c0_77 = arith.constant 0 : index
    %c0_78 = arith.constant 0 : index
    %167 = vector.load %arg5[%c12, %c0_77, %c0_78] : memref<25x16x120xf32, #tpu.memory_space<vmem>>, vector<1x16x120xf32>
    %168 = vector.shape_cast %167 : vector<1x16x120xf32> to vector<16x120xf32>
    %cst_79 = arith.constant dense<0.000000e+00> : vector<2x120xf32>
    %169 = tpu.matmul %166, %168, %cst_79 {dimension_numbers = #tpu.dot_dimension_numbers<[1], [0], [0], [1], [0, 0, 1, 1], [], []>} : vector<2x16xf32>, vector<16x120xf32>, vector<2x120xf32> -> vector<2x120xf32>
    %170 = arith.addf %165, %169 : vector<2x120xf32>
    %171 = vector.extract_strided_slice %104 {offsets = [26, 0], sizes = [2, 16], strides = [1, 1]} : vector<50x16xf32> to vector<2x16xf32>
    %c13 = arith.constant 13 : index
    %c0_80 = arith.constant 0 : index
    %c0_81 = arith.constant 0 : index
    %172 = vector.load %arg5[%c13, %c0_80, %c0_81] : memref<25x16x120xf32, #tpu.memory_space<vmem>>, vector<1x16x120xf32>
    %173 = vector.shape_cast %172 : vector<1x16x120xf32> to vector<16x120xf32>
    %cst_82 = arith.constant dense<0.000000e+00> : vector<2x120xf32>
    %174 = tpu.matmul %171, %173, %cst_82 {dimension_numbers = #tpu.dot_dimension_numbers<[1], [0], [0], [1], [0, 0, 1, 1], [], []>} : vector<2x16xf32>, vector<16x120xf32>, vector<2x120xf32> -> vector<2x120xf32>
    %175 = arith.addf %170, %174 : vector<2x120xf32>
    %176 = vector.extract_strided_slice %104 {offsets = [28, 0], sizes = [2, 16], strides = [1, 1]} : vector<50x16xf32> to vector<2x16xf32>
    %c14 = arith.constant 14 : index
    %c0_83 = arith.constant 0 : index
    %c0_84 = arith.constant 0 : index
    %177 = vector.load %arg5[%c14, %c0_83, %c0_84] : memref<25x16x120xf32, #tpu.memory_space<vmem>>, vector<1x16x120xf32>
    %178 = vector.shape_cast %177 : vector<1x16x120xf32> to vector<16x120xf32>
    %cst_85 = arith.constant dense<0.000000e+00> : vector<2x120xf32>
    %179 = tpu.matmul %176, %178, %cst_85 {dimension_numbers = #tpu.dot_dimension_numbers<[1], [0], [0], [1], [0, 0, 1, 1], [], []>} : vector<2x16xf32>, vector<16x120xf32>, vector<2x120xf32> -> vector<2x120xf32>
    %180 = arith.addf %175, %179 : vector<2x120xf32>
    %181 = vector.extract_strided_slice %104 {offsets = [30, 0], sizes = [2, 16], strides = [1, 1]} : vector<50x16xf32> to vector<2x16xf32>
    %c15 = arith.constant 15 : index
    %c0_86 = arith.constant 0 : index
    %c0_87 = arith.constant 0 : index
    %182 = vector.load %arg5[%c15, %c0_86, %c0_87] : memref<25x16x120xf32, #tpu.memory_space<vmem>>, vector<1x16x120xf32>
    %183 = vector.shape_cast %182 : vector<1x16x120xf32> to vector<16x120xf32>
    %cst_88 = arith.constant dense<0.000000e+00> : vector<2x120xf32>
    %184 = tpu.matmul %181, %183, %cst_88 {dimension_numbers = #tpu.dot_dimension_numbers<[1], [0], [0], [1], [0, 0, 1, 1], [], []>} : vector<2x16xf32>, vector<16x120xf32>, vector<2x120xf32> -> vector<2x120xf32>
    %185 = arith.addf %180, %184 : vector<2x120xf32>
    %186 = vector.extract_strided_slice %104 {offsets = [32, 0], sizes = [2, 16], strides = [1, 1]} : vector<50x16xf32> to vector<2x16xf32>
    %c16 = arith.constant 16 : index
    %c0_89 = arith.constant 0 : index
    %c0_90 = arith.constant 0 : index
    %187 = vector.load %arg5[%c16, %c0_89, %c0_90] : memref<25x16x120xf32, #tpu.memory_space<vmem>>, vector<1x16x120xf32>
    %188 = vector.shape_cast %187 : vector<1x16x120xf32> to vector<16x120xf32>
    %cst_91 = arith.constant dense<0.000000e+00> : vector<2x120xf32>
    %189 = tpu.matmul %186, %188, %cst_91 {dimension_numbers = #tpu.dot_dimension_numbers<[1], [0], [0], [1], [0, 0, 1, 1], [], []>} : vector<2x16xf32>, vector<16x120xf32>, vector<2x120xf32> -> vector<2x120xf32>
    %190 = arith.addf %185, %189 : vector<2x120xf32>
    %191 = vector.extract_strided_slice %104 {offsets = [34, 0], sizes = [2, 16], strides = [1, 1]} : vector<50x16xf32> to vector<2x16xf32>
    %c17 = arith.constant 17 : index
    %c0_92 = arith.constant 0 : index
    %c0_93 = arith.constant 0 : index
    %192 = vector.load %arg5[%c17, %c0_92, %c0_93] : memref<25x16x120xf32, #tpu.memory_space<vmem>>, vector<1x16x120xf32>
    %193 = vector.shape_cast %192 : vector<1x16x120xf32> to vector<16x120xf32>
    %cst_94 = arith.constant dense<0.000000e+00> : vector<2x120xf32>
    %194 = tpu.matmul %191, %193, %cst_94 {dimension_numbers = #tpu.dot_dimension_numbers<[1], [0], [0], [1], [0, 0, 1, 1], [], []>} : vector<2x16xf32>, vector<16x120xf32>, vector<2x120xf32> -> vector<2x120xf32>
    %195 = arith.addf %190, %194 : vector<2x120xf32>
    %196 = vector.extract_strided_slice %104 {offsets = [36, 0], sizes = [2, 16], strides = [1, 1]} : vector<50x16xf32> to vector<2x16xf32>
    %c18 = arith.constant 18 : index
    %c0_95 = arith.constant 0 : index
    %c0_96 = arith.constant 0 : index
    %197 = vector.load %arg5[%c18, %c0_95, %c0_96] : memref<25x16x120xf32, #tpu.memory_space<vmem>>, vector<1x16x120xf32>
    %198 = vector.shape_cast %197 : vector<1x16x120xf32> to vector<16x120xf32>
    %cst_97 = arith.constant dense<0.000000e+00> : vector<2x120xf32>
    %199 = tpu.matmul %196, %198, %cst_97 {dimension_numbers = #tpu.dot_dimension_numbers<[1], [0], [0], [1], [0, 0, 1, 1], [], []>} : vector<2x16xf32>, vector<16x120xf32>, vector<2x120xf32> -> vector<2x120xf32>
    %200 = arith.addf %195, %199 : vector<2x120xf32>
    %201 = vector.extract_strided_slice %104 {offsets = [38, 0], sizes = [2, 16], strides = [1, 1]} : vector<50x16xf32> to vector<2x16xf32>
    %c19 = arith.constant 19 : index
    %c0_98 = arith.constant 0 : index
    %c0_99 = arith.constant 0 : index
    %202 = vector.load %arg5[%c19, %c0_98, %c0_99] : memref<25x16x120xf32, #tpu.memory_space<vmem>>, vector<1x16x120xf32>
    %203 = vector.shape_cast %202 : vector<1x16x120xf32> to vector<16x120xf32>
    %cst_100 = arith.constant dense<0.000000e+00> : vector<2x120xf32>
    %204 = tpu.matmul %201, %203, %cst_100 {dimension_numbers = #tpu.dot_dimension_numbers<[1], [0], [0], [1], [0, 0, 1, 1], [], []>} : vector<2x16xf32>, vector<16x120xf32>, vector<2x120xf32> -> vector<2x120xf32>
    %205 = arith.addf %200, %204 : vector<2x120xf32>
    %206 = vector.extract_strided_slice %104 {offsets = [40, 0], sizes = [2, 16], strides = [1, 1]} : vector<50x16xf32> to vector<2x16xf32>
    %c20 = arith.constant 20 : index
    %c0_101 = arith.constant 0 : index
    %c0_102 = arith.constant 0 : index
    %207 = vector.load %arg5[%c20, %c0_101, %c0_102] : memref<25x16x120xf32, #tpu.memory_space<vmem>>, vector<1x16x120xf32>
    %208 = vector.shape_cast %207 : vector<1x16x120xf32> to vector<16x120xf32>
    %cst_103 = arith.constant dense<0.000000e+00> : vector<2x120xf32>
    %209 = tpu.matmul %206, %208, %cst_103 {dimension_numbers = #tpu.dot_dimension_numbers<[1], [0], [0], [1], [0, 0, 1, 1], [], []>} : vector<2x16xf32>, vector<16x120xf32>, vector<2x120xf32> -> vector<2x120xf32>
    %210 = arith.addf %205, %209 : vector<2x120xf32>
    %211 = vector.extract_strided_slice %104 {offsets = [42, 0], sizes = [2, 16], strides = [1, 1]} : vector<50x16xf32> to vector<2x16xf32>
    %c21 = arith.constant 21 : index
    %c0_104 = arith.constant 0 : index
    %c0_105 = arith.constant 0 : index
    %212 = vector.load %arg5[%c21, %c0_104, %c0_105] : memref<25x16x120xf32, #tpu.memory_space<vmem>>, vector<1x16x120xf32>
    %213 = vector.shape_cast %212 : vector<1x16x120xf32> to vector<16x120xf32>
    %cst_106 = arith.constant dense<0.000000e+00> : vector<2x120xf32>
    %214 = tpu.matmul %211, %213, %cst_106 {dimension_numbers = #tpu.dot_dimension_numbers<[1], [0], [0], [1], [0, 0, 1, 1], [], []>} : vector<2x16xf32>, vector<16x120xf32>, vector<2x120xf32> -> vector<2x120xf32>
    %215 = arith.addf %210, %214 : vector<2x120xf32>
    %216 = vector.extract_strided_slice %104 {offsets = [44, 0], sizes = [2, 16], strides = [1, 1]} : vector<50x16xf32> to vector<2x16xf32>
    %c22 = arith.constant 22 : index
    %c0_107 = arith.constant 0 : index
    %c0_108 = arith.constant 0 : index
    %217 = vector.load %arg5[%c22, %c0_107, %c0_108] : memref<25x16x120xf32, #tpu.memory_space<vmem>>, vector<1x16x120xf32>
    %218 = vector.shape_cast %217 : vector<1x16x120xf32> to vector<16x120xf32>
    %cst_109 = arith.constant dense<0.000000e+00> : vector<2x120xf32>
    %219 = tpu.matmul %216, %218, %cst_109 {dimension_numbers = #tpu.dot_dimension_numbers<[1], [0], [0], [1], [0, 0, 1, 1], [], []>} : vector<2x16xf32>, vector<16x120xf32>, vector<2x120xf32> -> vector<2x120xf32>
    %220 = arith.addf %215, %219 : vector<2x120xf32>
    %221 = vector.extract_strided_slice %104 {offsets = [46, 0], sizes = [2, 16], strides = [1, 1]} : vector<50x16xf32> to vector<2x16xf32>
    %c23 = arith.constant 23 : index
    %c0_110 = arith.constant 0 : index
    %c0_111 = arith.constant 0 : index
    %222 = vector.load %arg5[%c23, %c0_110, %c0_111] : memref<25x16x120xf32, #tpu.memory_space<vmem>>, vector<1x16x120xf32>
    %223 = vector.shape_cast %222 : vector<1x16x120xf32> to vector<16x120xf32>
    %cst_112 = arith.constant dense<0.000000e+00> : vector<2x120xf32>
    %224 = tpu.matmul %221, %223, %cst_112 {dimension_numbers = #tpu.dot_dimension_numbers<[1], [0], [0], [1], [0, 0, 1, 1], [], []>} : vector<2x16xf32>, vector<16x120xf32>, vector<2x120xf32> -> vector<2x120xf32>
    %225 = arith.addf %220, %224 : vector<2x120xf32>
    %226 = vector.extract_strided_slice %104 {offsets = [48, 0], sizes = [2, 16], strides = [1, 1]} : vector<50x16xf32> to vector<2x16xf32>
    %c24 = arith.constant 24 : index
    %c0_113 = arith.constant 0 : index
    %c0_114 = arith.constant 0 : index
    %227 = vector.load %arg5[%c24, %c0_113, %c0_114] : memref<25x16x120xf32, #tpu.memory_space<vmem>>, vector<1x16x120xf32>
    %228 = vector.shape_cast %227 : vector<1x16x120xf32> to vector<16x120xf32>
    %cst_115 = arith.constant dense<0.000000e+00> : vector<2x120xf32>
    %229 = tpu.matmul %226, %228, %cst_115 {dimension_numbers = #tpu.dot_dimension_numbers<[1], [0], [0], [1], [0, 0, 1, 1], [], []>} : vector<2x16xf32>, vector<16x120xf32>, vector<2x120xf32> -> vector<2x120xf32>
    %230 = arith.addf %225, %229 : vector<2x120xf32>
    %c0_116 = arith.constant 0 : index
    %c0_117 = arith.constant 0 : index
    %231 = vector.load %arg6[%c0_116, %c0_117] : memref<1x120xf32, #tpu.memory_space<vmem>>, vector<1x120xf32>
    %232 = vector.broadcast %231 : vector<1x120xf32> to vector<2x120xf32>
    %233 = arith.addf %230, %232 : vector<2x120xf32>
    %cst_118 = arith.constant 0.000000e+00 : f32
    %234 = vector.broadcast %cst_118 : f32 to vector<2x120xf32>
    %235 = arith.maximumf %233, %234 : vector<2x120xf32>
    %c0_119 = arith.constant 0 : index
    %c0_120 = arith.constant 0 : index
    %236 = vector.load %arg7[%c0_119, %c0_120] : memref<120x84xf32, #tpu.memory_space<vmem>>, vector<120x84xf32>
    %cst_121 = arith.constant dense<0.000000e+00> : vector<2x84xf32>
    %237 = tpu.matmul %235, %236, %cst_121 {dimension_numbers = #tpu.dot_dimension_numbers<[1], [0], [0], [1], [0, 0, 1, 1], [], []>} : vector<2x120xf32>, vector<120x84xf32>, vector<2x84xf32> -> vector<2x84xf32>
    %c0_122 = arith.constant 0 : index
    %c0_123 = arith.constant 0 : index
    %238 = vector.load %arg8[%c0_122, %c0_123] : memref<1x84xf32, #tpu.memory_space<vmem>>, vector<1x84xf32>
    %239 = vector.broadcast %238 : vector<1x84xf32> to vector<2x84xf32>
    %240 = arith.addf %237, %239 : vector<2x84xf32>
    %cst_124 = arith.constant 0.000000e+00 : f32
    %241 = vector.broadcast %cst_124 : f32 to vector<2x84xf32>
    %242 = arith.maximumf %240, %241 : vector<2x84xf32>
    %c0_125 = arith.constant 0 : index
    %c0_126 = arith.constant 0 : index
    %243 = vector.load %arg9[%c0_125, %c0_126] : memref<84x10xf32, #tpu.memory_space<vmem>>, vector<84x10xf32>
    %cst_127 = arith.constant dense<0.000000e+00> : vector<2x10xf32>
    %244 = tpu.matmul %242, %243, %cst_127 {dimension_numbers = #tpu.dot_dimension_numbers<[1], [0], [0], [1], [0, 0, 1, 1], [], []>} : vector<2x84xf32>, vector<84x10xf32>, vector<2x10xf32> -> vector<2x10xf32>
    %c0_128 = arith.constant 0 : index
    %c0_129 = arith.constant 0 : index
    %245 = vector.load %arg10[%c0_128, %c0_129] : memref<1x10xf32, #tpu.memory_space<vmem>>, vector<1x10xf32>
    %246 = vector.broadcast %245 : vector<1x10xf32> to vector<2x10xf32>
    %247 = arith.addf %244, %246 : vector<2x10xf32>
    %c0_130 = arith.constant 0 : index
    %c0_131 = arith.constant 0 : index
    %248 = vector.load %arg11[%c0_130, %c0_131] : memref<2x10xf32, #tpu.memory_space<vmem>>, vector<2x10xf32>
    tpu.vector_store %arg11[%c0_130, %c0_131], %247 {strides = array<i32>} : memref<2x10xf32, #tpu.memory_space<vmem>>, vector<2x10xf32>,
    return
  }
}

</mosaic_0001>

<llo_original>
// kernel: mnist_toy_forward.2
$region0: #{mnist_toy_forward.2}
  #allocation0 [shape = 'u32[]', space=smem, size = 0x4, offset = 0x4, fixed_abs, tag = 'smem constant byte address 0x4 - core index']
  #allocation1 [shape = 'u32[144,128]{1,0:T(1,128)}', space=vmem, size = 0x12000, scoped, tag = 'internal scratch']
  %s0 = inlined_call_operand.vmem [shape: bf16[4,392,25], index: 0, kind: input, shape index: {}]
  %s1 = inlined_call_operand.vmem [shape: bf16[25,6], index: 1, kind: input, shape index: {}]
  %s2 = inlined_call_operand.vmem [shape: f32[1,6], index: 2, kind: input, shape index: {}]
  %s3 = inlined_call_operand.vmem [shape: f32[392,6], index: 3, kind: output, shape index: {}]
  %s4 = sld [smem:[#allocation0]]
  $region22: #{mnist_toy_forward.2} parent=0
    _
  %s6 = ssub.s32 1, %s4
  %s7 = scalar_select 0, %s6, %s4
  // Predicated region
  $region2: #{mnist_toy_forward.2} parent=0 // pred_check
    _
  $region3: #{mnist_toy_forward.2} parent=0 // pred_check_branch
    %9 = sbr.rel (0) target = $region5
  $region4: #{mnist_toy_forward.2} parent=0 // pred_region
    _
  $region5: #{mnist_toy_forward.2} parent=0 // pred_fallthru
    _
  // Predicated region
  $region6: #{mnist_toy_forward.2} parent=0 // pred_check
    _
  $region7: #{mnist_toy_forward.2} parent=0 // pred_check_branch
    %11 = sbr.rel (0) target = $region9
  $region8: #{mnist_toy_forward.2} parent=0 // pred_region
    _
  $region9: #{mnist_toy_forward.2} parent=0 // pred_fallthru
    _
  // Predicated region
  $region10: #{mnist_toy_forward.2} parent=0 // pred_check
    _
  $region11: #{mnist_toy_forward.2} parent=0 // pred_check_branch
    %13 = sbr.rel (0) target = $region13
  $region12: #{mnist_toy_forward.2} parent=0 // pred_region
    _
  $region13: #{mnist_toy_forward.2} parent=0 // pred_fallthru
    _
  %v15 = vld [vmem:[%s1] sm:$0xf]
  %v16 = vld [vmem:[%s1 + $0x4] sm:$0xf]
  %v17 = vld [vmem:[%s1 + $0x8] sm:$0xf]
  %v18 = vld [vmem:[%s1 + $0xc] sm:$0x1]
  %v19 = vld [vmem:[%s2] sm:$0x1]
  %v20 = vld [vmem:[%s0] sm:$0xf]
  %v21 = vld [vmem:[%s0 + $0x4] sm:$0xf]
  %v22 = vld [vmem:[%s0 + $0x8] sm:$0xf]
  %v23 = vld [vmem:[%s0 + $0xc] sm:$0xf]
  %v24 = vld [vmem:[%s0 + $0x10] sm:$0xf]
  %v25 = vld [vmem:[%s0 + $0x14] sm:$0xf]
  %v26 = vld [vmem:[%s0 + $0x18] sm:$0xf]
  %v27 = vld [vmem:[%s0 + $0x1c] sm:$0xf]
  %v28 = vld [vmem:[%s0 + $0x20] sm:$0xf]
  %v29 = vld [vmem:[%s0 + $0x24] sm:$0xf]
  %v30 = vld [vmem:[%s0 + $0x28] sm:$0xf]
  %v31 = vld [vmem:[%s0 + $0x2c] sm:$0xf]
  %v32 = vld [vmem:[%s0 + $0x30] sm:$0xf]
  %v33 = vld [vmem:[%s0 + $0x34] sm:$0xf]
  %v34 = vld [vmem:[%s0 + $0x38] sm:$0xf]
  %v35 = vld [vmem:[%s0 + $0x3c] sm:$0xf]
  %v36 = vld [vmem:[%s0 + $0x40] sm:$0xf]
  %v37 = vld [vmem:[%s0 + $0x44] sm:$0xf]
  %v38 = vld [vmem:[%s0 + $0x48] sm:$0xf]
  %v39 = vld [vmem:[%s0 + $0x4c] sm:$0xf]
  %v40 = vld [vmem:[%s0 + $0x50] sm:$0xf]
  %v41 = vld [vmem:[%s0 + $0x54] sm:$0xf]
  %v42 = vld [vmem:[%s0 + $0x58] sm:$0xf]
  %v43 = vld [vmem:[%s0 + $0x5c] sm:$0xf]
  %v44 = vld [vmem:[%s0 + $0x60] sm:$0xf]
  %v45 = vld [vmem:[%s0 + $0x64] sm:$0xf]
  %v46 = vld [vmem:[%s0 + $0x68] sm:$0xf]
  %v47 = vld [vmem:[%s0 + $0x6c] sm:$0xf]
  %v48 = vld [vmem:[%s0 + $0x70] sm:$0xf]
  %v49 = vld [vmem:[%s0 + $0x74] sm:$0xf]
  %v50 = vld [vmem:[%s0 + $0x78] sm:$0xf]
  %v51 = vld [vmem:[%s0 + $0x7c] sm:$0xf]
  %v52 = vld [vmem:[%s0 + $0x80] sm:$0xf]
  %v53 = vld [vmem:[%s0 + $0x84] sm:$0xf]
  %v54 = vld [vmem:[%s0 + $0x88] sm:$0xf]
  %v55 = vld [vmem:[%s0 + $0x8c] sm:$0xf]
  %v56 = vld [vmem:[%s0 + $0x90] sm:$0xf]
  %v57 = vld [vmem:[%s0 + $0x94] sm:$0xf]
  %v58 = vld [vmem:[%s0 + $0x98] sm:$0xf]
  %v59 = vld [vmem:[%s0 + $0x9c] sm:$0xf]
  %v60 = vld [vmem:[%s0 + $0xa0] sm:$0xf]
  %v61 = vld [vmem:[%s0 + $0xa4] sm:$0xf]
  %v62 = vld [vmem:[%s0 + $0xa8] sm:$0xf]
  %v63 = vld [vmem:[%s0 + $0xac] sm:$0xf]
  %v64 = vld [vmem:[%s0 + $0xb0] sm:$0xf]
  %v65 = vld [vmem:[%s0 + $0xb4] sm:$0xf]
  %v66 = vld [vmem:[%s0 + $0xb8] sm:$0xf]
  %v67 = vld [vmem:[%s0 + $0xbc] sm:$0xf]
  %v68 = vld [vmem:[%s0 + $0xc0] sm:$0xf]
  %v70 = vlaneseq
  %v71 = vshrl.u32 %v70, 7
  %v72 = vsub.s32 0, %v71
  %v73 = vrot.slane %v19, %v72
  %v124 = vunpack.c.l.b16 %v20
  %v125 = vunpack.c.l.b16 %v21
  %v126 = vunpack.c.l.b16 %v22
  %v127 = vunpack.c.l.b16 %v23
  %v128 = vunpack.c.l.b16 %v24
  %v129 = vunpack.c.l.b16 %v25
  %v130 = vunpack.c.l.b16 %v26
  %v131 = vunpack.c.l.b16 %v27
  %v132 = vunpack.c.l.b16 %v28
  %v133 = vunpack.c.l.b16 %v29
  %v134 = vunpack.c.l.b16 %v30
  %v135 = vunpack.c.l.b16 %v31
  %v136 = vunpack.c.l.b16 %v32
  %v137 = vunpack.c.l.b16 %v33
  %v138 = vunpack.c.l.b16 %v34
  %v139 = vunpack.c.l.b16 %v35
  %v140 = vunpack.c.l.b16 %v36
  %v141 = vunpack.c.l.b16 %v37
  %v142 = vunpack.c.l.b16 %v38
  %v143 = vunpack.c.l.b16 %v39
  %v144 = vunpack.c.l.b16 %v40
  %v145 = vunpack.c.l.b16 %v41
  %v146 = vunpack.c.l.b16 %v42
  %v147 = vunpack.c.l.b16 %v43
  %v148 = vunpack.c.l.b16 %v44
  %v149 = vunpack.c.l.b16 %v45
  %v150 = vunpack.c.l.b16 %v46
  %v151 = vunpack.c.l.b16 %v47
  %v152 = vunpack.c.l.b16 %v48
  %v153 = vunpack.c.l.b16 %v49
  %v154 = vunpack.c.l.b16 %v50
  %v155 = vunpack.c.l.b16 %v51
  %v156 = vunpack.c.l.b16 %v52
  %v157 = vunpack.c.l.b16 %v53
  %v158 = vunpack.c.l.b16 %v54
  %v159 = vunpack.c.l.b16 %v55
  %v160 = vunpack.c.l.b16 %v56
  %v161 = vunpack.c.l.b16 %v57
  %v162 = vunpack.c.l.b16 %v58
  %v163 = vunpack.c.l.b16 %v59
  %v164 = vunpack.c.l.b16 %v60
  %v165 = vunpack.c.l.b16 %v61
  %v166 = vunpack.c.l.b16 %v62
  %v167 = vunpack.c.l.b16 %v63
  %v168 = vunpack.c.l.b16 %v64
  %v169 = vunpack.c.l.b16 %v65
  %v170 = vunpack.c.l.b16 %v66
  %v171 = vunpack.c.l.b16 %v67
  %v172 = vunpack.c.l.b16 %v68
  %v173 = vpack.c.b16 %v125, %v124
  %v174 = vpack.c.b16 %v127, %v126
  %v175 = vpack.c.b16 %v129, %v128
  %v176 = vpack.c.b16 %v131, %v130
  %v177 = vpack.c.b16 %v133, %v132
  %v178 = vpack.c.b16 %v135, %v134
  %v179 = vpack.c.b16 %v137, %v136
  %v180 = vpack.c.b16 %v139, %v138
  %v181 = vpack.c.b16 %v141, %v140
  %v182 = vpack.c.b16 %v143, %v142
  %v183 = vpack.c.b16 %v145, %v144
  %v184 = vpack.c.b16 %v147, %v146
  %v185 = vpack.c.b16 %v149, %v148
  %v186 = vpack.c.b16 %v151, %v150
  %v187 = vpack.c.b16 %v153, %v152
  %v188 = vpack.c.b16 %v155, %v154
  %v189 = vpack.c.b16 %v157, %v156
  %v190 = vpack.c.b16 %v159, %v158
  %v191 = vpack.c.b16 %v161, %v160
  %v192 = vpack.c.b16 %v163, %v162
  %v193 = vpack.c.b16 %v165, %v164
  %v194 = vpack.c.b16 %v167, %v166
  %v195 = vpack.c.b16 %v169, %v168
  %v196 = vpack.c.b16 %v171, %v170
  %v197 = vpack.c.b16 %v172, %v172
  %v202 = vunpack.c.l.b16 %v15
  %v203 = vunpack.c.l.b16 %v16
  %v204 = vunpack.c.l.b16 %v17
  %v205 = vunpack.c.l.b16 %v18
  %v206 = vpack.c.b16 %v203, %v202
  %v207 = vpack.c.b16 %v205, %v204
  %vm209 = vcmask 203776
  %v211 = vsel %vm209, %v173, 0
  %v214 = vsel %vm209, %v174, 0
  %v217 = vsel %vm209, %v175, 0
  %v220 = vsel %vm209, %v176, 0
  %v223 = vsel %vm209, %v177, 0
  %v226 = vsel %vm209, %v178, 0
  %v229 = vsel %vm209, %v179, 0
  %v232 = vsel %vm209, %v180, 0
  %v235 = vsel %vm209, %v181, 0
  %v238 = vsel %vm209, %v182, 0
  %v241 = vsel %vm209, %v183, 0
  %v244 = vsel %vm209, %v184, 0
  %v247 = vsel %vm209, %v185, 0
  %v250 = vsel %vm209, %v186, 0
  %v253 = vsel %vm209, %v187, 0
  %v256 = vsel %vm209, %v188, 0
  %v259 = vsel %vm209, %v189, 0
  %v262 = vsel %vm209, %v190, 0
  %v265 = vsel %vm209, %v191, 0
  %v268 = vsel %vm209, %v192, 0
  %v271 = vsel %vm209, %v193, 0
  %v274 = vsel %vm209, %v194, 0
  %v277 = vsel %vm209, %v195, 0
  %v280 = vsel %vm209, %v196, 0
  %v283 = vsel %vm209, %v197, 0
  %vm285 = vcmask 1043456
  %vm286 = vcmask 1044480
  %v287 = vsel %vm285, 4294967295, 65535
  %v288 = vsel %vm286, %v287, 0
  %v290 = vand.u32 %v207, %v288
  %292 = vmatprep.subr.bf16.mxu0 0
  %293 = vmatpush1.bf16.msra.mxu0 0
  %294 = vmatprep.subr.bf16.mxu0 0
  %295 = vmatpush1.bf16.msra.mxu0 0
  %296 = vmatprep.subr.bf16.mxu0 0
  %297 = vmatpush1.bf16.msra.mxu0 0
  %298 = vmatprep.subr.bf16.mxu0 0
  %299 = vmatpush1.bf16.msra.mxu0 0
  %300 = vmatprep.subr.bf16.mxu0 0
  %301 = vmatpush1.bf16.msra.mxu0 0
  %302 = vmatprep.subr.bf16.mxu0 0
  %303 = vmatpush1.bf16.msra.mxu0 0
  %304 = vmatprep.subr.bf16.mxu0 0
  %305 = vmatpush1.bf16.msra.mxu0 %v290
  %306 = vmatprep.subr.bf16.mxu0 0
  %307 = vmatpush1.bf16.msra.mxu0 %v206
  %308 = vmatprep.subr.bf16.mxu0 0
  %309 = vmatpush2.bf16.msra.mxu0 0
  %310 = vmatprep.subr.bf16.mxu0 0
  %311 = vmatpush2.bf16.msra.mxu0 0
  %312 = vmatprep.subr.bf16.mxu0 0
  %313 = vmatpush2.bf16.msra.mxu0 0
  %314 = vmatprep.subr.bf16.mxu0 0
  %315 = vmatpush2.bf16.msra.mxu0 0
  %316 = vmatprep.subr.bf16.mxu0 0
  %317 = vmatpush2.bf16.msra.mxu0 0
  %318 = vmatprep.subr.bf16.mxu0 0
  %319 = vmatpush2.bf16.msra.mxu0 0
  %320 = vmatprep.subr.bf16.mxu0 0
  %321 = vmatpush2.bf16.msra.mxu0 0
  %322 = vmatprep.subr.bf16.mxu0 0
  %323 = vmatpush2.bf16.msra.mxu0 0
  %324 = vmatprep.mubr.bf16.mxu0 0
  %325 = vmatmul.mubr.bf16.gmra.mxu0 %v211
  %v326 = vpop.f32.mrf.mxu0
  %v327 = vadd.f32 %v73, %v326
  %v328 = vpop.f32.mrf.mxu0
  %v329 = vpop.f32.mrf.mxu0
  %v330 = vadd.f32 %v73, %v329
  %v331 = vpop.f32.mrf.mxu0
  %332 = vmatprep.mubr.bf16.mxu0 0
  %333 = vmatmul.mubr.bf16.gmra.mxu0 %v214
  %v334 = vpop.f32.mrf.mxu0
  %v335 = vadd.f32 %v73, %v334
  %v336 = vpop.f32.mrf.mxu0
  %v337 = vpop.f32.mrf.mxu0
  %v338 = vadd.f32 %v73, %v337
  %v339 = vpop.f32.mrf.mxu0
  %340 = vmatprep.mubr.bf16.mxu0 0
  %341 = vmatmul.mubr.bf16.gmra.mxu0 %v217
  %v342 = vpop.f32.mrf.mxu0
  %v343 = vadd.f32 %v73, %v342
  %v344 = vpop.f32.mrf.mxu0
  %v345 = vpop.f32.mrf.mxu0
  %v346 = vadd.f32 %v73, %v345
  %v347 = vpop.f32.mrf.mxu0
  %348 = vmatprep.mubr.bf16.mxu0 0
  %349 = vmatmul.mubr.bf16.gmra.mxu0 %v220
  %v350 = vpop.f32.mrf.mxu0
  %v351 = vadd.f32 %v73, %v350
  %v352 = vpop.f32.mrf.mxu0
  %v353 = vpop.f32.mrf.mxu0
  %v354 = vadd.f32 %v73, %v353
  %v355 = vpop.f32.mrf.mxu0
  %356 = vmatprep.mubr.bf16.mxu0 0
  %357 = vmatmul.mubr.bf16.gmra.mxu0 %v223
  %v358 = vpop.f32.mrf.mxu0
  %v359 = vadd.f32 %v73, %v358
  %v360 = vpop.f32.mrf.mxu0
  %v361 = vpop.f32.mrf.mxu0
  %v362 = vadd.f32 %v73, %v361
  %v363 = vpop.f32.mrf.mxu0
  %364 = vmatprep.mubr.bf16.mxu0 0
  %365 = vmatmul.mubr.bf16.gmra.mxu0 %v226
  %v366 = vpop.f32.mrf.mxu0
  %v367 = vadd.f32 %v73, %v366
  %v368 = vpop.f32.mrf.mxu0
  %v369 = vpop.f32.mrf.mxu0
  %v370 = vadd.f32 %v73, %v369
  %v371 = vpop.f32.mrf.mxu0
  %372 = vmatprep.mubr.bf16.mxu0 0
  %373 = vmatmul.mubr.bf16.gmra.mxu0 %v229
  %v374 = vpop.f32.mrf.mxu0
  %v375 = vadd.f32 %v73, %v374
  %v376 = vpop.f32.mrf.mxu0
  %v377 = vpop.f32.mrf.mxu0
  %v378 = vadd.f32 %v73, %v377
  %v379 = vpop.f32.mrf.mxu0
  %380 = vmatprep.mubr.bf16.mxu0 0
  %381 = vmatmul.mubr.bf16.gmra.mxu0 %v232
  %v382 = vpop.f32.mrf.mxu0
  %v383 = vadd.f32 %v73, %v382
  %v384 = vpop.f32.mrf.mxu0
  %v385 = vpop.f32.mrf.mxu0
  %v386 = vadd.f32 %v73, %v385
  %v387 = vpop.f32.mrf.mxu0
  %388 = vmatprep.mubr.bf16.mxu0 0
  %389 = vmatmul.mubr.bf16.gmra.mxu0 %v235
  %v390 = vpop.f32.mrf.mxu0
  %v391 = vadd.f32 %v73, %v390
  %v392 = vpop.f32.mrf.mxu0
  %v393 = vpop.f32.mrf.mxu0
  %v394 = vadd.f32 %v73, %v393
  %v395 = vpop.f32.mrf.mxu0
  %396 = vmatprep.mubr.bf16.mxu0 0
  %397 = vmatmul.mubr.bf16.gmra.mxu0 %v238
  %v398 = vpop.f32.mrf.mxu0
  %v399 = vadd.f32 %v73, %v398
  %v400 = vpop.f32.mrf.mxu0
  %v401 = vpop.f32.mrf.mxu0
  %v402 = vadd.f32 %v73, %v401
  %v403 = vpop.f32.mrf.mxu0
  %404 = vmatprep.mubr.bf16.mxu0 0
  %405 = vmatmul.mubr.bf16.gmra.mxu0 %v241
  %v406 = vpop.f32.mrf.mxu0
  %v407 = vadd.f32 %v73, %v406
  %v408 = vpop.f32.mrf.mxu0
  %v409 = vpop.f32.mrf.mxu0
  %v410 = vadd.f32 %v73, %v409
  %v411 = vpop.f32.mrf.mxu0
  %412 = vmatprep.mubr.bf16.mxu0 0
  %413 = vmatmul.mubr.bf16.gmra.mxu0 %v244
  %v414 = vpop.f32.mrf.mxu0
  %v415 = vadd.f32 %v73, %v414
  %v416 = vpop.f32.mrf.mxu0
  %v417 = vpop.f32.mrf.mxu0
  %v418 = vadd.f32 %v73, %v417
  %v419 = vpop.f32.mrf.mxu0
  %420 = vmatprep.mubr.bf16.mxu0 0
  %421 = vmatmul.mubr.bf16.gmra.mxu0 %v247
  %v422 = vpop.f32.mrf.mxu0
  %v423 = vadd.f32 %v73, %v422
  %v424 = vpop.f32.mrf.mxu0
  %v425 = vpop.f32.mrf.mxu0
  %v426 = vadd.f32 %v73, %v425
  %v427 = vpop.f32.mrf.mxu0
  %428 = vmatprep.mubr.bf16.mxu0 0
  %429 = vmatmul.mubr.bf16.gmra.mxu0 %v250
  %v430 = vpop.f32.mrf.mxu0
  %v431 = vadd.f32 %v73, %v430
  %v432 = vpop.f32.mrf.mxu0
  %v433 = vpop.f32.mrf.mxu0
  %v434 = vadd.f32 %v73, %v433
  %v435 = vpop.f32.mrf.mxu0
  %436 = vmatprep.mubr.bf16.mxu0 0
  %437 = vmatmul.mubr.bf16.gmra.mxu0 %v253
  %v438 = vpop.f32.mrf.mxu0
  %v439 = vadd.f32 %v73, %v438
  %v440 = vpop.f32.mrf.mxu0
  %v441 = vpop.f32.mrf.mxu0
  %v442 = vadd.f32 %v73, %v441
  %v443 = vpop.f32.mrf.mxu0
  %444 = vmatprep.mubr.bf16.mxu0 0
  %445 = vmatmul.mubr.bf16.gmra.mxu0 %v256
  %v446 = vpop.f32.mrf.mxu0
  %v447 = vadd.f32 %v73, %v446
  %v448 = vpop.f32.mrf.mxu0
  %v449 = vpop.f32.mrf.mxu0
  %v450 = vadd.f32 %v73, %v449
  %v451 = vpop.f32.mrf.mxu0
  %452 = vmatprep.mubr.bf16.mxu0 0
  %453 = vmatmul.mubr.bf16.gmra.mxu0 %v259
  %v454 = vpop.f32.mrf.mxu0
  %v455 = vadd.f32 %v73, %v454
  %v456 = vpop.f32.mrf.mxu0
  %v457 = vpop.f32.mrf.mxu0
  %v458 = vadd.f32 %v73, %v457
  %v459 = vpop.f32.mrf.mxu0
  %460 = vmatprep.mubr.bf16.mxu0 0
  %461 = vmatmul.mubr.bf16.gmra.mxu0 %v262
  %v462 = vpop.f32.mrf.mxu0
  %v463 = vadd.f32 %v73, %v462
  %v464 = vpop.f32.mrf.mxu0
  %v465 = vpop.f32.mrf.mxu0
  %v466 = vadd.f32 %v73, %v465
  %v467 = vpop.f32.mrf.mxu0
  %468 = vmatprep.mubr.bf16.mxu0 0
  %469 = vmatmul.mubr.bf16.gmra.mxu0 %v265
  %v470 = vpop.f32.mrf.mxu0
  %v471 = vadd.f32 %v73, %v470
  %v472 = vpop.f32.mrf.mxu0
  %v473 = vpop.f32.mrf.mxu0
  %v474 = vadd.f32 %v73, %v473
  %v475 = vpop.f32.mrf.mxu0
  %476 = vmatprep.mubr.bf16.mxu0 0
  %477 = vmatmul.mubr.bf16.gmra.mxu0 %v268
  %v478 = vpop.f32.mrf.mxu0
  %v479 = vadd.f32 %v73, %v478
  %v480 = vpop.f32.mrf.mxu0
  %v481 = vpop.f32.mrf.mxu0
  %v482 = vadd.f32 %v73, %v481
  %v483 = vpop.f32.mrf.mxu0
  %484 = vmatprep.mubr.bf16.mxu0 0
  %485 = vmatmul.mubr.bf16.gmra.mxu0 %v271
  %v486 = vpop.f32.mrf.mxu0
  %v487 = vadd.f32 %v73, %v486
  %v488 = vpop.f32.mrf.mxu0
  %v489 = vpop.f32.mrf.mxu0
  %v490 = vadd.f32 %v73, %v489
  %v491 = vpop.f32.mrf.mxu0
  %492 = vmatprep.mubr.bf16.mxu0 0
  %493 = vmatmul.mubr.bf16.gmra.mxu0 %v274
  %v494 = vpop.f32.mrf.mxu0
  %v495 = vadd.f32 %v73, %v494
  %v496 = vpop.f32.mrf.mxu0
  %v497 = vpop.f32.mrf.mxu0
  %v498 = vadd.f32 %v73, %v497
  %v499 = vpop.f32.mrf.mxu0
  %500 = vmatprep.mubr.bf16.mxu0 0
  %501 = vmatmul.mubr.bf16.gmra.mxu0 %v277
  %v502 = vpop.f32.mrf.mxu0
  %v503 = vadd.f32 %v73, %v502
  %v504 = vpop.f32.mrf.mxu0
  %v505 = vpop.f32.mrf.mxu0
  %v506 = vadd.f32 %v73, %v505
  %v507 = vpop.f32.mrf.mxu0
  %508 = vmatprep.mubr.bf16.mxu0 0
  %509 = vmatmul.mubr.bf16.gmra.mxu0 %v280
  %v510 = vpop.f32.mrf.mxu0
  %v511 = vadd.f32 %v73, %v510
  %v512 = vpop.f32.mrf.mxu0
  %v513 = vpop.f32.mrf.mxu0
  %v514 = vadd.f32 %v73, %v513
  %v515 = vpop.f32.mrf.mxu0
  %516 = vmatprep.mubr.bf16.mxu0 0
  %517 = vmatmul.mubr.bf16.gmra.mxu0 %v283
  %v518 = vpop.f32.mrf.mxu0
  %v519 = vadd.f32 %v73, %v518
  %v520 = vpop.f32.mrf.mxu0
  %v521 = vpop.f32.mrf.mxu0
  %v522 = vpop.f32.mrf.mxu0
  %523 = vdwg.mxu0
  %v524 = vmax.f32 %v327, 0.0
  %v525 = vmax.f32 %v330, 0.0
  %v526 = vmax.f32 %v335, 0.0
  %v527 = vmax.f32 %v338, 0.0
  %v528 = vmax.f32 %v343, 0.0
  %v529 = vmax.f32 %v346, 0.0
  %v530 = vmax.f32 %v351, 0.0
  %v531 = vmax.f32 %v354, 0.0
  %v532 = vmax.f32 %v359, 0.0
  %v533 = vmax.f32 %v362, 0.0
  %v534 = vmax.f32 %v367, 0.0
  %v535 = vmax.f32 %v370, 0.0
  %v536 = vmax.f32 %v375, 0.0
  %v537 = vmax.f32 %v378, 0.0
  %v538 = vmax.f32 %v383, 0.0
  %v539 = vmax.f32 %v386, 0.0
  %v540 = vmax.f32 %v391, 0.0
  %v541 = vmax.f32 %v394, 0.0
  %v542 = vmax.f32 %v399, 0.0
  %v543 = vmax.f32 %v402, 0.0
  %v544 = vmax.f32 %v407, 0.0
  %v545 = vmax.f32 %v410, 0.0
  %v546 = vmax.f32 %v415, 0.0
  %v547 = vmax.f32 %v418, 0.0
  %v548 = vmax.f32 %v423, 0.0
  %v549 = vmax.f32 %v426, 0.0
  %v550 = vmax.f32 %v431, 0.0
  %v551 = vmax.f32 %v434, 0.0
  %v552 = vmax.f32 %v439, 0.0
  %v553 = vmax.f32 %v442, 0.0
  %v554 = vmax.f32 %v447, 0.0
  %v555 = vmax.f32 %v450, 0.0
  %v556 = vmax.f32 %v455, 0.0
  %v557 = vmax.f32 %v458, 0.0
  %v558 = vmax.f32 %v463, 0.0
  %v559 = vmax.f32 %v466, 0.0
  %v560 = vmax.f32 %v471, 0.0
  %v561 = vmax.f32 %v474, 0.0
  %v562 = vmax.f32 %v479, 0.0
  %v563 = vmax.f32 %v482, 0.0
  %v564 = vmax.f32 %v487, 0.0
  %v565 = vmax.f32 %v490, 0.0
  %v566 = vmax.f32 %v495, 0.0
  %v567 = vmax.f32 %v498, 0.0
  %v568 = vmax.f32 %v503, 0.0
  %v569 = vmax.f32 %v506, 0.0
  %v570 = vmax.f32 %v511, 0.0
  %v571 = vmax.f32 %v514, 0.0
  %v572 = vmax.f32 %v519, 0.0
  %s573 = scalar_lea.vmem %s0, 196
  %v574 = vld [vmem:[%s573] sm:$0xf]
  %v575 = vld [vmem:[%s573 + $0x4] sm:$0xf]
  %v576 = vld [vmem:[%s573 + $0x8] sm:$0xf]
  %v577 = vld [vmem:[%s573 + $0xc] sm:$0xf]
  %v578 = vld [vmem:[%s573 + $0x10] sm:$0xf]
  %v579 = vld [vmem:[%s573 + $0x14] sm:$0xf]
  %v580 = vld [vmem:[%s573 + $0x18] sm:$0xf]
  %v581 = vld [vmem:[%s573 + $0x1c] sm:$0xf]
  %v582 = vld [vmem:[%s573 + $0x20] sm:$0xf]
  %v583 = vld [vmem:[%s573 + $0x24] sm:$0xf]
  %v584 = vld [vmem:[%s573 + $0x28] sm:$0xf]
  %v585 = vld [vmem:[%s573 + $0x2c] sm:$0xf]
  %v586 = vld [vmem:[%s573 + $0x30] sm:$0xf]
  %v587 = vld [vmem:[%s573 + $0x34] sm:$0xf]
  %v588 = vld [vmem:[%s573 + $0x38] sm:$0xf]
  %v589 = vld [vmem:[%s573 + $0x3c] sm:$0xf]
  %v590 = vld [vmem:[%s573 + $0x40] sm:$0xf]
  %v591 = vld [vmem:[%s573 + $0x44] sm:$0xf]
  %v592 = vld [vmem:[%s573 + $0x48] sm:$0xf]
  %v593 = vld [vmem:[%s573 + $0x4c] sm:$0xf]
  %v594 = vld [vmem:[%s573 + $0x50] sm:$0xf]
  %v595 = vld [vmem:[%s573 + $0x54] sm:$0xf]
  %v596 = vld [vmem:[%s573 + $0x58] sm:$0xf]
  %v597 = vld [vmem:[%s573 + $0x5c] sm:$0xf]
  %v598 = vld [vmem:[%s573 + $0x60] sm:$0xf]
  %v599 = vld [vmem:[%s573 + $0x64] sm:$0xf]
  %v600 = vld [vmem:[%s573 + $0x68] sm:$0xf]
  %v601 = vld [vmem:[%s573 + $0x6c] sm:$0xf]
  %v602 = vld [vmem:[%s573 + $0x70] sm:$0xf]
  %v603 = vld [vmem:[%s573 + $0x74] sm:$0xf]
  %v604 = vld [vmem:[%s573 + $0x78] sm:$0xf]
  %v605 = vld [vmem:[%s573 + $0x7c] sm:$0xf]
  %v606 = vld [vmem:[%s573 + $0x80] sm:$0xf]
  %v607 = vld [vmem:[%s573 + $0x84] sm:$0xf]
  %v608 = vld [vmem:[%s573 + $0x88] sm:$0xf]
  %v609 = vld [vmem:[%s573 + $0x8c] sm:$0xf]
  %v610 = vld [vmem:[%s573 + $0x90] sm:$0xf]
  %v611 = vld [vmem:[%s573 + $0x94] sm:$0xf]
  %v612 = vld [vmem:[%s573 + $0x98] sm:$0xf]
  %v613 = vld [vmem:[%s573 + $0x9c] sm:$0xf]
  %v614 = vld [vmem:[%s573 + $0xa0] sm:$0xf]
  %v615 = vld [vmem:[%s573 + $0xa4] sm:$0xf]
  %v616 = vld [vmem:[%s573 + $0xa8] sm:$0xf]
  %v617 = vld [vmem:[%s573 + $0xac] sm:$0xf]
  %v618 = vld [vmem:[%s573 + $0xb0] sm:$0xf]
  %v619 = vld [vmem:[%s573 + $0xb4] sm:$0xf]
  %v620 = vld [vmem:[%s573 + $0xb8] sm:$0xf]
  %v621 = vld [vmem:[%s573 + $0xbc] sm:$0xf]
  %v622 = vld [vmem:[%s573 + $0xc0] sm:$0xf]
  %v672 = vunpack.c.l.b16 %v574
  %v673 = vunpack.c.l.b16 %v575
  %v674 = vunpack.c.l.b16 %v576
  %v675 = vunpack.c.l.b16 %v577
  %v676 = vunpack.c.l.b16 %v578
  %v677 = vunpack.c.l.b16 %v579
  %v678 = vunpack.c.l.b16 %v580
  %v679 = vunpack.c.l.b16 %v581
  %v680 = vunpack.c.l.b16 %v582
  %v681 = vunpack.c.l.b16 %v583
  %v682 = vunpack.c.l.b16 %v584
  %v683 = vunpack.c.l.b16 %v585
  %v684 = vunpack.c.l.b16 %v586
  %v685 = vunpack.c.l.b16 %v587
  %v686 = vunpack.c.l.b16 %v588
  %v687 = vunpack.c.l.b16 %v589
  %v688 = vunpack.c.l.b16 %v590
  %v689 = vunpack.c.l.b16 %v591
  %v690 = vunpack.c.l.b16 %v592
  %v691 = vunpack.c.l.b16 %v593
  %v692 = vunpack.c.l.b16 %v594
  %v693 = vunpack.c.l.b16 %v595
  %v694 = vunpack.c.l.b16 %v596
  %v695 = vunpack.c.l.b16 %v597
  %v696 = vunpack.c.l.b16 %v598
  %v697 = vunpack.c.l.b16 %v599
  %v698 = vunpack.c.l.b16 %v600
  %v699 = vunpack.c.l.b16 %v601
  %v700 = vunpack.c.l.b16 %v602
  %v701 = vunpack.c.l.b16 %v603
  %v702 = vunpack.c.l.b16 %v604
  %v703 = vunpack.c.l.b16 %v605
  %v704 = vunpack.c.l.b16 %v606
  %v705 = vunpack.c.l.b16 %v607
  %v706 = vunpack.c.l.b16 %v608
  %v707 = vunpack.c.l.b16 %v609
  %v708 = vunpack.c.l.b16 %v610
  %v709 = vunpack.c.l.b16 %v611
  %v710 = vunpack.c.l.b16 %v612
  %v711 = vunpack.c.l.b16 %v613
  %v712 = vunpack.c.l.b16 %v614
  %v713 = vunpack.c.l.b16 %v615
  %v714 = vunpack.c.l.b16 %v616
  %v715 = vunpack.c.l.b16 %v617
  %v716 = vunpack.c.l.b16 %v618
  %v717 = vunpack.c.l.b16 %v619
  %v718 = vunpack.c.l.b16 %v620
  %v719 = vunpack.c.l.b16 %v621
  %v720 = vunpack.c.l.b16 %v622
  %v721 = vpack.c.b16 %v673, %v672
  %v722 = vpack.c.b16 %v675, %v674
  %v723 = vpack.c.b16 %v677, %v676
  %v724 = vpack.c.b16 %v679, %v678
  %v725 = vpack.c.b16 %v681, %v680
  %v726 = vpack.c.b16 %v683, %v682
  %v727 = vpack.c.b16 %v685, %v684
  %v728 = vpack.c.b16 %v687, %v686
  %v729 = vpack.c.b16 %v689, %v688
  %v730 = vpack.c.b16 %v691, %v690
  %v731 = vpack.c.b16 %v693, %v692
  %v732 = vpack.c.b16 %v695, %v694
  %v733 = vpack.c.b16 %v697, %v696
  %v734 = vpack.c.b16 %v699, %v698
  %v735 = vpack.c.b16 %v701, %v700
  %v736 = vpack.c.b16 %v703, %v702
  %v737 = vpack.c.b16 %v705, %v704
  %v738 = vpack.c.b16 %v707, %v706
  %v739 = vpack.c.b16 %v709, %v708
  %v740 = vpack.c.b16 %v711, %v710
  %v741 = vpack.c.b16 %v713, %v712
  %v742 = vpack.c.b16 %v715, %v714
  %v743 = vpack.c.b16 %v717, %v716
  %v744 = vpack.c.b16 %v719, %v718
  %v745 = vpack.c.b16 %v720, %v720
  %v747 = vsel %vm209, %v721, 0
  %v750 = vsel %vm209, %v722, 0
  %v753 = vsel %vm209, %v723, 0
  %v756 = vsel %vm209, %v724, 0
  %v759 = vsel %vm209, %v725, 0
  %v762 = vsel %vm209, %v726, 0
  %v765 = vsel %vm209, %v727, 0
  %v768 = vsel %vm209, %v728, 0
  %v771 = vsel %vm209, %v729, 0
  %v774 = vsel %vm209, %v730, 0
  %v777 = vsel %vm209, %v731, 0
  %v780 = vsel %vm209, %v732, 0
  %v783 = vsel %vm209, %v733, 0
  %v786 = vsel %vm209, %v734, 0
  %v789 = vsel %vm209, %v735, 0
  %v792 = vsel %vm209, %v736, 0
  %v795 = vsel %vm209, %v737, 0
  %v798 = vsel %vm209, %v738, 0
  %v801 = vsel %vm209, %v739, 0
  %v804 = vsel %vm209, %v740, 0
  %v807 = vsel %vm209, %v741, 0
  %v810 = vsel %vm209, %v742, 0
  %v813 = vsel %vm209, %v743, 0
  %v816 = vsel %vm209, %v744, 0
  %v819 = vsel %vm209, %v745, 0
  %821 = vmatprep.subr.bf16.mxu0 0
  %822 = vmatpush1.bf16.msra.mxu0 0
  %823 = vmatprep.subr.bf16.mxu0 0
  %824 = vmatpush1.bf16.msra.mxu0 0
  %825 = vmatprep.subr.bf16.mxu0 0
  %826 = vmatpush1.bf16.msra.mxu0 0
  %827 = vmatprep.subr.bf16.mxu0 0
  %828 = vmatpush1.bf16.msra.mxu0 0
  %829 = vmatprep.subr.bf16.mxu0 0
  %830 = vmatpush1.bf16.msra.mxu0 0
  %831 = vmatprep.subr.bf16.mxu0 0
  %832 = vmatpush1.bf16.msra.mxu0 0
  %833 = vmatprep.subr.bf16.mxu0 0
  %834 = vmatpush1.bf16.msra.mxu0 %v290
  %835 = vmatprep.subr.bf16.mxu0 0
  %836 = vmatpush1.bf16.msra.mxu0 %v206
  %837 = vmatprep.subr.bf16.mxu0 0
  %838 = vmatpush2.bf16.msra.mxu0 0
  %839 = vmatprep.subr.bf16.mxu0 0
  %840 = vmatpush2.bf16.msra.mxu0 0
  %841 = vmatprep.subr.bf16.mxu0 0
  %842 = vmatpush2.bf16.msra.mxu0 0
  %843 = vmatprep.subr.bf16.mxu0 0
  %844 = vmatpush2.bf16.msra.mxu0 0
  %845 = vmatprep.subr.bf16.mxu0 0
  %846 = vmatpush2.bf16.msra.mxu0 0
  %847 = vmatprep.subr.bf16.mxu0 0
  %848 = vmatpush2.bf16.msra.mxu0 0
  %849 = vmatprep.subr.bf16.mxu0 0
  %850 = vmatpush2.bf16.msra.mxu0 0
  %851 = vmatprep.subr.bf16.mxu0 0
  %852 = vmatpush2.bf16.msra.mxu0 0
  %853 = vmatprep.mubr.bf16.mxu0 0
  %854 = vmatmul.mubr.bf16.gmra.mxu0 %v747
  %v855 = vpop.f32.mrf.mxu0
  %v856 = vadd.f32 %v73, %v855
  %v857 = vpop.f32.mrf.mxu0
  %v858 = vpop.f32.mrf.mxu0
  %v859 = vadd.f32 %v73, %v858
  %v860 = vpop.f32.mrf.mxu0
  %861 = vmatprep.mubr.bf16.mxu0 0
  %862 = vmatmul.mubr.bf16.gmra.mxu0 %v750
  %v863 = vpop.f32.mrf.mxu0
  %v864 = vadd.f32 %v73, %v863
  %v865 = vpop.f32.mrf.mxu0
  %v866 = vpop.f32.mrf.mxu0
  %v867 = vadd.f32 %v73, %v866
  %v868 = vpop.f32.mrf.mxu0
  %869 = vmatprep.mubr.bf16.mxu0 0
  %870 = vmatmul.mubr.bf16.gmra.mxu0 %v753
  %v871 = vpop.f32.mrf.mxu0
  %v872 = vadd.f32 %v73, %v871
  %v873 = vpop.f32.mrf.mxu0
  %v874 = vpop.f32.mrf.mxu0
  %v875 = vadd.f32 %v73, %v874
  %v876 = vpop.f32.mrf.mxu0
  %877 = vmatprep.mubr.bf16.mxu0 0
  %878 = vmatmul.mubr.bf16.gmra.mxu0 %v756
  %v879 = vpop.f32.mrf.mxu0
  %v880 = vadd.f32 %v73, %v879
  %v881 = vpop.f32.mrf.mxu0
  %v882 = vpop.f32.mrf.mxu0
  %v883 = vadd.f32 %v73, %v882
  %v884 = vpop.f32.mrf.mxu0
  %885 = vmatprep.mubr.bf16.mxu0 0
  %886 = vmatmul.mubr.bf16.gmra.mxu0 %v759
  %v887 = vpop.f32.mrf.mxu0
  %v888 = vadd.f32 %v73, %v887
  %v889 = vpop.f32.mrf.mxu0
  %v890 = vpop.f32.mrf.mxu0
  %v891 = vadd.f32 %v73, %v890
  %v892 = vpop.f32.mrf.mxu0
  %893 = vmatprep.mubr.bf16.mxu0 0
  %894 = vmatmul.mubr.bf16.gmra.mxu0 %v762
  %v895 = vpop.f32.mrf.mxu0
  %v896 = vadd.f32 %v73, %v895
  %v897 = vpop.f32.mrf.mxu0
  %v898 = vpop.f32.mrf.mxu0
  %v899 = vadd.f32 %v73, %v898
  %v900 = vpop.f32.mrf.mxu0
  %901 = vmatprep.mubr.bf16.mxu0 0
  %902 = vmatmul.mubr.bf16.gmra.mxu0 %v765
  %v903 = vpop.f32.mrf.mxu0
  %v904 = vadd.f32 %v73, %v903
  %v905 = vpop.f32.mrf.mxu0
  %v906 = vpop.f32.mrf.mxu0
  %v907 = vadd.f32 %v73, %v906
  %v908 = vpop.f32.mrf.mxu0
  %909 = vmatprep.mubr.bf16.mxu0 0
  %910 = vmatmul.mubr.bf16.gmra.mxu0 %v768
  %v911 = vpop.f32.mrf.mxu0
  %v912 = vadd.f32 %v73, %v911
  %v913 = vpop.f32.mrf.mxu0
  %v914 = vpop.f32.mrf.mxu0
  %v915 = vadd.f32 %v73, %v914
  %v916 = vpop.f32.mrf.mxu0
  %917 = vmatprep.mubr.bf16.mxu0 0
  %918 = vmatmul.mubr.bf16.gmra.mxu0 %v771
  %v919 = vpop.f32.mrf.mxu0
  %v920 = vadd.f32 %v73, %v919
  %v921 = vpop.f32.mrf.mxu0
  %v922 = vpop.f32.mrf.mxu0
  %v923 = vadd.f32 %v73, %v922
  %v924 = vpop.f32.mrf.mxu0
  %925 = vmatprep.mubr.bf16.mxu0 0
  %926 = vmatmul.mubr.bf16.gmra.mxu0 %v774
  %v927 = vpop.f32.mrf.mxu0
  %v928 = vadd.f32 %v73, %v927
  %v929 = vpop.f32.mrf.mxu0
  %v930 = vpop.f32.mrf.mxu0
  %v931 = vadd.f32 %v73, %v930
  %v932 = vpop.f32.mrf.mxu0
  %933 = vmatprep.mubr.bf16.mxu0 0
  %934 = vmatmul.mubr.bf16.gmra.mxu0 %v777
  %v935 = vpop.f32.mrf.mxu0
  %v936 = vadd.f32 %v73, %v935
  %v937 = vpop.f32.mrf.mxu0
  %v938 = vpop.f32.mrf.mxu0
  %v939 = vadd.f32 %v73, %v938
  %v940 = vpop.f32.mrf.mxu0
  %941 = vmatprep.mubr.bf16.mxu0 0
  %942 = vmatmul.mubr.bf16.gmra.mxu0 %v780
  %v943 = vpop.f32.mrf.mxu0
  %v944 = vadd.f32 %v73, %v943
  %v945 = vpop.f32.mrf.mxu0
  %v946 = vpop.f32.mrf.mxu0
  %v947 = vadd.f32 %v73, %v946
  %v948 = vpop.f32.mrf.mxu0
  %949 = vmatprep.mubr.bf16.mxu0 0
  %950 = vmatmul.mubr.bf16.gmra.mxu0 %v783
  %v951 = vpop.f32.mrf.mxu0
  %v952 = vadd.f32 %v73, %v951
  %v953 = vpop.f32.mrf.mxu0
  %v954 = vpop.f32.mrf.mxu0
  %v955 = vadd.f32 %v73, %v954
  %v956 = vpop.f32.mrf.mxu0
  %957 = vmatprep.mubr.bf16.mxu0 0
  %958 = vmatmul.mubr.bf16.gmra.mxu0 %v786
  %v959 = vpop.f32.mrf.mxu0
  %v960 = vadd.f32 %v73, %v959
  %v961 = vpop.f32.mrf.mxu0
  %v962 = vpop.f32.mrf.mxu0
  %v963 = vadd.f32 %v73, %v962
  %v964 = vpop.f32.mrf.mxu0
  %965 = vmatprep.mubr.bf16.mxu0 0
  %966 = vmatmul.mubr.bf16.gmra.mxu0 %v789
  %v967 = vpop.f32.mrf.mxu0
  %v968 = vadd.f32 %v73, %v967
  %v969 = vpop.f32.mrf.mxu0
  %v970 = vpop.f32.mrf.mxu0
  %v971 = vadd.f32 %v73, %v970
  %v972 = vpop.f32.mrf.mxu0
  %973 = vmatprep.mubr.bf16.mxu0 0
  %974 = vmatmul.mubr.bf16.gmra.mxu0 %v792
  %v975 = vpop.f32.mrf.mxu0
  %v976 = vadd.f32 %v73, %v975
  %v977 = vpop.f32.mrf.mxu0
  %v978 = vpop.f32.mrf.mxu0
  %v979 = vadd.f32 %v73, %v978
  %v980 = vpop.f32.mrf.mxu0
  %981 = vmatprep.mubr.bf16.mxu0 0
  %982 = vmatmul.mubr.bf16.gmra.mxu0 %v795
  %v983 = vpop.f32.mrf.mxu0
  %v984 = vadd.f32 %v73, %v983
  %v985 = vpop.f32.mrf.mxu0
  %v986 = vpop.f32.mrf.mxu0
  %v987 = vadd.f32 %v73, %v986
  %v988 = vpop.f32.mrf.mxu0
  %989 = vmatprep.mubr.bf16.mxu0 0
  %990 = vmatmul.mubr.bf16.gmra.mxu0 %v798
  %v991 = vpop.f32.mrf.mxu0
  %v992 = vadd.f32 %v73, %v991
  %v993 = vpop.f32.mrf.mxu0
  %v994 = vpop.f32.mrf.mxu0
  %v995 = vadd.f32 %v73, %v994
  %v996 = vpop.f32.mrf.mxu0
  %997 = vmatprep.mubr.bf16.mxu0 0
  %998 = vmatmul.mubr.bf16.gmra.mxu0 %v801
  %v999 = vpop.f32.mrf.mxu0
  %v1000 = vadd.f32 %v73, %v999
  %v1001 = vpop.f32.mrf.mxu0
  %v1002 = vpop.f32.mrf.mxu0
  %v1003 = vadd.f32 %v73, %v1002
  %v1004 = vpop.f32.mrf.mxu0
  %1005 = vmatprep.mubr.bf16.mxu0 0
  %1006 = vmatmul.mubr.bf16.gmra.mxu0 %v804
  %v1007 = vpop.f32.mrf.mxu0
  %v1008 = vadd.f32 %v73, %v1007
  %v1009 = vpop.f32.mrf.mxu0
  %v1010 = vpop.f32.mrf.mxu0
  %v1011 = vadd.f32 %v73, %v1010
  %v1012 = vpop.f32.mrf.mxu0
  %1013 = vmatprep.mubr.bf16.mxu0 0
  %1014 = vmatmul.mubr.bf16.gmra.mxu0 %v807
  %v1015 = vpop.f32.mrf.mxu0
  %v1016 = vadd.f32 %v73, %v1015
  %v1017 = vpop.f32.mrf.mxu0
  %v1018 = vpop.f32.mrf.mxu0
  %v1019 = vadd.f32 %v73, %v1018
  %v1020 = vpop.f32.mrf.mxu0
  %1021 = vmatprep.mubr.bf16.mxu0 0
  %1022 = vmatmul.mubr.bf16.gmra.mxu0 %v810
  %v1023 = vpop.f32.mrf.mxu0
  %v1024 = vadd.f32 %v73, %v1023
  %v1025 = vpop.f32.mrf.mxu0
  %v1026 = vpop.f32.mrf.mxu0
  %v1027 = vadd.f32 %v73, %v1026
  %v1028 = vpop.f32.mrf.mxu0
  %1029 = vmatprep.mubr.bf16.mxu0 0
  %1030 = vmatmul.mubr.bf16.gmra.mxu0 %v813
  %v1031 = vpop.f32.mrf.mxu0
  %v1032 = vadd.f32 %v73, %v1031
  %v1033 = vpop.f32.mrf.mxu0
  %v1034 = vpop.f32.mrf.mxu0
  %v1035 = vadd.f32 %v73, %v1034
  %v1036 = vpop.f32.mrf.mxu0
  %1037 = vmatprep.mubr.bf16.mxu0 0
  %1038 = vmatmul.mubr.bf16.gmra.mxu0 %v816
  %v1039 = vpop.f32.mrf.mxu0
  %v1040 = vadd.f32 %v73, %v1039
  %v1041 = vpop.f32.mrf.mxu0
  %v1042 = vpop.f32.mrf.mxu0
  %v1043 = vadd.f32 %v73, %v1042
  %v1044 = vpop.f32.mrf.mxu0
  %1045 = vmatprep.mubr.bf16.mxu0 0
  %1046 = vmatmul.mubr.bf16.gmra.mxu0 %v819
  %v1047 = vpop.f32.mrf.mxu0
  %v1048 = vadd.f32 %v73, %v1047
  %v1049 = vpop.f32.mrf.mxu0
  %v1050 = vpop.f32.mrf.mxu0
  %v1051 = vpop.f32.mrf.mxu0
  %1052 = vdwg.mxu0
  %v1053 = vmax.f32 %v856, 0.0
  %v1054 = vmax.f32 %v859, 0.0
  %v1055 = vmax.f32 %v864, 0.0
  %v1056 = vmax.f32 %v867, 0.0
  %v1057 = vmax.f32 %v872, 0.0
  %v1058 = vmax.f32 %v875, 0.0
  %v1059 = vmax.f32 %v880, 0.0
  %v1060 = vmax.f32 %v883, 0.0
  %v1061 = vmax.f32 %v888, 0.0
  %v1062 = vmax.f32 %v891, 0.0
  %v1063 = vmax.f32 %v896, 0.0
  %v1064 = vmax.f32 %v899, 0.0
  %v1065 = vmax.f32 %v904, 0.0
  %v1066 = vmax.f32 %v907, 0.0
  %v1067 = vmax.f32 %v912, 0.0
  %v1068 = vmax.f32 %v915, 0.0
  %v1069 = vmax.f32 %v920, 0.0
  %v1070 = vmax.f32 %v923, 0.0
  %v1071 = vmax.f32 %v928, 0.0
  %v1072 = vmax.f32 %v931, 0.0
  %v1073 = vmax.f32 %v936, 0.0
  %v1074 = vmax.f32 %v939, 0.0
  %v1075 = vmax.f32 %v944, 0.0
  %v1076 = vmax.f32 %v947, 0.0
  %v1077 = vmax.f32 %v952, 0.0
  %v1078 = vmax.f32 %v955, 0.0
  %v1079 = vmax.f32 %v960, 0.0
  %v1080 = vmax.f32 %v963, 0.0
  %v1081 = vmax.f32 %v968, 0.0
  %v1082 = vmax.f32 %v971, 0.0
  %v1083 = vmax.f32 %v976, 0.0
  %v1084 = vmax.f32 %v979, 0.0
  %v1085 = vmax.f32 %v984, 0.0
  %v1086 = vmax.f32 %v987, 0.0
  %v1087 = vmax.f32 %v992, 0.0
  %v1088 = vmax.f32 %v995, 0.0
  %v1089 = vmax.f32 %v1000, 0.0
  %v1090 = vmax.f32 %v1003, 0.0
  %v1091 = vmax.f32 %v1008, 0.0
  %v1092 = vmax.f32 %v1011, 0.0
  %v1093 = vmax.f32 %v1016, 0.0
  %v1094 = vmax.f32 %v1019, 0.0
  %v1095 = vmax.f32 %v1024, 0.0
  %v1096 = vmax.f32 %v1027, 0.0
  %v1097 = vmax.f32 %v1032, 0.0
  %v1098 = vmax.f32 %v1035, 0.0
  %v1099 = vmax.f32 %v1040, 0.0
  %v1100 = vmax.f32 %v1043, 0.0
  %v1101 = vmax.f32 %v1048, 0.0
  %v1102 = vmax.f32 %v524, %v1053
  %v1103 = vmax.f32 %v525, %v1054
  %v1104 = vmax.f32 %v526, %v1055
  %v1105 = vmax.f32 %v527, %v1056
  %v1106 = vmax.f32 %v528, %v1057
  %v1107 = vmax.f32 %v529, %v1058
  %v1108 = vmax.f32 %v530, %v1059
  %v1109 = vmax.f32 %v531, %v1060
  %v1110 = vmax.f32 %v532, %v1061
  %v1111 = vmax.f32 %v533, %v1062
  %v1112 = vmax.f32 %v534, %v1063
  %v1113 = vmax.f32 %v535, %v1064
  %v1114 = vmax.f32 %v536, %v1065
  %v1115 = vmax.f32 %v537, %v1066
  %v1116 = vmax.f32 %v538, %v1067
  %v1117 = vmax.f32 %v539, %v1068
  %v1118 = vmax.f32 %v540, %v1069
  %v1119 = vmax.f32 %v541, %v1070
  %v1120 = vmax.f32 %v542, %v1071
  %v1121 = vmax.f32 %v543, %v1072
  %v1122 = vmax.f32 %v544, %v1073
  %v1123 = vmax.f32 %v545, %v1074
  %v1124 = vmax.f32 %v546, %v1075
  %v1125 = vmax.f32 %v547, %v1076
  %v1126 = vmax.f32 %v548, %v1077
  %v1127 = vmax.f32 %v549, %v1078
  %v1128 = vmax.f32 %v550, %v1079
  %v1129 = vmax.f32 %v551, %v1080
  %v1130 = vmax.f32 %v552, %v1081
  %v1131 = vmax.f32 %v553, %v1082
  %v1132 = vmax.f32 %v554, %v1083
  %v1133 = vmax.f32 %v555, %v1084
  %v1134 = vmax.f32 %v556, %v1085
  %v1135 = vmax.f32 %v557, %v1086
  %v1136 = vmax.f32 %v558, %v1087
  %v1137 = vmax.f32 %v559, %v1088
  %v1138 = vmax.f32 %v560, %v1089
  %v1139 = vmax.f32 %v561, %v1090
  %v1140 = vmax.f32 %v562, %v1091
  %v1141 = vmax.f32 %v563, %v1092
  %v1142 = vmax.f32 %v564, %v1093
  %v1143 = vmax.f32 %v565, %v1094
  %v1144 = vmax.f32 %v566, %v1095
  %v1145 = vmax.f32 %v567, %v1096
  %v1146 = vmax.f32 %v568, %v1097
  %v1147 = vmax.f32 %v569, %v1098
  %v1148 = vmax.f32 %v570, %v1099
  %v1149 = vmax.f32 %v571, %v1100
  %v1150 = vmax.f32 %v572, %v1101
  %s1151 = scalar_lea.vmem %s0, 392
  %v1152 = vld [vmem:[%s1151] sm:$0xf]
  %v1153 = vld [vmem:[%s1151 + $0x4] sm:$0xf]
  %v1154 = vld [vmem:[%s1151 + $0x8] sm:$0xf]
  %v1155 = vld [vmem:[%s1151 + $0xc] sm:$0xf]
  %v1156 = vld [vmem:[%s1151 + $0x10] sm:$0xf]
  %v1157 = vld [vmem:[%s1151 + $0x14] sm:$0xf]
  %v1158 = vld [vmem:[%s1151 + $0x18] sm:$0xf]
  %v1159 = vld [vmem:[%s1151 + $0x1c] sm:$0xf]
  %v1160 = vld [vmem:[%s1151 + $0x20] sm:$0xf]
  %v1161 = vld [vmem:[%s1151 + $0x24] sm:$0xf]
  %v1162 = vld [vmem:[%s1151 + $0x28] sm:$0xf]
  %v1163 = vld [vmem:[%s1151 + $0x2c] sm:$0xf]
  %v1164 = vld [vmem:[%s1151 + $0x30] sm:$0xf]
  %v1165 = vld [vmem:[%s1151 + $0x34] sm:$0xf]
  %v1166 = vld [vmem:[%s1151 + $0x38] sm:$0xf]
  %v1167 = vld [vmem:[%s1151 + $0x3c] sm:$0xf]
  %v1168 = vld [vmem:[%s1151 + $0x40] sm:$0xf]
  %v1169 = vld [vmem:[%s1151 + $0x44] sm:$0xf]
  %v1170 = vld [vmem:[%s1151 + $0x48] sm:$0xf]
  %v1171 = vld [vmem:[%s1151 + $0x4c] sm:$0xf]
  %v1172 = vld [vmem:[%s1151 + $0x50] sm:$0xf]
  %v1173 = vld [vmem:[%s1151 + $0x54] sm:$0xf]
  %v1174 = vld [vmem:[%s1151 + $0x58] sm:$0xf]
  %v1175 = vld [vmem:[%s1151 + $0x5c] sm:$0xf]
  %v1176 = vld [vmem:[%s1151 + $0x60] sm:$0xf]
  %v1177 = vld [vmem:[%s1151 + $0x64] sm:$0xf]
  %v1178 = vld [vmem:[%s1151 + $0x68] sm:$0xf]
  %v1179 = vld [vmem:[%s1151 + $0x6c] sm:$0xf]
  %v1180 = vld [vmem:[%s1151 + $0x70] sm:$0xf]
  %v1181 = vld [vmem:[%s1151 + $0x74] sm:$0xf]
  %v1182 = vld [vmem:[%s1151 + $0x78] sm:$0xf]
  %v1183 = vld [vmem:[%s1151 + $0x7c] sm:$0xf]
  %v1184 = vld [vmem:[%s1151 + $0x80] sm:$0xf]
  %v1185 = vld [vmem:[%s1151 + $0x84] sm:$0xf]
  %v1186 = vld [vmem:[%s1151 + $0x88] sm:$0xf]
  %v1187 = vld [vmem:[%s1151 + $0x8c] sm:$0xf]
  %v1188 = vld [vmem:[%s1151 + $0x90] sm:$0xf]
  %v1189 = vld [vmem:[%s1151 + $0x94] sm:$0xf]
  %v1190 = vld [vmem:[%s1151 + $0x98] sm:$0xf]
  %v1191 = vld [vmem:[%s1151 + $0x9c] sm:$0xf]
  %v1192 = vld [vmem:[%s1151 + $0xa0] sm:$0xf]
  %v1193 = vld [vmem:[%s1151 + $0xa4] sm:$0xf]
  %v1194 = vld [vmem:[%s1151 + $0xa8] sm:$0xf]
  %v1195 = vld [vmem:[%s1151 + $0xac] sm:$0xf]
  %v1196 = vld [vmem:[%s1151 + $0xb0] sm:$0xf]
  %v1197 = vld [vmem:[%s1151 + $0xb4] sm:$0xf]
  %v1198 = vld [vmem:[%s1151 + $0xb8] sm:$0xf]
  %v1199 = vld [vmem:[%s1151 + $0xbc] sm:$0xf]
  %v1200 = vld [vmem:[%s1151 + $0xc0] sm:$0xf]
  %v1250 = vunpack.c.l.b16 %v1152
  %v1251 = vunpack.c.l.b16 %v1153
  %v1252 = vunpack.c.l.b16 %v1154
  %v1253 = vunpack.c.l.b16 %v1155
  %v1254 = vunpack.c.l.b16 %v1156
  %v1255 = vunpack.c.l.b16 %v1157
  %v1256 = vunpack.c.l.b16 %v1158
  %v1257 = vunpack.c.l.b16 %v1159
  %v1258 = vunpack.c.l.b16 %v1160
  %v1259 = vunpack.c.l.b16 %v1161
  %v1260 = vunpack.c.l.b16 %v1162
  %v1261 = vunpack.c.l.b16 %v1163
  %v1262 = vunpack.c.l.b16 %v1164
  %v1263 = vunpack.c.l.b16 %v1165
  %v1264 = vunpack.c.l.b16 %v1166
  %v1265 = vunpack.c.l.b16 %v1167
  %v1266 = vunpack.c.l.b16 %v1168
  %v1267 = vunpack.c.l.b16 %v1169
  %v1268 = vunpack.c.l.b16 %v1170
  %v1269 = vunpack.c.l.b16 %v1171
  %v1270 = vunpack.c.l.b16 %v1172
  %v1271 = vunpack.c.l.b16 %v1173
  %v1272 = vunpack.c.l.b16 %v1174
  %v1273 = vunpack.c.l.b16 %v1175
  %v1274 = vunpack.c.l.b16 %v1176
  %v1275 = vunpack.c.l.b16 %v1177
  %v1276 = vunpack.c.l.b16 %v1178
  %v1277 = vunpack.c.l.b16 %v1179
  %v1278 = vunpack.c.l.b16 %v1180
  %v1279 = vunpack.c.l.b16 %v1181
  %v1280 = vunpack.c.l.b16 %v1182
  %v1281 = vunpack.c.l.b16 %v1183
  %v1282 = vunpack.c.l.b16 %v1184
  %v1283 = vunpack.c.l.b16 %v1185
  %v1284 = vunpack.c.l.b16 %v1186
  %v1285 = vunpack.c.l.b16 %v1187
  %v1286 = vunpack.c.l.b16 %v1188
  %v1287 = vunpack.c.l.b16 %v1189
  %v1288 = vunpack.c.l.b16 %v1190
  %v1289 = vunpack.c.l.b16 %v1191
  %v1290 = vunpack.c.l.b16 %v1192
  %v1291 = vunpack.c.l.b16 %v1193
  %v1292 = vunpack.c.l.b16 %v1194
  %v1293 = vunpack.c.l.b16 %v1195
  %v1294 = vunpack.c.l.b16 %v1196
  %v1295 = vunpack.c.l.b16 %v1197
  %v1296 = vunpack.c.l.b16 %v1198
  %v1297 = vunpack.c.l.b16 %v1199
  %v1298 = vunpack.c.l.b16 %v1200
  %v1299 = vpack.c.b16 %v1251, %v1250
  %v1300 = vpack.c.b16 %v1253, %v1252
  %v1301 = vpack.c.b16 %v1255, %v1254
  %v1302 = vpack.c.b16 %v1257, %v1256
  %v1303 = vpack.c.b16 %v1259, %v1258
  %v1304 = vpack.c.b16 %v1261, %v1260
  %v1305 = vpack.c.b16 %v1263, %v1262
  %v1306 = vpack.c.b16 %v1265, %v1264
  %v1307 = vpack.c.b16 %v1267, %v1266
  %v1308 = vpack.c.b16 %v1269, %v1268
  %v1309 = vpack.c.b16 %v1271, %v1270
  %v1310 = vpack.c.b16 %v1273, %v1272
  %v1311 = vpack.c.b16 %v1275, %v1274
  %v1312 = vpack.c.b16 %v1277, %v1276
  %v1313 = vpack.c.b16 %v1279, %v1278
  %v1314 = vpack.c.b16 %v1281, %v1280
  %v1315 = vpack.c.b16 %v1283, %v1282
  %v1316 = vpack.c.b16 %v1285, %v1284
  %v1317 = vpack.c.b16 %v1287, %v1286
  %v1318 = vpack.c.b16 %v1289, %v1288
  %v1319 = vpack.c.b16 %v1291, %v1290
  %v1320 = vpack.c.b16 %v1293, %v1292
  %v1321 = vpack.c.b16 %v1295, %v1294
  %v1322 = vpack.c.b16 %v1297, %v1296
  %v1323 = vpack.c.b16 %v1298, %v1298
  %v1325 = vsel %vm209, %v1299, 0
  %v1328 = vsel %vm209, %v1300, 0
  %v1331 = vsel %vm209, %v1301, 0
  %v1334 = vsel %vm209, %v1302, 0
  %v1337 = vsel %vm209, %v1303, 0
  %v1340 = vsel %vm209, %v1304, 0
  %v1343 = vsel %vm209, %v1305, 0
  %v1346 = vsel %vm209, %v1306, 0
  %v1349 = vsel %vm209, %v1307, 0
  %v1352 = vsel %vm209, %v1308, 0
  %v1355 = vsel %vm209, %v1309, 0
  %v1358 = vsel %vm209, %v1310, 0
  %v1361 = vsel %vm209, %v1311, 0
  %v1364 = vsel %vm209, %v1312, 0
  %v1367 = vsel %vm209, %v1313, 0
  %v1370 = vsel %vm209, %v1314, 0
  %v1373 = vsel %vm209, %v1315, 0
  %v1376 = vsel %vm209, %v1316, 0
  %v1379 = vsel %vm209, %v1317, 0
  %v1382 = vsel %vm209, %v1318, 0
  %v1385 = vsel %vm209, %v1319, 0
  %v1388 = vsel %vm209, %v1320, 0
  %v1391 = vsel %vm209, %v1321, 0
  %v1394 = vsel %vm209, %v1322, 0
  %v1397 = vsel %vm209, %v1323, 0
  %1399 = vmatprep.subr.bf16.mxu0 0
  %1400 = vmatpush1.bf16.msra.mxu0 0
  %1401 = vmatprep.subr.bf16.mxu0 0
  %1402 = vmatpush1.bf16.msra.mxu0 0
  %1403 = vmatprep.subr.bf16.mxu0 0
  %1404 = vmatpush1.bf16.msra.mxu0 0
  %1405 = vmatprep.subr.bf16.mxu0 0
  %1406 = vmatpush1.bf16.msra.mxu0 0
  %1407 = vmatprep.subr.bf16.mxu0 0
  %1408 = vmatpush1.bf16.msra.mxu0 0
  %1409 = vmatprep.subr.bf16.mxu0 0
  %1410 = vmatpush1.bf16.msra.mxu0 0
  %1411 = vmatprep.subr.bf16.mxu0 0
  %1412 = vmatpush1.bf16.msra.mxu0 %v290
  %1413 = vmatprep.subr.bf16.mxu0 0
  %1414 = vmatpush1.bf16.msra.mxu0 %v206
  %1415 = vmatprep.subr.bf16.mxu0 0
  %1416 = vmatpush2.bf16.msra.mxu0 0
  %1417 = vmatprep.subr.bf16.mxu0 0
  %1418 = vmatpush2.bf16.msra.mxu0 0
  %1419 = vmatprep.subr.bf16.mxu0 0
  %1420 = vmatpush2.bf16.msra.mxu0 0
  %1421 = vmatprep.subr.bf16.mxu0 0
  %1422 = vmatpush2.bf16.msra.mxu0 0
  %1423 = vmatprep.subr.bf16.mxu0 0
  %1424 = vmatpush2.bf16.msra.mxu0 0
  %1425 = vmatprep.subr.bf16.mxu0 0
  %1426 = vmatpush2.bf16.msra.mxu0 0
  %1427 = vmatprep.subr.bf16.mxu0 0
  %1428 = vmatpush2.bf16.msra.mxu0 0
  %1429 = vmatprep.subr.bf16.mxu0 0
  %1430 = vmatpush2.bf16.msra.mxu0 0
  %1431 = vmatprep.mubr.bf16.mxu0 0
  %1432 = vmatmul.mubr.bf16.gmra.mxu0 %v1325
  %v1433 = vpop.f32.mrf.mxu0
  %v1434 = vadd.f32 %v73, %v1433
  %v1435 = vpop.f32.mrf.mxu0
  %v1436 = vpop.f32.mrf.mxu0
  %v1437 = vadd.f32 %v73, %v1436
  %v1438 = vpop.f32.mrf.mxu0
  %1439 = vmatprep.mubr.bf16.mxu0 0
  %1440 = vmatmul.mubr.bf16.gmra.mxu0 %v1328
  %v1441 = vpop.f32.mrf.mxu0
  %v1442 = vadd.f32 %v73, %v1441
  %v1443 = vpop.f32.mrf.mxu0
  %v1444 = vpop.f32.mrf.mxu0
  %v1445 = vadd.f32 %v73, %v1444
  %v1446 = vpop.f32.mrf.mxu0
  %1447 = vmatprep.mubr.bf16.mxu0 0
  %1448 = vmatmul.mubr.bf16.gmra.mxu0 %v1331
  %v1449 = vpop.f32.mrf.mxu0
  %v1450 = vadd.f32 %v73, %v1449
  %v1451 = vpop.f32.mrf.mxu0
  %v1452 = vpop.f32.mrf.mxu0
  %v1453 = vadd.f32 %v73, %v1452
  %v1454 = vpop.f32.mrf.mxu0
  %1455 = vmatprep.mubr.bf16.mxu0 0
  %1456 = vmatmul.mubr.bf16.gmra.mxu0 %v1334
  %v1457 = vpop.f32.mrf.mxu0
  %v1458 = vadd.f32 %v73, %v1457
  %v1459 = vpop.f32.mrf.mxu0
  %v1460 = vpop.f32.mrf.mxu0
  %v1461 = vadd.f32 %v73, %v1460
  %v1462 = vpop.f32.mrf.mxu0
  %1463 = vmatprep.mubr.bf16.mxu0 0
  %1464 = vmatmul.mubr.bf16.gmra.mxu0 %v1337
  %v1465 = vpop.f32.mrf.mxu0
  %v1466 = vadd.f32 %v73, %v1465
  %v1467 = vpop.f32.mrf.mxu0
  %v1468 = vpop.f32.mrf.mxu0
  %v1469 = vadd.f32 %v73, %v1468
  %v1470 = vpop.f32.mrf.mxu0
  %1471 = vmatprep.mubr.bf16.mxu0 0
  %1472 = vmatmul.mubr.bf16.gmra.mxu0 %v1340
  %v1473 = vpop.f32.mrf.mxu0
  %v1474 = vadd.f32 %v73, %v1473
  %v1475 = vpop.f32.mrf.mxu0
  %v1476 = vpop.f32.mrf.mxu0
  %v1477 = vadd.f32 %v73, %v1476
  %v1478 = vpop.f32.mrf.mxu0
  %1479 = vmatprep.mubr.bf16.mxu0 0
  %1480 = vmatmul.mubr.bf16.gmra.mxu0 %v1343
  %v1481 = vpop.f32.mrf.mxu0
  %v1482 = vadd.f32 %v73, %v1481
  %v1483 = vpop.f32.mrf.mxu0
  %v1484 = vpop.f32.mrf.mxu0
  %v1485 = vadd.f32 %v73, %v1484
  %v1486 = vpop.f32.mrf.mxu0
  %1487 = vmatprep.mubr.bf16.mxu0 0
  %1488 = vmatmul.mubr.bf16.gmra.mxu0 %v1346
  %v1489 = vpop.f32.mrf.mxu0
  %v1490 = vadd.f32 %v73, %v1489
  %v1491 = vpop.f32.mrf.mxu0
  %v1492 = vpop.f32.mrf.mxu0
  %v1493 = vadd.f32 %v73, %v1492
  %v1494 = vpop.f32.mrf.mxu0
  %1495 = vmatprep.mubr.bf16.mxu0 0
  %1496 = vmatmul.mubr.bf16.gmra.mxu0 %v1349
  %v1497 = vpop.f32.mrf.mxu0
  %v1498 = vadd.f32 %v73, %v1497
  %v1499 = vpop.f32.mrf.mxu0
  %v1500 = vpop.f32.mrf.mxu0
  %v1501 = vadd.f32 %v73, %v1500
  %v1502 = vpop.f32.mrf.mxu0
  %1503 = vmatprep.mubr.bf16.mxu0 0
  %1504 = vmatmul.mubr.bf16.gmra.mxu0 %v1352
  %v1505 = vpop.f32.mrf.mxu0
  %v1506 = vadd.f32 %v73, %v1505
  %v1507 = vpop.f32.mrf.mxu0
  %v1508 = vpop.f32.mrf.mxu0
  %v1509 = vadd.f32 %v73, %v1508
  %v1510 = vpop.f32.mrf.mxu0
  %1511 = vmatprep.mubr.bf16.mxu0 0
  %1512 = vmatmul.mubr.bf16.gmra.mxu0 %v1355
  %v1513 = vpop.f32.mrf.mxu0
  %v1514 = vadd.f32 %v73, %v1513
  %v1515 = vpop.f32.mrf.mxu0
  %v1516 = vpop.f32.mrf.mxu0
  %v1517 = vadd.f32 %v73, %v1516
  %v1518 = vpop.f32.mrf.mxu0
  %1519 = vmatprep.mubr.bf16.mxu0 0
  %1520 = vmatmul.mubr.bf16.gmra.mxu0 %v1358
  %v1521 = vpop.f32.mrf.mxu0
  %v1522 = vadd.f32 %v73, %v1521
  %v1523 = vpop.f32.mrf.mxu0
  %v1524 = vpop.f32.mrf.mxu0
  %v1525 = vadd.f32 %v73, %v1524
  %v1526 = vpop.f32.mrf.mxu0
  %1527 = vmatprep.mubr.bf16.mxu0 0
  %1528 = vmatmul.mubr.bf16.gmra.mxu0 %v1361
  %v1529 = vpop.f32.mrf.mxu0
  %v1530 = vadd.f32 %v73, %v1529
  %v1531 = vpop.f32.mrf.mxu0
  %v1532 = vpop.f32.mrf.mxu0
  %v1533 = vadd.f32 %v73, %v1532
  %v1534 = vpop.f32.mrf.mxu0
  %1535 = vmatprep.mubr.bf16.mxu0 0
  %1536 = vmatmul.mubr.bf16.gmra.mxu0 %v1364
  %v1537 = vpop.f32.mrf.mxu0
  %v1538 = vadd.f32 %v73, %v1537
  %v1539 = vpop.f32.mrf.mxu0
  %v1540 = vpop.f32.mrf.mxu0
  %v1541 = vadd.f32 %v73, %v1540
  %v1542 = vpop.f32.mrf.mxu0
  %1543 = vmatprep.mubr.bf16.mxu0 0
  %1544 = vmatmul.mubr.bf16.gmra.mxu0 %v1367
  %v1545 = vpop.f32.mrf.mxu0
  %v1546 = vadd.f32 %v73, %v1545
  %v1547 = vpop.f32.mrf.mxu0
  %v1548 = vpop.f32.mrf.mxu0
  %v1549 = vadd.f32 %v73, %v1548
  %v1550 = vpop.f32.mrf.mxu0
  %1551 = vmatprep.mubr.bf16.mxu0 0
  %1552 = vmatmul.mubr.bf16.gmra.mxu0 %v1370
  %v1553 = vpop.f32.mrf.mxu0
  %v1554 = vadd.f32 %v73, %v1553
  %v1555 = vpop.f32.mrf.mxu0
  %v1556 = vpop.f32.mrf.mxu0
  %v1557 = vadd.f32 %v73, %v1556
  %v1558 = vpop.f32.mrf.mxu0
  %1559 = vmatprep.mubr.bf16.mxu0 0
  %1560 = vmatmul.mubr.bf16.gmra.mxu0 %v1373
  %v1561 = vpop.f32.mrf.mxu0
  %v1562 = vadd.f32 %v73, %v1561
  %v1563 = vpop.f32.mrf.mxu0
  %v1564 = vpop.f32.mrf.mxu0
  %v1565 = vadd.f32 %v73, %v1564
  %v1566 = vpop.f32.mrf.mxu0
  %1567 = vmatprep.mubr.bf16.mxu0 0
  %1568 = vmatmul.mubr.bf16.gmra.mxu0 %v1376
  %v1569 = vpop.f32.mrf.mxu0
  %v1570 = vadd.f32 %v73, %v1569
  %v1571 = vpop.f32.mrf.mxu0
  %v1572 = vpop.f32.mrf.mxu0
  %v1573 = vadd.f32 %v73, %v1572
  %v1574 = vpop.f32.mrf.mxu0
  %1575 = vmatprep.mubr.bf16.mxu0 0
  %1576 = vmatmul.mubr.bf16.gmra.mxu0 %v1379
  %v1577 = vpop.f32.mrf.mxu0
  %v1578 = vadd.f32 %v73, %v1577
  %v1579 = vpop.f32.mrf.mxu0
  %v1580 = vpop.f32.mrf.mxu0
  %v1581 = vadd.f32 %v73, %v1580
  %v1582 = vpop.f32.mrf.mxu0
  %1583 = vmatprep.mubr.bf16.mxu0 0
  %1584 = vmatmul.mubr.bf16.gmra.mxu0 %v1382
  %v1585 = vpop.f32.mrf.mxu0
  %v1586 = vadd.f32 %v73, %v1585
  %v1587 = vpop.f32.mrf.mxu0
  %v1588 = vpop.f32.mrf.mxu0
  %v1589 = vadd.f32 %v73, %v1588
  %v1590 = vpop.f32.mrf.mxu0
  %1591 = vmatprep.mubr.bf16.mxu0 0
  %1592 = vmatmul.mubr.bf16.gmra.mxu0 %v1385
  %v1593 = vpop.f32.mrf.mxu0
  %v1594 = vadd.f32 %v73, %v1593
  %v1595 = vpop.f32.mrf.mxu0
  %v1596 = vpop.f32.mrf.mxu0
  %v1597 = vadd.f32 %v73, %v1596
  %v1598 = vpop.f32.mrf.mxu0
  %1599 = vmatprep.mubr.bf16.mxu0 0
  %1600 = vmatmul.mubr.bf16.gmra.mxu0 %v1388
  %v1601 = vpop.f32.mrf.mxu0
  %v1602 = vadd.f32 %v73, %v1601
  %v1603 = vpop.f32.mrf.mxu0
  %v1604 = vpop.f32.mrf.mxu0
  %v1605 = vadd.f32 %v73, %v1604
  %v1606 = vpop.f32.mrf.mxu0
  %1607 = vmatprep.mubr.bf16.mxu0 0
  %1608 = vmatmul.mubr.bf16.gmra.mxu0 %v1391
  %v1609 = vpop.f32.mrf.mxu0
  %v1610 = vadd.f32 %v73, %v1609
  %v1611 = vpop.f32.mrf.mxu0
  %v1612 = vpop.f32.mrf.mxu0
  %v1613 = vadd.f32 %v73, %v1612
  %v1614 = vpop.f32.mrf.mxu0
  %1615 = vmatprep.mubr.bf16.mxu0 0
  %1616 = vmatmul.mubr.bf16.gmra.mxu0 %v1394
  %v1617 = vpop.f32.mrf.mxu0
  %v1618 = vadd.f32 %v73, %v1617
  %v1619 = vpop.f32.mrf.mxu0
  %v1620 = vpop.f32.mrf.mxu0
  %v1621 = vadd.f32 %v73, %v1620
  %v1622 = vpop.f32.mrf.mxu0
  %1623 = vmatprep.mubr.bf16.mxu0 0
  %1624 = vmatmul.mubr.bf16.gmra.mxu0 %v1397
  %v1625 = vpop.f32.mrf.mxu0
  %v1626 = vadd.f32 %v73, %v1625
  %v1627 = vpop.f32.mrf.mxu0
  %v1628 = vpop.f32.mrf.mxu0
  %v1629 = vpop.f32.mrf.mxu0
  %1630 = vdwg.mxu0
  %v1631 = vmax.f32 %v1434, 0.0
  %v1632 = vmax.f32 %v1437, 0.0
  %v1633 = vmax.f32 %v1442, 0.0
  %v1634 = vmax.f32 %v1445, 0.0
  %v1635 = vmax.f32 %v1450, 0.0
  %v1636 = vmax.f32 %v1453, 0.0
  %v1637 = vmax.f32 %v1458, 0.0
  %v1638 = vmax.f32 %v1461, 0.0
  %v1639 = vmax.f32 %v1466, 0.0
  %v1640 = vmax.f32 %v1469, 0.0
  %v1641 = vmax.f32 %v1474, 0.0
  %v1642 = vmax.f32 %v1477, 0.0
  %v1643 = vmax.f32 %v1482, 0.0
  %v1644 = vmax.f32 %v1485, 0.0
  %v1645 = vmax.f32 %v1490, 0.0
  %v1646 = vmax.f32 %v1493, 0.0
  %v1647 = vmax.f32 %v1498, 0.0
  %v1648 = vmax.f32 %v1501, 0.0
  %v1649 = vmax.f32 %v1506, 0.0
  %v1650 = vmax.f32 %v1509, 0.0
  %v1651 = vmax.f32 %v1514, 0.0
  %v1652 = vmax.f32 %v1517, 0.0
  %v1653 = vmax.f32 %v1522, 0.0
  %v1654 = vmax.f32 %v1525, 0.0
  %v1655 = vmax.f32 %v1530, 0.0
  %v1656 = vmax.f32 %v1533, 0.0
  %v1657 = vmax.f32 %v1538, 0.0
  %v1658 = vmax.f32 %v1541, 0.0
  %v1659 = vmax.f32 %v1546, 0.0
  %v1660 = vmax.f32 %v1549, 0.0
  %v1661 = vmax.f32 %v1554, 0.0
  %v1662 = vmax.f32 %v1557, 0.0
  %v1663 = vmax.f32 %v1562, 0.0
  %v1664 = vmax.f32 %v1565, 0.0
  %v1665 = vmax.f32 %v1570, 0.0
  %v1666 = vmax.f32 %v1573, 0.0
  %v1667 = vmax.f32 %v1578, 0.0
  %v1668 = vmax.f32 %v1581, 0.0
  %v1669 = vmax.f32 %v1586, 0.0
  %v1670 = vmax.f32 %v1589, 0.0
  %v1671 = vmax.f32 %v1594, 0.0
  %v1672 = vmax.f32 %v1597, 0.0
  %v1673 = vmax.f32 %v1602, 0.0
  %v1674 = vmax.f32 %v1605, 0.0
  %v1675 = vmax.f32 %v1610, 0.0
  %v1676 = vmax.f32 %v1613, 0.0
  %v1677 = vmax.f32 %v1618, 0.0
  %v1678 = vmax.f32 %v1621, 0.0
  %v1679 = vmax.f32 %v1626, 0.0
  %v1680 = vmax.f32 %v1102, %v1631
  %v1681 = vmax.f32 %v1103, %v1632
  %v1682 = vmax.f32 %v1104, %v1633
  %v1683 = vmax.f32 %v1105, %v1634
  %v1684 = vmax.f32 %v1106, %v1635
  %v1685 = vmax.f32 %v1107, %v1636
  %v1686 = vmax.f32 %v1108, %v1637
  %v1687 = vmax.f32 %v1109, %v1638
  %v1688 = vmax.f32 %v1110, %v1639
  %v1689 = vmax.f32 %v1111, %v1640
  %v1690 = vmax.f32 %v1112, %v1641
  %v1691 = vmax.f32 %v1113, %v1642
  %v1692 = vmax.f32 %v1114, %v1643
  %v1693 = vmax.f32 %v1115, %v1644
  %v1694 = vmax.f32 %v1116, %v1645
  %v1695 = vmax.f32 %v1117, %v1646
  %v1696 = vmax.f32 %v1118, %v1647
  %v1697 = vmax.f32 %v1119, %v1648
  %v1698 = vmax.f32 %v1120, %v1649
  %v1699 = vmax.f32 %v1121, %v1650
  %v1700 = vmax.f32 %v1122, %v1651
  %v1701 = vmax.f32 %v1123, %v1652
  %v1702 = vmax.f32 %v1124, %v1653
  %v1703 = vmax.f32 %v1125, %v1654
  %v1704 = vmax.f32 %v1126, %v1655
  %v1705 = vmax.f32 %v1127, %v1656
  %v1706 = vmax.f32 %v1128, %v1657
  %v1707 = vmax.f32 %v1129, %v1658
  %v1708 = vmax.f32 %v1130, %v1659
  %v1709 = vmax.f32 %v1131, %v1660
  %v1710 = vmax.f32 %v1132, %v1661
  %v1711 = vmax.f32 %v1133, %v1662
  %v1712 = vmax.f32 %v1134, %v1663
  %v1713 = vmax.f32 %v1135, %v1664
  %v1714 = vmax.f32 %v1136, %v1665
  %v1715 = vmax.f32 %v1137, %v1666
  %v1716 = vmax.f32 %v1138, %v1667
  %v1717 = vmax.f32 %v1139, %v1668
  %v1718 = vmax.f32 %v1140, %v1669
  %v1719 = vmax.f32 %v1141, %v1670
  %v1720 = vmax.f32 %v1142, %v1671
  %v1721 = vmax.f32 %v1143, %v1672
  %v1722 = vmax.f32 %v1144, %v1673
  %v1723 = vmax.f32 %v1145, %v1674
  %v1724 = vmax.f32 %v1146, %v1675
  %v1725 = vmax.f32 %v1147, %v1676
  %v1726 = vmax.f32 %v1148, %v1677
  %v1727 = vmax.f32 %v1149, %v1678
  %v1728 = vmax.f32 %v1150, %v1679
  %s1729 = scalar_lea.vmem %s0, 588
  %v1730 = vld [vmem:[%s1729] sm:$0xf]
  %v1731 = vld [vmem:[%s1729 + $0x4] sm:$0xf]
  %v1732 = vld [vmem:[%s1729 + $0x8] sm:$0xf]
  %v1733 = vld [vmem:[%s1729 + $0xc] sm:$0xf]
  %v1734 = vld [vmem:[%s1729 + $0x10] sm:$0xf]
  %v1735 = vld [vmem:[%s1729 + $0x14] sm:$0xf]
  %v1736 = vld [vmem:[%s1729 + $0x18] sm:$0xf]
  %v1737 = vld [vmem:[%s1729 + $0x1c] sm:$0xf]
  %v1738 = vld [vmem:[%s1729 + $0x20] sm:$0xf]
  %v1739 = vld [vmem:[%s1729 + $0x24] sm:$0xf]
  %v1740 = vld [vmem:[%s1729 + $0x28] sm:$0xf]
  %v1741 = vld [vmem:[%s1729 + $0x2c] sm:$0xf]
  %v1742 = vld [vmem:[%s1729 + $0x30] sm:$0xf]
  %v1743 = vld [vmem:[%s1729 + $0x34] sm:$0xf]
  %v1744 = vld [vmem:[%s1729 + $0x38] sm:$0xf]
  %v1745 = vld [vmem:[%s1729 + $0x3c] sm:$0xf]
  %v1746 = vld [vmem:[%s1729 + $0x40] sm:$0xf]
  %v1747 = vld [vmem:[%s1729 + $0x44] sm:$0xf]
  %v1748 = vld [vmem:[%s1729 + $0x48] sm:$0xf]
  %v1749 = vld [vmem:[%s1729 + $0x4c] sm:$0xf]
  %v1750 = vld [vmem:[%s1729 + $0x50] sm:$0xf]
  %v1751 = vld [vmem:[%s1729 + $0x54] sm:$0xf]
  %v1752 = vld [vmem:[%s1729 + $0x58] sm:$0xf]
  %v1753 = vld [vmem:[%s1729 + $0x5c] sm:$0xf]
  %v1754 = vld [vmem:[%s1729 + $0x60] sm:$0xf]
  %v1755 = vld [vmem:[%s1729 + $0x64] sm:$0xf]
  %v1756 = vld [vmem:[%s1729 + $0x68] sm:$0xf]
  %v1757 = vld [vmem:[%s1729 + $0x6c] sm:$0xf]
  %v1758 = vld [vmem:[%s1729 + $0x70] sm:$0xf]
  %v1759 = vld [vmem:[%s1729 + $0x74] sm:$0xf]
  %v1760 = vld [vmem:[%s1729 + $0x78] sm:$0xf]
  %v1761 = vld [vmem:[%s1729 + $0x7c] sm:$0xf]
  %v1762 = vld [vmem:[%s1729 + $0x80] sm:$0xf]
  %v1763 = vld [vmem:[%s1729 + $0x84] sm:$0xf]
  %v1764 = vld [vmem:[%s1729 + $0x88] sm:$0xf]
  %v1765 = vld [vmem:[%s1729 + $0x8c] sm:$0xf]
  %v1766 = vld [vmem:[%s1729 + $0x90] sm:$0xf]
  %v1767 = vld [vmem:[%s1729 + $0x94] sm:$0xf]
  %v1768 = vld [vmem:[%s1729 + $0x98] sm:$0xf]
  %v1769 = vld [vmem:[%s1729 + $0x9c] sm:$0xf]
  %v1770 = vld [vmem:[%s1729 + $0xa0] sm:$0xf]
  %v1771 = vld [vmem:[%s1729 + $0xa4] sm:$0xf]
  %v1772 = vld [vmem:[%s1729 + $0xa8] sm:$0xf]
  %v1773 = vld [vmem:[%s1729 + $0xac] sm:$0xf]
  %v1774 = vld [vmem:[%s1729 + $0xb0] sm:$0xf]
  %v1775 = vld [vmem:[%s1729 + $0xb4] sm:$0xf]
  %v1776 = vld [vmem:[%s1729 + $0xb8] sm:$0xf]
  %v1777 = vld [vmem:[%s1729 + $0xbc] sm:$0xf]
  %v1778 = vld [vmem:[%s1729 + $0xc0] sm:$0xf]
  %v1828 = vunpack.c.l.b16 %v1730
  %v1829 = vunpack.c.l.b16 %v1731
  %v1830 = vunpack.c.l.b16 %v1732
  %v1831 = vunpack.c.l.b16 %v1733
  %v1832 = vunpack.c.l.b16 %v1734
  %v1833 = vunpack.c.l.b16 %v1735
  %v1834 = vunpack.c.l.b16 %v1736
  %v1835 = vunpack.c.l.b16 %v1737
  %v1836 = vunpack.c.l.b16 %v1738
  %v1837 = vunpack.c.l.b16 %v1739
  %v1838 = vunpack.c.l.b16 %v1740
  %v1839 = vunpack.c.l.b16 %v1741
  %v1840 = vunpack.c.l.b16 %v1742
  %v1841 = vunpack.c.l.b16 %v1743
  %v1842 = vunpack.c.l.b16 %v1744
  %v1843 = vunpack.c.l.b16 %v1745
  %v1844 = vunpack.c.l.b16 %v1746
  %v1845 = vunpack.c.l.b16 %v1747
  %v1846 = vunpack.c.l.b16 %v1748
  %v1847 = vunpack.c.l.b16 %v1749
  %v1848 = vunpack.c.l.b16 %v1750
  %v1849 = vunpack.c.l.b16 %v1751
  %v1850 = vunpack.c.l.b16 %v1752
  %v1851 = vunpack.c.l.b16 %v1753
  %v1852 = vunpack.c.l.b16 %v1754
  %v1853 = vunpack.c.l.b16 %v1755
  %v1854 = vunpack.c.l.b16 %v1756
  %v1855 = vunpack.c.l.b16 %v1757
  %v1856 = vunpack.c.l.b16 %v1758
  %v1857 = vunpack.c.l.b16 %v1759
  %v1858 = vunpack.c.l.b16 %v1760
  %v1859 = vunpack.c.l.b16 %v1761
  %v1860 = vunpack.c.l.b16 %v1762
  %v1861 = vunpack.c.l.b16 %v1763
  %v1862 = vunpack.c.l.b16 %v1764
  %v1863 = vunpack.c.l.b16 %v1765
  %v1864 = vunpack.c.l.b16 %v1766
  %v1865 = vunpack.c.l.b16 %v1767
  %v1866 = vunpack.c.l.b16 %v1768
  %v1867 = vunpack.c.l.b16 %v1769
  %v1868 = vunpack.c.l.b16 %v1770
  %v1869 = vunpack.c.l.b16 %v1771
  %v1870 = vunpack.c.l.b16 %v1772
  %v1871 = vunpack.c.l.b16 %v1773
  %v1872 = vunpack.c.l.b16 %v1774
  %v1873 = vunpack.c.l.b16 %v1775
  %v1874 = vunpack.c.l.b16 %v1776
  %v1875 = vunpack.c.l.b16 %v1777
  %v1876 = vunpack.c.l.b16 %v1778
  %v1877 = vpack.c.b16 %v1829, %v1828
  %v1878 = vpack.c.b16 %v1831, %v1830
  %v1879 = vpack.c.b16 %v1833, %v1832
  %v1880 = vpack.c.b16 %v1835, %v1834
  %v1881 = vpack.c.b16 %v1837, %v1836
  %v1882 = vpack.c.b16 %v1839, %v1838
  %v1883 = vpack.c.b16 %v1841, %v1840
  %v1884 = vpack.c.b16 %v1843, %v1842
  %v1885 = vpack.c.b16 %v1845, %v1844
  %v1886 = vpack.c.b16 %v1847, %v1846
  %v1887 = vpack.c.b16 %v1849, %v1848
  %v1888 = vpack.c.b16 %v1851, %v1850
  %v1889 = vpack.c.b16 %v1853, %v1852
  %v1890 = vpack.c.b16 %v1855, %v1854
  %v1891 = vpack.c.b16 %v1857, %v1856
  %v1892 = vpack.c.b16 %v1859, %v1858
  %v1893 = vpack.c.b16 %v1861, %v1860
  %v1894 = vpack.c.b16 %v1863, %v1862
  %v1895 = vpack.c.b16 %v1865, %v1864
  %v1896 = vpack.c.b16 %v1867, %v1866
  %v1897 = vpack.c.b16 %v1869, %v1868
  %v1898 = vpack.c.b16 %v1871, %v1870
  %v1899 = vpack.c.b16 %v1873, %v1872
  %v1900 = vpack.c.b16 %v1875, %v1874
  %v1901 = vpack.c.b16 %v1876, %v1876
  %v1903 = vsel %vm209, %v1877, 0
  %v1906 = vsel %vm209, %v1878, 0
  %v1909 = vsel %vm209, %v1879, 0
  %v1912 = vsel %vm209, %v1880, 0
  %v1915 = vsel %vm209, %v1881, 0
  %v1918 = vsel %vm209, %v1882, 0
  %v1921 = vsel %vm209, %v1883, 0
  %v1924 = vsel %vm209, %v1884, 0
  %v1927 = vsel %vm209, %v1885, 0
  %v1930 = vsel %vm209, %v1886, 0
  %v1933 = vsel %vm209, %v1887, 0
  %v1936 = vsel %vm209, %v1888, 0
  %v1939 = vsel %vm209, %v1889, 0
  %v1942 = vsel %vm209, %v1890, 0
  %v1945 = vsel %vm209, %v1891, 0
  %v1948 = vsel %vm209, %v1892, 0
  %v1951 = vsel %vm209, %v1893, 0
  %v1954 = vsel %vm209, %v1894, 0
  %v1957 = vsel %vm209, %v1895, 0
  %v1960 = vsel %vm209, %v1896, 0
  %v1963 = vsel %vm209, %v1897, 0
  %v1966 = vsel %vm209, %v1898, 0
  %v1969 = vsel %vm209, %v1899, 0
  %v1972 = vsel %vm209, %v1900, 0
  %v1975 = vsel %vm209, %v1901, 0
  %1977 = vmatprep.subr.bf16.mxu0 0
  %1978 = vmatpush1.bf16.msra.mxu0 0
  %1979 = vmatprep.subr.bf16.mxu0 0
  %1980 = vmatpush1.bf16.msra.mxu0 0
  %1981 = vmatprep.subr.bf16.mxu0 0
  %1982 = vmatpush1.bf16.msra.mxu0 0
  %1983 = vmatprep.subr.bf16.mxu0 0
  %1984 = vmatpush1.bf16.msra.mxu0 0
  %1985 = vmatprep.subr.bf16.mxu0 0
  %1986 = vmatpush1.bf16.msra.mxu0 0
  %1987 = vmatprep.subr.bf16.mxu0 0
  %1988 = vmatpush1.bf16.msra.mxu0 0
  %1989 = vmatprep.subr.bf16.mxu0 0
  %1990 = vmatpush1.bf16.msra.mxu0 %v290
  %1991 = vmatprep.subr.bf16.mxu0 0
  %1992 = vmatpush1.bf16.msra.mxu0 %v206
  %1993 = vmatprep.subr.bf16.mxu0 0
  %1994 = vmatpush2.bf16.msra.mxu0 0
  %1995 = vmatprep.subr.bf16.mxu0 0
  %1996 = vmatpush2.bf16.msra.mxu0 0
  %1997 = vmatprep.subr.bf16.mxu0 0
  %1998 = vmatpush2.bf16.msra.mxu0 0
  %1999 = vmatprep.subr.bf16.mxu0 0
  %2000 = vmatpush2.bf16.msra.mxu0 0
  %2001 = vmatprep.subr.bf16.mxu0 0
  %2002 = vmatpush2.bf16.msra.mxu0 0
  %2003 = vmatprep.subr.bf16.mxu0 0
  %2004 = vmatpush2.bf16.msra.mxu0 0
  %2005 = vmatprep.subr.bf16.mxu0 0
  %2006 = vmatpush2.bf16.msra.mxu0 0
  %2007 = vmatprep.subr.bf16.mxu0 0
  %2008 = vmatpush2.bf16.msra.mxu0 0
  %2009 = vmatprep.mubr.bf16.mxu0 0
  %2010 = vmatmul.mubr.bf16.gmra.mxu0 %v1903
  %v2011 = vpop.f32.mrf.mxu0
  %v2012 = vadd.f32 %v73, %v2011
  %v2013 = vpop.f32.mrf.mxu0
  %v2014 = vpop.f32.mrf.mxu0
  %v2015 = vadd.f32 %v73, %v2014
  %v2016 = vpop.f32.mrf.mxu0
  %2017 = vmatprep.mubr.bf16.mxu0 0
  %2018 = vmatmul.mubr.bf16.gmra.mxu0 %v1906
  %v2019 = vpop.f32.mrf.mxu0
  %v2020 = vadd.f32 %v73, %v2019
  %v2021 = vpop.f32.mrf.mxu0
  %v2022 = vpop.f32.mrf.mxu0
  %v2023 = vadd.f32 %v73, %v2022
  %v2024 = vpop.f32.mrf.mxu0
  %2025 = vmatprep.mubr.bf16.mxu0 0
  %2026 = vmatmul.mubr.bf16.gmra.mxu0 %v1909
  %v2027 = vpop.f32.mrf.mxu0
  %v2028 = vadd.f32 %v73, %v2027
  %v2029 = vpop.f32.mrf.mxu0
  %v2030 = vpop.f32.mrf.mxu0
  %v2031 = vadd.f32 %v73, %v2030
  %v2032 = vpop.f32.mrf.mxu0
  %2033 = vmatprep.mubr.bf16.mxu0 0
  %2034 = vmatmul.mubr.bf16.gmra.mxu0 %v1912
  %v2035 = vpop.f32.mrf.mxu0
  %v2036 = vadd.f32 %v73, %v2035
  %v2037 = vpop.f32.mrf.mxu0
  %v2038 = vpop.f32.mrf.mxu0
  %v2039 = vadd.f32 %v73, %v2038
  %v2040 = vpop.f32.mrf.mxu0
  %2041 = vmatprep.mubr.bf16.mxu0 0
  %2042 = vmatmul.mubr.bf16.gmra.mxu0 %v1915
  %v2043 = vpop.f32.mrf.mxu0
  %v2044 = vadd.f32 %v73, %v2043
  %v2045 = vpop.f32.mrf.mxu0
  %v2046 = vpop.f32.mrf.mxu0
  %v2047 = vadd.f32 %v73, %v2046
  %v2048 = vpop.f32.mrf.mxu0
  %2049 = vmatprep.mubr.bf16.mxu0 0
  %2050 = vmatmul.mubr.bf16.gmra.mxu0 %v1918
  %v2051 = vpop.f32.mrf.mxu0
  %v2052 = vadd.f32 %v73, %v2051
  %v2053 = vpop.f32.mrf.mxu0
  %v2054 = vpop.f32.mrf.mxu0
  %v2055 = vadd.f32 %v73, %v2054
  %v2056 = vpop.f32.mrf.mxu0
  %2057 = vmatprep.mubr.bf16.mxu0 0
  %2058 = vmatmul.mubr.bf16.gmra.mxu0 %v1921
  %v2059 = vpop.f32.mrf.mxu0
  %v2060 = vadd.f32 %v73, %v2059
  %v2061 = vpop.f32.mrf.mxu0
  %v2062 = vpop.f32.mrf.mxu0
  %v2063 = vadd.f32 %v73, %v2062
  %v2064 = vpop.f32.mrf.mxu0
  %2065 = vmatprep.mubr.bf16.mxu0 0
  %2066 = vmatmul.mubr.bf16.gmra.mxu0 %v1924
  %v2067 = vpop.f32.mrf.mxu0
  %v2068 = vadd.f32 %v73, %v2067
  %v2069 = vpop.f32.mrf.mxu0
  %v2070 = vpop.f32.mrf.mxu0
  %v2071 = vadd.f32 %v73, %v2070
  %v2072 = vpop.f32.mrf.mxu0
  %2073 = vmatprep.mubr.bf16.mxu0 0
  %2074 = vmatmul.mubr.bf16.gmra.mxu0 %v1927
  %v2075 = vpop.f32.mrf.mxu0
  %v2076 = vadd.f32 %v73, %v2075
  %v2077 = vpop.f32.mrf.mxu0
  %v2078 = vpop.f32.mrf.mxu0
  %v2079 = vadd.f32 %v73, %v2078
  %v2080 = vpop.f32.mrf.mxu0
  %2081 = vmatprep.mubr.bf16.mxu0 0
  %2082 = vmatmul.mubr.bf16.gmra.mxu0 %v1930
  %v2083 = vpop.f32.mrf.mxu0
  %v2084 = vadd.f32 %v73, %v2083
  %v2085 = vpop.f32.mrf.mxu0
  %v2086 = vpop.f32.mrf.mxu0
  %v2087 = vadd.f32 %v73, %v2086
  %v2088 = vpop.f32.mrf.mxu0
  %2089 = vmatprep.mubr.bf16.mxu0 0
  %2090 = vmatmul.mubr.bf16.gmra.mxu0 %v1933
  %v2091 = vpop.f32.mrf.mxu0
  %v2092 = vadd.f32 %v73, %v2091
  %v2093 = vpop.f32.mrf.mxu0
  %v2094 = vpop.f32.mrf.mxu0
  %v2095 = vadd.f32 %v73, %v2094
  %v2096 = vpop.f32.mrf.mxu0
  %2097 = vmatprep.mubr.bf16.mxu0 0
  %2098 = vmatmul.mubr.bf16.gmra.mxu0 %v1936
  %v2099 = vpop.f32.mrf.mxu0
  %v2100 = vadd.f32 %v73, %v2099
  %v2101 = vpop.f32.mrf.mxu0
  %v2102 = vpop.f32.mrf.mxu0
  %v2103 = vadd.f32 %v73, %v2102
  %v2104 = vpop.f32.mrf.mxu0
  %2105 = vmatprep.mubr.bf16.mxu0 0
  %2106 = vmatmul.mubr.bf16.gmra.mxu0 %v1939
  %v2107 = vpop.f32.mrf.mxu0
  %v2108 = vadd.f32 %v73, %v2107
  %v2109 = vpop.f32.mrf.mxu0
  %v2110 = vpop.f32.mrf.mxu0
  %v2111 = vadd.f32 %v73, %v2110
  %v2112 = vpop.f32.mrf.mxu0
  %2113 = vmatprep.mubr.bf16.mxu0 0
  %2114 = vmatmul.mubr.bf16.gmra.mxu0 %v1942
  %v2115 = vpop.f32.mrf.mxu0
  %v2116 = vadd.f32 %v73, %v2115
  %v2117 = vpop.f32.mrf.mxu0
  %v2118 = vpop.f32.mrf.mxu0
  %v2119 = vadd.f32 %v73, %v2118
  %v2120 = vpop.f32.mrf.mxu0
  %2121 = vmatprep.mubr.bf16.mxu0 0
  %2122 = vmatmul.mubr.bf16.gmra.mxu0 %v1945
  %v2123 = vpop.f32.mrf.mxu0
  %v2124 = vadd.f32 %v73, %v2123
  %v2125 = vpop.f32.mrf.mxu0
  %v2126 = vpop.f32.mrf.mxu0
  %v2127 = vadd.f32 %v73, %v2126
  %v2128 = vpop.f32.mrf.mxu0
  %2129 = vmatprep.mubr.bf16.mxu0 0
  %2130 = vmatmul.mubr.bf16.gmra.mxu0 %v1948
  %v2131 = vpop.f32.mrf.mxu0
  %v2132 = vadd.f32 %v73, %v2131
  %v2133 = vpop.f32.mrf.mxu0
  %v2134 = vpop.f32.mrf.mxu0
  %v2135 = vadd.f32 %v73, %v2134
  %v2136 = vpop.f32.mrf.mxu0
  %2137 = vmatprep.mubr.bf16.mxu0 0
  %2138 = vmatmul.mubr.bf16.gmra.mxu0 %v1951
  %v2139 = vpop.f32.mrf.mxu0
  %v2140 = vadd.f32 %v73, %v2139
  %v2141 = vpop.f32.mrf.mxu0
  %v2142 = vpop.f32.mrf.mxu0
  %v2143 = vadd.f32 %v73, %v2142
  %v2144 = vpop.f32.mrf.mxu0
  %2145 = vmatprep.mubr.bf16.mxu0 0
  %2146 = vmatmul.mubr.bf16.gmra.mxu0 %v1954
  %v2147 = vpop.f32.mrf.mxu0
  %v2148 = vadd.f32 %v73, %v2147
  %v2149 = vpop.f32.mrf.mxu0
  %v2150 = vpop.f32.mrf.mxu0
  %v2151 = vadd.f32 %v73, %v2150
  %v2152 = vpop.f32.mrf.mxu0
  %2153 = vmatprep.mubr.bf16.mxu0 0
  %2154 = vmatmul.mubr.bf16.gmra.mxu0 %v1957
  %v2155 = vpop.f32.mrf.mxu0
  %v2156 = vadd.f32 %v73, %v2155
  %v2157 = vpop.f32.mrf.mxu0
  %v2158 = vpop.f32.mrf.mxu0
  %v2159 = vadd.f32 %v73, %v2158
  %v2160 = vpop.f32.mrf.mxu0
  %2161 = vmatprep.mubr.bf16.mxu0 0
  %2162 = vmatmul.mubr.bf16.gmra.mxu0 %v1960
  %v2163 = vpop.f32.mrf.mxu0
  %v2164 = vadd.f32 %v73, %v2163
  %v2165 = vpop.f32.mrf.mxu0
  %v2166 = vpop.f32.mrf.mxu0
  %v2167 = vadd.f32 %v73, %v2166
  %v2168 = vpop.f32.mrf.mxu0
  %2169 = vmatprep.mubr.bf16.mxu0 0
  %2170 = vmatmul.mubr.bf16.gmra.mxu0 %v1963
  %v2171 = vpop.f32.mrf.mxu0
  %v2172 = vadd.f32 %v73, %v2171
  %v2173 = vpop.f32.mrf.mxu0
  %v2174 = vpop.f32.mrf.mxu0
  %v2175 = vadd.f32 %v73, %v2174
  %v2176 = vpop.f32.mrf.mxu0
  %2177 = vmatprep.mubr.bf16.mxu0 0
  %2178 = vmatmul.mubr.bf16.gmra.mxu0 %v1966
  %v2179 = vpop.f32.mrf.mxu0
  %v2180 = vadd.f32 %v73, %v2179
  %v2181 = vpop.f32.mrf.mxu0
  %v2182 = vpop.f32.mrf.mxu0
  %v2183 = vadd.f32 %v73, %v2182
  %v2184 = vpop.f32.mrf.mxu0
  %2185 = vmatprep.mubr.bf16.mxu0 0
  %2186 = vmatmul.mubr.bf16.gmra.mxu0 %v1969
  %v2187 = vpop.f32.mrf.mxu0
  %v2188 = vadd.f32 %v73, %v2187
  %v2189 = vpop.f32.mrf.mxu0
  %v2190 = vpop.f32.mrf.mxu0
  %v2191 = vadd.f32 %v73, %v2190
  %v2192 = vpop.f32.mrf.mxu0
  %2193 = vmatprep.mubr.bf16.mxu0 0
  %2194 = vmatmul.mubr.bf16.gmra.mxu0 %v1972
  %v2195 = vpop.f32.mrf.mxu0
  %v2196 = vadd.f32 %v73, %v2195
  %v2197 = vpop.f32.mrf.mxu0
  %v2198 = vpop.f32.mrf.mxu0
  %v2199 = vadd.f32 %v73, %v2198
  %v2200 = vpop.f32.mrf.mxu0
  %2201 = vmatprep.mubr.bf16.mxu0 0
  %2202 = vmatmul.mubr.bf16.gmra.mxu0 %v1975
  %v2203 = vpop.f32.mrf.mxu0
  %v2204 = vadd.f32 %v73, %v2203
  %v2205 = vpop.f32.mrf.mxu0
  %v2206 = vpop.f32.mrf.mxu0
  %v2207 = vpop.f32.mrf.mxu0
  %2208 = vdwg.mxu0
  %v2209 = vmax.f32 %v2012, 0.0
  %v2210 = vmax.f32 %v2015, 0.0
  %v2211 = vmax.f32 %v2020, 0.0
  %v2212 = vmax.f32 %v2023, 0.0
  %v2213 = vmax.f32 %v2028, 0.0
  %v2214 = vmax.f32 %v2031, 0.0
  %v2215 = vmax.f32 %v2036, 0.0
  %v2216 = vmax.f32 %v2039, 0.0
  %v2217 = vmax.f32 %v2044, 0.0
  %v2218 = vmax.f32 %v2047, 0.0
  %v2219 = vmax.f32 %v2052, 0.0
  %v2220 = vmax.f32 %v2055, 0.0
  %v2221 = vmax.f32 %v2060, 0.0
  %v2222 = vmax.f32 %v2063, 0.0
  %v2223 = vmax.f32 %v2068, 0.0
  %v2224 = vmax.f32 %v2071, 0.0
  %v2225 = vmax.f32 %v2076, 0.0
  %v2226 = vmax.f32 %v2079, 0.0
  %v2227 = vmax.f32 %v2084, 0.0
  %v2228 = vmax.f32 %v2087, 0.0
  %v2229 = vmax.f32 %v2092, 0.0
  %v2230 = vmax.f32 %v2095, 0.0
  %v2231 = vmax.f32 %v2100, 0.0
  %v2232 = vmax.f32 %v2103, 0.0
  %v2233 = vmax.f32 %v2108, 0.0
  %v2234 = vmax.f32 %v2111, 0.0
  %v2235 = vmax.f32 %v2116, 0.0
  %v2236 = vmax.f32 %v2119, 0.0
  %v2237 = vmax.f32 %v2124, 0.0
  %v2238 = vmax.f32 %v2127, 0.0
  %v2239 = vmax.f32 %v2132, 0.0
  %v2240 = vmax.f32 %v2135, 0.0
  %v2241 = vmax.f32 %v2140, 0.0
  %v2242 = vmax.f32 %v2143, 0.0
  %v2243 = vmax.f32 %v2148, 0.0
  %v2244 = vmax.f32 %v2151, 0.0
  %v2245 = vmax.f32 %v2156, 0.0
  %v2246 = vmax.f32 %v2159, 0.0
  %v2247 = vmax.f32 %v2164, 0.0
  %v2248 = vmax.f32 %v2167, 0.0
  %v2249 = vmax.f32 %v2172, 0.0
  %v2250 = vmax.f32 %v2175, 0.0
  %v2251 = vmax.f32 %v2180, 0.0
  %v2252 = vmax.f32 %v2183, 0.0
  %v2253 = vmax.f32 %v2188, 0.0
  %v2254 = vmax.f32 %v2191, 0.0
  %v2255 = vmax.f32 %v2196, 0.0
  %v2256 = vmax.f32 %v2199, 0.0
  %v2257 = vmax.f32 %v2204, 0.0
  %v2258 = vmax.f32 %v1680, %v2209
  %v2259 = vmax.f32 %v1681, %v2210
  %v2260 = vmax.f32 %v1682, %v2211
  %v2261 = vmax.f32 %v1683, %v2212
  %v2262 = vmax.f32 %v1684, %v2213
  %v2263 = vmax.f32 %v1685, %v2214
  %v2264 = vmax.f32 %v1686, %v2215
  %v2265 = vmax.f32 %v1687, %v2216
  %v2266 = vmax.f32 %v1688, %v2217
  %v2267 = vmax.f32 %v1689, %v2218
  %v2268 = vmax.f32 %v1690, %v2219
  %v2269 = vmax.f32 %v1691, %v2220
  %v2270 = vmax.f32 %v1692, %v2221
  %v2271 = vmax.f32 %v1693, %v2222
  %v2272 = vmax.f32 %v1694, %v2223
  %v2273 = vmax.f32 %v1695, %v2224
  %v2274 = vmax.f32 %v1696, %v2225
  %v2275 = vmax.f32 %v1697, %v2226
  %v2276 = vmax.f32 %v1698, %v2227
  %v2277 = vmax.f32 %v1699, %v2228
  %v2278 = vmax.f32 %v1700, %v2229
  %v2279 = vmax.f32 %v1701, %v2230
  %v2280 = vmax.f32 %v1702, %v2231
  %v2281 = vmax.f32 %v1703, %v2232
  %v2282 = vmax.f32 %v1704, %v2233
  %v2283 = vmax.f32 %v1705, %v2234
  %v2284 = vmax.f32 %v1706, %v2235
  %v2285 = vmax.f32 %v1707, %v2236
  %v2286 = vmax.f32 %v1708, %v2237
  %v2287 = vmax.f32 %v1709, %v2238
  %v2288 = vmax.f32 %v1710, %v2239
  %v2289 = vmax.f32 %v1711, %v2240
  %v2290 = vmax.f32 %v1712, %v2241
  %v2291 = vmax.f32 %v1713, %v2242
  %v2292 = vmax.f32 %v1714, %v2243
  %v2293 = vmax.f32 %v1715, %v2244
  %v2294 = vmax.f32 %v1716, %v2245
  %v2295 = vmax.f32 %v1717, %v2246
  %v2296 = vmax.f32 %v1718, %v2247
  %v2297 = vmax.f32 %v1719, %v2248
  %v2298 = vmax.f32 %v1720, %v2249
  %v2299 = vmax.f32 %v1721, %v2250
  %v2300 = vmax.f32 %v1722, %v2251
  %v2301 = vmax.f32 %v1723, %v2252
  %v2302 = vmax.f32 %v1724, %v2253
  %v2303 = vmax.f32 %v1725, %v2254
  %v2304 = vmax.f32 %v1726, %v2255
  %v2305 = vmax.f32 %v1727, %v2256
  %v2306 = vmax.f32 %v1728, %v2257
  %vm2307 = vcmask 48128
  %2308 = vst.msk [vmem:[%s3] sm:$0xff] %vm2307, %v2258
  %2309 = vst.msk [vmem:[%s3 + $0x8] sm:$0xff] %vm2307, %v2259
  %2310 = vst.msk [vmem:[%s3 + $0x10] sm:$0xff] %vm2307, %v2260
  %2311 = vst.msk [vmem:[%s3 + $0x18] sm:$0xff] %vm2307, %v2261
  %2312 = vst.msk [vmem:[%s3 + $0x20] sm:$0xff] %vm2307, %v2262
  %2313 = vst.msk [vmem:[%s3 + $0x28] sm:$0xff] %vm2307, %v2263
  %2314 = vst.msk [vmem:[%s3 + $0x30] sm:$0xff] %vm2307, %v2264
  %2315 = vst.msk [vmem:[%s3 + $0x38] sm:$0xff] %vm2307, %v2265
  %2316 = vst.msk [vmem:[%s3 + $0x40] sm:$0xff] %vm2307, %v2266
  %2317 = vst.msk [vmem:[%s3 + $0x48] sm:$0xff] %vm2307, %v2267
  %2318 = vst.msk [vmem:[%s3 + $0x50] sm:$0xff] %vm2307, %v2268
  %2319 = vst.msk [vmem:[%s3 + $0x58] sm:$0xff] %vm2307, %v2269
  %2320 = vst.msk [vmem:[%s3 + $0x60] sm:$0xff] %vm2307, %v2270
  %2321 = vst.msk [vmem:[%s3 + $0x68] sm:$0xff] %vm2307, %v2271
  %2322 = vst.msk [vmem:[%s3 + $0x70] sm:$0xff] %vm2307, %v2272
  %2323 = vst.msk [vmem:[%s3 + $0x78] sm:$0xff] %vm2307, %v2273
  %2324 = vst.msk [vmem:[%s3 + $0x80] sm:$0xff] %vm2307, %v2274
  %2325 = vst.msk [vmem:[%s3 + $0x88] sm:$0xff] %vm2307, %v2275
  %2326 = vst.msk [vmem:[%s3 + $0x90] sm:$0xff] %vm2307, %v2276
  %2327 = vst.msk [vmem:[%s3 + $0x98] sm:$0xff] %vm2307, %v2277
  %2328 = vst.msk [vmem:[%s3 + $0xa0] sm:$0xff] %vm2307, %v2278
  %2329 = vst.msk [vmem:[%s3 + $0xa8] sm:$0xff] %vm2307, %v2279
  %2330 = vst.msk [vmem:[%s3 + $0xb0] sm:$0xff] %vm2307, %v2280
  %2331 = vst.msk [vmem:[%s3 + $0xb8] sm:$0xff] %vm2307, %v2281
  %2332 = vst.msk [vmem:[%s3 + $0xc0] sm:$0xff] %vm2307, %v2282
  %2333 = vst.msk [vmem:[%s3 + $0xc8] sm:$0xff] %vm2307, %v2283
  %2334 = vst.msk [vmem:[%s3 + $0xd0] sm:$0xff] %vm2307, %v2284
  %2335 = vst.msk [vmem:[%s3 + $0xd8] sm:$0xff] %vm2307, %v2285
  %2336 = vst.msk [vmem:[%s3 + $0xe0] sm:$0xff] %vm2307, %v2286
  %2337 = vst.msk [vmem:[%s3 + $0xe8] sm:$0xff] %vm2307, %v2287
  %2338 = vst.msk [vmem:[%s3 + $0xf0] sm:$0xff] %vm2307, %v2288
  %2339 = vst.msk [vmem:[%s3 + $0xf8] sm:$0xff] %vm2307, %v2289
  %2340 = vst.msk [vmem:[%s3 + $0x100] sm:$0xff] %vm2307, %v2290
  %2341 = vst.msk [vmem:[%s3 + $0x108] sm:$0xff] %vm2307, %v2291
  %2342 = vst.msk [vmem:[%s3 + $0x110] sm:$0xff] %vm2307, %v2292
  %2343 = vst.msk [vmem:[%s3 + $0x118] sm:$0xff] %vm2307, %v2293
  %2344 = vst.msk [vmem:[%s3 + $0x120] sm:$0xff] %vm2307, %v2294
  %2345 = vst.msk [vmem:[%s3 + $0x128] sm:$0xff] %vm2307, %v2295
  %2346 = vst.msk [vmem:[%s3 + $0x130] sm:$0xff] %vm2307, %v2296
  %2347 = vst.msk [vmem:[%s3 + $0x138] sm:$0xff] %vm2307, %v2297
  %2348 = vst.msk [vmem:[%s3 + $0x140] sm:$0xff] %vm2307, %v2298
  %2349 = vst.msk [vmem:[%s3 + $0x148] sm:$0xff] %vm2307, %v2299
  %2350 = vst.msk [vmem:[%s3 + $0x150] sm:$0xff] %vm2307, %v2300
  %2351 = vst.msk [vmem:[%s3 + $0x158] sm:$0xff] %vm2307, %v2301
  %2352 = vst.msk [vmem:[%s3 + $0x160] sm:$0xff] %vm2307, %v2302
  %2353 = vst.msk [vmem:[%s3 + $0x168] sm:$0xff] %vm2307, %v2303
  %2354 = vst.msk [vmem:[%s3 + $0x170] sm:$0xff] %vm2307, %v2304
  %2355 = vst.msk [vmem:[%s3 + $0x178] sm:$0xff] %vm2307, %v2305
  %2356 = vst.msk [vmem:[%s3 + $0x180] sm:$0xff] %vm2307, %v2306
  // Predicated region
  $region14: #{mnist_toy_forward.2} parent=0 // pred_check
    _
  $region15: #{mnist_toy_forward.2} parent=0 // pred_check_branch
    %2358 = sbr.rel (0) target = $region17
  $region16: #{mnist_toy_forward.2} parent=0 // pred_region
    _
  $region17: #{mnist_toy_forward.2} parent=0 // pred_fallthru
    _
  // Predicated region
  $region18: #{mnist_toy_forward.2} parent=0 // pred_check
    _
  $region19: #{mnist_toy_forward.2} parent=0 // pred_check_branch
    %2360 = sbr.rel (0) target = $region21
  $region20: #{mnist_toy_forward.2} parent=0 // pred_region
    _
  $region21: #{mnist_toy_forward.2} parent=0 // pred_fallthru
    _

// kernel: mnist_toy_forward.3
$region0: #{mnist_toy_forward.3}
  #allocation0 [shape = 'u32[]', space=smem, size = 0x4, offset = 0x4, fixed_abs, tag = 'smem constant byte address 0x4 - core index']
  #allocation1 [shape = 'u32[144,128]{1,0:T(1,128)}', space=vmem, size = 0x12000, scoped, tag = 'internal scratch']
  %s0 = inlined_call_operand.vmem [shape: bf16[4,50,150], index: 0, kind: input, shape index: {}]
  %s1 = inlined_call_operand.vmem [shape: bf16[150,16], index: 1, kind: input, shape index: {}]
  %s2 = inlined_call_operand.vmem [shape: f32[1,16], index: 2, kind: input, shape index: {}]
  %s3 = inlined_call_operand.vmem [shape: f32[1,16], index: 3, kind: input, shape index: {}]
  %s4 = inlined_call_operand.vmem [shape: f32[1,16], index: 4, kind: input, shape index: {}]
  %s5 = inlined_call_operand.vmem [shape: f32[25,16,120], index: 5, kind: input, shape index: {}]
  %s6 = inlined_call_operand.vmem [shape: f32[1,120], index: 6, kind: input, shape index: {}]
  %s7 = inlined_call_operand.vmem [shape: f32[120,84], index: 7, kind: input, shape index: {}]
  %s8 = inlined_call_operand.vmem [shape: f32[1,84], index: 8, kind: input, shape index: {}]
  %s9 = inlined_call_operand.vmem [shape: f32[84,10], index: 9, kind: input, shape index: {}]
  %s10 = inlined_call_operand.vmem [shape: f32[1,10], index: 10, kind: input, shape index: {}]
  %s11 = inlined_call_operand.hbm [shape: f32[2,10], index: 11, kind: output, shape index: {}]
  %s12 = sld [smem:[#allocation0]]
  $region54: #{mnist_toy_forward.3} parent=0
    _
  %s14 = ssub.s32 1, %s12
  %s15 = scalar_select 0, %s14, %s12
  $region1: #{mnist_toy_forward.3} parent=0
    #allocation2 [shape = 'u8[1024]{0}', space=vmem, size = 0x400, scoped, tag = 'output window, operand 0, single buffered']
    #allocation3 [shape = 's32[1]{0}', space=sflag, size = 0x4, scoped, tag = 'scoped memory for mnist_toy_forward.3']
    %16 = vsyncpa [#allocation3], 0
    // Predicated region
    $region2: #{mnist_toy_forward.3} parent=1 // pred_check
      _
    $region3: #{mnist_toy_forward.3} parent=1 // pred_check_branch
      %18 = sbr.rel (0) target = $region5
    $region4: #{mnist_toy_forward.3} parent=1 // pred_region
      _
    $region5: #{mnist_toy_forward.3} parent=1 // pred_fallthru
      _
    // Predicated region
    $region6: #{mnist_toy_forward.3} parent=1 // pred_check
      _
    $region7: #{mnist_toy_forward.3} parent=1 // pred_check_branch
      %20 = sbr.rel (0) target = $region9
    $region8: #{mnist_toy_forward.3} parent=1 // pred_region
      _
    $region9: #{mnist_toy_forward.3} parent=1 // pred_fallthru
      _
    // Predicated region
    $region10: #{mnist_toy_forward.3} parent=1 // pred_check
      _
    $region11: #{mnist_toy_forward.3} parent=1 // pred_check_branch
      %22 = sbr.rel (0) target = $region13
    $region12: #{mnist_toy_forward.3} parent=1 // pred_region
      _
    $region13: #{mnist_toy_forward.3} parent=1 // pred_fallthru
      _
    // Predicated region
    $region14: #{mnist_toy_forward.3} parent=1 // pred_check
      _
    $region15: #{mnist_toy_forward.3} parent=1 // pred_check_branch
      %24 = sbr.rel (0) target = $region17
    $region16: #{mnist_toy_forward.3} parent=1 // pred_region
      _
    $region17: #{mnist_toy_forward.3} parent=1 // pred_fallthru
      _
    // Predicated region
    $region18: #{mnist_toy_forward.3} parent=1 // pred_check
      _
    $region19: #{mnist_toy_forward.3} parent=1 // pred_check_branch
      %26 = sbr.rel (0) target = $region21
    $region20: #{mnist_toy_forward.3} parent=1 // pred_region
      _
    $region21: #{mnist_toy_forward.3} parent=1 // pred_fallthru
      _
    // Predicated region
    $region22: #{mnist_toy_forward.3} parent=1 // pred_check
      _
    $region23: #{mnist_toy_forward.3} parent=1 // pred_check_branch
      %28 = sbr.rel (0) target = $region25
    $region24: #{mnist_toy_forward.3} parent=1 // pred_region
      _
    $region25: #{mnist_toy_forward.3} parent=1 // pred_fallthru
      _
    // Predicated region
    $region26: #{mnist_toy_forward.3} parent=1 // pred_check
      _
    $region27: #{mnist_toy_forward.3} parent=1 // pred_check_branch
      %30 = sbr.rel (0) target = $region29
    $region28: #{mnist_toy_forward.3} parent=1 // pred_region
      _
    $region29: #{mnist_toy_forward.3} parent=1 // pred_fallthru
      _
    // Predicated region
    $region30: #{mnist_toy_forward.3} parent=1 // pred_check
      _
    $region31: #{mnist_toy_forward.3} parent=1 // pred_check_branch
      %32 = sbr.rel (0) target = $region33
    $region32: #{mnist_toy_forward.3} parent=1 // pred_region
      _
    $region33: #{mnist_toy_forward.3} parent=1 // pred_fallthru
      _
    // Predicated region
    $region34: #{mnist_toy_forward.3} parent=1 // pred_check
      _
    $region35: #{mnist_toy_forward.3} parent=1 // pred_check_branch
      %34 = sbr.rel (0) target = $region37
    $region36: #{mnist_toy_forward.3} parent=1 // pred_region
      _
    $region37: #{mnist_toy_forward.3} parent=1 // pred_fallthru
      _
    // Predicated region
    $region38: #{mnist_toy_forward.3} parent=1 // pred_check
      _
    $region39: #{mnist_toy_forward.3} parent=1 // pred_check_branch
      %36 = sbr.rel (0) target = $region41
    $region40: #{mnist_toy_forward.3} parent=1 // pred_region
      _
    $region41: #{mnist_toy_forward.3} parent=1 // pred_fallthru
      _
    // Predicated region
    $region42: #{mnist_toy_forward.3} parent=1 // pred_check
      _
    $region43: #{mnist_toy_forward.3} parent=1 // pred_check_branch
      %38 = sbr.rel (0) target = $region45
    $region44: #{mnist_toy_forward.3} parent=1 // pred_region
      _
    $region45: #{mnist_toy_forward.3} parent=1 // pred_fallthru
      _
    %v40 = vld [vmem:[%s1] sm:$0xf]
    %v41 = vld [vmem:[%s1 + $0x4] sm:$0xf]
    %v42 = vld [vmem:[%s1 + $0x8] sm:$0xf]
    %v43 = vld [vmem:[%s1 + $0xc] sm:$0xf]
    %v44 = vld [vmem:[%s1 + $0x10] sm:$0xf]
    %v45 = vld [vmem:[%s1 + $0x14] sm:$0xf]
    %v46 = vld [vmem:[%s1 + $0x18] sm:$0xf]
    %v47 = vld [vmem:[%s1 + $0x1c] sm:$0xf]
    %v48 = vld [vmem:[%s1 + $0x20] sm:$0xf]
    %v49 = vld [vmem:[%s1 + $0x24] sm:$0xf]
    %v50 = vld [vmem:[%s1 + $0x28] sm:$0xf]
    %v51 = vld [vmem:[%s1 + $0x2c] sm:$0xf]
    %v52 = vld [vmem:[%s1 + $0x30] sm:$0xf]
    %v53 = vld [vmem:[%s1 + $0x34] sm:$0xf]
    %v54 = vld [vmem:[%s1 + $0x38] sm:$0xf]
    %v55 = vld [vmem:[%s1 + $0x3c] sm:$0xf]
    %v56 = vld [vmem:[%s1 + $0x40] sm:$0xf]
    %v57 = vld [vmem:[%s1 + $0x44] sm:$0xf]
    %v58 = vld [vmem:[%s1 + $0x48] sm:$0x7]
    %v59 = vld [vmem:[%s2] sm:$0x1]
    %v60 = vld [vmem:[%s0] sm:$0xff]
    %v61 = vld [vmem:[%s0 + $0x8] sm:$0xff]
    %v62 = vld [vmem:[%s0 + $0x10] sm:$0xff]
    %v63 = vld [vmem:[%s0 + $0x18] sm:$0xff]
    %v64 = vld [vmem:[%s0 + $0x20] sm:$0xff]
    %v65 = vld [vmem:[%s0 + $0x28] sm:$0xff]
    %v66 = vld [vmem:[%s0 + $0x30] sm:$0x11]
    %v68 = vlaneseq
    %v69 = vshrl.u32 %v68, 7
    %v70 = vsub.s32 0, %v69
    %v71 = vrot.slane %v59, %v70
    %v80 = vunpack.c.l.b16 %v60
    %v81 = vunpack.c.h.b16 %v60
    %v82 = vunpack.c.l.b16 %v61
    %v83 = vunpack.c.h.b16 %v61
    %v84 = vunpack.c.l.b16 %v62
    %v85 = vunpack.c.h.b16 %v62
    %v86 = vunpack.c.l.b16 %v63
    %v87 = vunpack.c.h.b16 %v63
    %v88 = vunpack.c.l.b16 %v64
    %v89 = vunpack.c.h.b16 %v64
    %v90 = vunpack.c.l.b16 %v65
    %v91 = vunpack.c.h.b16 %v65
    %v92 = vunpack.c.l.b16 %v66
    %v93 = vunpack.c.h.b16 %v66
    %v94 = vpack.c.b16 %v82, %v80
    %v95 = vpack.c.b16 %v83, %v81
    %v96 = vpack.c.b16 %v86, %v84
    %v97 = vpack.c.b16 %v87, %v85
    %v98 = vpack.c.b16 %v90, %v88
    %v99 = vpack.c.b16 %v91, %v89
    %v100 = vpack.c.b16 %v92, %v92
    %v101 = vpack.c.b16 %v93, %v93
    %v125 = vunpack.c.l.b16 %v40
    %v126 = vunpack.c.l.b16 %v41
    %v127 = vunpack.c.l.b16 %v42
    %v128 = vunpack.c.l.b16 %v43
    %v129 = vunpack.c.l.b16 %v44
    %v130 = vunpack.c.l.b16 %v45
    %v131 = vunpack.c.l.b16 %v46
    %v132 = vunpack.c.l.b16 %v47
    %v133 = vunpack.c.l.b16 %v48
    %v134 = vunpack.c.l.b16 %v49
    %v135 = vunpack.c.l.b16 %v50
    %v136 = vunpack.c.l.b16 %v51
    %v137 = vunpack.c.l.b16 %v52
    %v138 = vunpack.c.l.b16 %v53
    %v139 = vunpack.c.l.b16 %v54
    %v140 = vunpack.c.l.b16 %v55
    %v141 = vunpack.c.l.b16 %v56
    %v142 = vunpack.c.l.b16 %v57
    %v143 = vunpack.c.l.b16 %v58
    %v144 = vpack.c.b16 %v126, %v125
    %v145 = vpack.c.b16 %v128, %v127
    %v146 = vpack.c.b16 %v130, %v129
    %v147 = vpack.c.b16 %v132, %v131
    %v148 = vpack.c.b16 %v134, %v133
    %v149 = vpack.c.b16 %v136, %v135
    %v150 = vpack.c.b16 %v138, %v137
    %v151 = vpack.c.b16 %v140, %v139
    %v152 = vpack.c.b16 %v142, %v141
    %v153 = vpack.c.b16 %v143, %v143
    %vm163 = vcmask 179200
    %v165 = vsel %vm163, %v95, 0
    %v168 = vsel %vm163, %v97, 0
    %v171 = vsel %vm163, %v99, 0
    %v174 = vsel %vm163, %v101, 0
    %vm176 = vcmask 1042432
    %v178 = vsel %vm176, %v153, 0
    %180 = vmatprep.subr.bf16.mxu0 0
    %181 = vmatpush1.bf16.msra.mxu0 %v151
    %182 = vmatprep.subr.bf16.mxu0 0
    %183 = vmatpush1.bf16.msra.mxu0 %v150
    %184 = vmatprep.subr.bf16.mxu0 0
    %185 = vmatpush1.bf16.msra.mxu0 %v149
    %186 = vmatprep.subr.bf16.mxu0 0
    %187 = vmatpush1.bf16.msra.mxu0 %v148
    %188 = vmatprep.subr.bf16.mxu0 0
    %189 = vmatpush1.bf16.msra.mxu0 %v147
    %190 = vmatprep.subr.bf16.mxu0 0
    %191 = vmatpush1.bf16.msra.mxu0 %v146
    %192 = vmatprep.subr.bf16.mxu0 0
    %193 = vmatpush1.bf16.msra.mxu0 %v145
    %194 = vmatprep.subr.bf16.mxu0 0
    %195 = vmatpush1.bf16.msra.mxu0 %v144
    %196 = vmatprep.subr.bf16.mxu0 0
    %197 = vmatpush2.bf16.msra.mxu0 0
    %198 = vmatprep.subr.bf16.mxu0 0
    %199 = vmatpush2.bf16.msra.mxu0 0
    %200 = vmatprep.subr.bf16.mxu0 0
    %201 = vmatpush2.bf16.msra.mxu0 0
    %202 = vmatprep.subr.bf16.mxu0 0
    %203 = vmatpush2.bf16.msra.mxu0 0
    %204 = vmatprep.subr.bf16.mxu0 0
    %205 = vmatpush2.bf16.msra.mxu0 0
    %206 = vmatprep.subr.bf16.mxu0 0
    %207 = vmatpush2.bf16.msra.mxu0 0
    %208 = vmatprep.subr.bf16.mxu0 0
    %209 = vmatpush2.bf16.msra.mxu0 %v178
    %210 = vmatprep.subr.bf16.mxu0 0
    %211 = vmatpush2.bf16.msra.mxu0 %v152
    %212 = vmatprep.mubr.bf16.mxu0 %v165
    %213 = vmatmul.mubr.bf16.gmra.mxu0 %v94
    %v214 = vpop.f32.mrf.mxu0
    %v215 = vadd.f32 %v71, %v214
    %v216 = vpop.f32.mrf.mxu0
    %v217 = vpop.f32.mrf.mxu0
    %v218 = vadd.f32 %v71, %v217
    %v219 = vpop.f32.mrf.mxu0
    %220 = vmatprep.mubr.bf16.mxu0 %v168
    %221 = vmatmul.mubr.bf16.gmra.mxu0 %v96
    %v222 = vpop.f32.mrf.mxu0
    %v223 = vadd.f32 %v71, %v222
    %v224 = vpop.f32.mrf.mxu0
    %v225 = vpop.f32.mrf.mxu0
    %v226 = vadd.f32 %v71, %v225
    %v227 = vpop.f32.mrf.mxu0
    %228 = vmatprep.mubr.bf16.mxu0 %v171
    %229 = vmatmul.mubr.bf16.gmra.mxu0 %v98
    %v230 = vpop.f32.mrf.mxu0
    %v231 = vadd.f32 %v71, %v230
    %v232 = vpop.f32.mrf.mxu0
    %v233 = vpop.f32.mrf.mxu0
    %v234 = vadd.f32 %v71, %v233
    %v235 = vpop.f32.mrf.mxu0
    %236 = vmatprep.mubr.bf16.mxu0 %v174
    %237 = vmatmul.mubr.bf16.gmra.mxu0 %v100
    %v238 = vpop.f32.mrf.mxu0
    %v239 = vadd.f32 %v71, %v238
    %v240 = vpop.f32.mrf.mxu0
    %v241 = vpop.f32.mrf.mxu0
    %v242 = vpop.f32.mrf.mxu0
    %243 = vdwg.mxu0
    %s244 = scalar_lea.vmem %s0, 56
    %v245 = vld [vmem:[%s244] sm:$0xff]
    %v246 = vld [vmem:[%s244 + $0x8] sm:$0xff]
    %v247 = vld [vmem:[%s244 + $0x10] sm:$0xff]
    %v248 = vld [vmem:[%s244 + $0x18] sm:$0xff]
    %v249 = vld [vmem:[%s244 + $0x20] sm:$0xff]
    %v250 = vld [vmem:[%s244 + $0x28] sm:$0xff]
    %v251 = vld [vmem:[%s244 + $0x30] sm:$0x11]
    %v259 = vunpack.c.l.b16 %v245
    %v260 = vunpack.c.h.b16 %v245
    %v261 = vunpack.c.l.b16 %v246
    %v262 = vunpack.c.h.b16 %v246
    %v263 = vunpack.c.l.b16 %v247
    %v264 = vunpack.c.h.b16 %v247
    %v265 = vunpack.c.l.b16 %v248
    %v266 = vunpack.c.h.b16 %v248
    %v267 = vunpack.c.l.b16 %v249
    %v268 = vunpack.c.h.b16 %v249
    %v269 = vunpack.c.l.b16 %v250
    %v270 = vunpack.c.h.b16 %v250
    %v271 = vunpack.c.l.b16 %v251
    %v272 = vunpack.c.h.b16 %v251
    %v273 = vpack.c.b16 %v261, %v259
    %v274 = vpack.c.b16 %v262, %v260
    %v275 = vpack.c.b16 %v265, %v263
    %v276 = vpack.c.b16 %v266, %v264
    %v277 = vpack.c.b16 %v269, %v267
    %v278 = vpack.c.b16 %v270, %v268
    %v279 = vpack.c.b16 %v271, %v271
    %v280 = vpack.c.b16 %v272, %v272
    %v286 = vsel %vm163, %v274, 0
    %v289 = vsel %vm163, %v276, 0
    %v292 = vsel %vm163, %v278, 0
    %v295 = vsel %vm163, %v280, 0
    %297 = vmatprep.subr.bf16.mxu0 0
    %298 = vmatpush1.bf16.msra.mxu0 %v151
    %299 = vmatprep.subr.bf16.mxu0 0
    %300 = vmatpush1.bf16.msra.mxu0 %v150
    %301 = vmatprep.subr.bf16.mxu0 0
    %302 = vmatpush1.bf16.msra.mxu0 %v149
    %303 = vmatprep.subr.bf16.mxu0 0
    %304 = vmatpush1.bf16.msra.mxu0 %v148
    %305 = vmatprep.subr.bf16.mxu0 0
    %306 = vmatpush1.bf16.msra.mxu0 %v147
    %307 = vmatprep.subr.bf16.mxu0 0
    %308 = vmatpush1.bf16.msra.mxu0 %v146
    %309 = vmatprep.subr.bf16.mxu0 0
    %310 = vmatpush1.bf16.msra.mxu0 %v145
    %311 = vmatprep.subr.bf16.mxu0 0
    %312 = vmatpush1.bf16.msra.mxu0 %v144
    %313 = vmatprep.subr.bf16.mxu0 0
    %314 = vmatpush2.bf16.msra.mxu0 0
    %315 = vmatprep.subr.bf16.mxu0 0
    %316 = vmatpush2.bf16.msra.mxu0 0
    %317 = vmatprep.subr.bf16.mxu0 0
    %318 = vmatpush2.bf16.msra.mxu0 0
    %319 = vmatprep.subr.bf16.mxu0 0
    %320 = vmatpush2.bf16.msra.mxu0 0
    %321 = vmatprep.subr.bf16.mxu0 0
    %322 = vmatpush2.bf16.msra.mxu0 0
    %323 = vmatprep.subr.bf16.mxu0 0
    %324 = vmatpush2.bf16.msra.mxu0 0
    %325 = vmatprep.subr.bf16.mxu0 0
    %326 = vmatpush2.bf16.msra.mxu0 %v178
    %327 = vmatprep.subr.bf16.mxu0 0
    %328 = vmatpush2.bf16.msra.mxu0 %v152
    %329 = vmatprep.mubr.bf16.mxu0 %v286
    %330 = vmatmul.mubr.bf16.gmra.mxu0 %v273
    %v331 = vpop.f32.mrf.mxu0
    %v332 = vadd.f32 %v71, %v331
    %v333 = vpop.f32.mrf.mxu0
    %v334 = vpop.f32.mrf.mxu0
    %v335 = vadd.f32 %v71, %v334
    %v336 = vpop.f32.mrf.mxu0
    %337 = vmatprep.mubr.bf16.mxu0 %v289
    %338 = vmatmul.mubr.bf16.gmra.mxu0 %v275
    %v339 = vpop.f32.mrf.mxu0
    %v340 = vadd.f32 %v71, %v339
    %v341 = vpop.f32.mrf.mxu0
    %v342 = vpop.f32.mrf.mxu0
    %v343 = vadd.f32 %v71, %v342
    %v344 = vpop.f32.mrf.mxu0
    %345 = vmatprep.mubr.bf16.mxu0 %v292
    %346 = vmatmul.mubr.bf16.gmra.mxu0 %v277
    %v347 = vpop.f32.mrf.mxu0
    %v348 = vadd.f32 %v71, %v347
    %v349 = vpop.f32.mrf.mxu0
    %v350 = vpop.f32.mrf.mxu0
    %v351 = vadd.f32 %v71, %v350
    %v352 = vpop.f32.mrf.mxu0
    %353 = vmatprep.mubr.bf16.mxu0 %v295
    %354 = vmatmul.mubr.bf16.gmra.mxu0 %v279
    %v355 = vpop.f32.mrf.mxu0
    %v356 = vadd.f32 %v71, %v355
    %v357 = vpop.f32.mrf.mxu0
    %v358 = vpop.f32.mrf.mxu0
    %v359 = vpop.f32.mrf.mxu0
    %360 = vdwg.mxu0
    %s361 = scalar_lea.vmem %s0, 112
    %v362 = vld [vmem:[%s361] sm:$0xff]
    %v363 = vld [vmem:[%s361 + $0x8] sm:$0xff]
    %v364 = vld [vmem:[%s361 + $0x10] sm:$0xff]
    %v365 = vld [vmem:[%s361 + $0x18] sm:$0xff]
    %v366 = vld [vmem:[%s361 + $0x20] sm:$0xff]
    %v367 = vld [vmem:[%s361 + $0x28] sm:$0xff]
    %v368 = vld [vmem:[%s361 + $0x30] sm:$0x11]
    %v376 = vunpack.c.l.b16 %v362
    %v377 = vunpack.c.h.b16 %v362
    %v378 = vunpack.c.l.b16 %v363
    %v379 = vunpack.c.h.b16 %v363
    %v380 = vunpack.c.l.b16 %v364
    %v381 = vunpack.c.h.b16 %v364
    %v382 = vunpack.c.l.b16 %v365
    %v383 = vunpack.c.h.b16 %v365
    %v384 = vunpack.c.l.b16 %v366
    %v385 = vunpack.c.h.b16 %v366
    %v386 = vunpack.c.l.b16 %v367
    %v387 = vunpack.c.h.b16 %v367
    %v388 = vunpack.c.l.b16 %v368
    %v389 = vunpack.c.h.b16 %v368
    %v390 = vpack.c.b16 %v378, %v376
    %v391 = vpack.c.b16 %v379, %v377
    %v392 = vpack.c.b16 %v382, %v380
    %v393 = vpack.c.b16 %v383, %v381
    %v394 = vpack.c.b16 %v386, %v384
    %v395 = vpack.c.b16 %v387, %v385
    %v396 = vpack.c.b16 %v388, %v388
    %v397 = vpack.c.b16 %v389, %v389
    %v403 = vsel %vm163, %v391, 0
    %v406 = vsel %vm163, %v393, 0
    %v409 = vsel %vm163, %v395, 0
    %v412 = vsel %vm163, %v397, 0
    %414 = vmatprep.subr.bf16.mxu0 0
    %415 = vmatpush1.bf16.msra.mxu0 %v151
    %416 = vmatprep.subr.bf16.mxu0 0
    %417 = vmatpush1.bf16.msra.mxu0 %v150
    %418 = vmatprep.subr.bf16.mxu0 0
    %419 = vmatpush1.bf16.msra.mxu0 %v149
    %420 = vmatprep.subr.bf16.mxu0 0
    %421 = vmatpush1.bf16.msra.mxu0 %v148
    %422 = vmatprep.subr.bf16.mxu0 0
    %423 = vmatpush1.bf16.msra.mxu0 %v147
    %424 = vmatprep.subr.bf16.mxu0 0
    %425 = vmatpush1.bf16.msra.mxu0 %v146
    %426 = vmatprep.subr.bf16.mxu0 0
    %427 = vmatpush1.bf16.msra.mxu0 %v145
    %428 = vmatprep.subr.bf16.mxu0 0
    %429 = vmatpush1.bf16.msra.mxu0 %v144
    %430 = vmatprep.subr.bf16.mxu0 0
    %431 = vmatpush2.bf16.msra.mxu0 0
    %432 = vmatprep.subr.bf16.mxu0 0
    %433 = vmatpush2.bf16.msra.mxu0 0
    %434 = vmatprep.subr.bf16.mxu0 0
    %435 = vmatpush2.bf16.msra.mxu0 0
    %436 = vmatprep.subr.bf16.mxu0 0
    %437 = vmatpush2.bf16.msra.mxu0 0
    %438 = vmatprep.subr.bf16.mxu0 0
    %439 = vmatpush2.bf16.msra.mxu0 0
    %440 = vmatprep.subr.bf16.mxu0 0
    %441 = vmatpush2.bf16.msra.mxu0 0
    %442 = vmatprep.subr.bf16.mxu0 0
    %443 = vmatpush2.bf16.msra.mxu0 %v178
    %444 = vmatprep.subr.bf16.mxu0 0
    %445 = vmatpush2.bf16.msra.mxu0 %v152
    %446 = vmatprep.mubr.bf16.mxu0 %v403
    %447 = vmatmul.mubr.bf16.gmra.mxu0 %v390
    %v448 = vpop.f32.mrf.mxu0
    %v449 = vadd.f32 %v71, %v448
    %v450 = vpop.f32.mrf.mxu0
    %v451 = vpop.f32.mrf.mxu0
    %v452 = vadd.f32 %v71, %v451
    %v453 = vpop.f32.mrf.mxu0
    %454 = vmatprep.mubr.bf16.mxu0 %v406
    %455 = vmatmul.mubr.bf16.gmra.mxu0 %v392
    %v456 = vpop.f32.mrf.mxu0
    %v457 = vadd.f32 %v71, %v456
    %v458 = vpop.f32.mrf.mxu0
    %v459 = vpop.f32.mrf.mxu0
    %v460 = vadd.f32 %v71, %v459
    %v461 = vpop.f32.mrf.mxu0
    %462 = vmatprep.mubr.bf16.mxu0 %v409
    %463 = vmatmul.mubr.bf16.gmra.mxu0 %v394
    %v464 = vpop.f32.mrf.mxu0
    %v465 = vadd.f32 %v71, %v464
    %v466 = vpop.f32.mrf.mxu0
    %v467 = vpop.f32.mrf.mxu0
    %v468 = vadd.f32 %v71, %v467
    %v469 = vpop.f32.mrf.mxu0
    %470 = vmatprep.mubr.bf16.mxu0 %v412
    %471 = vmatmul.mubr.bf16.gmra.mxu0 %v396
    %v472 = vpop.f32.mrf.mxu0
    %v473 = vadd.f32 %v71, %v472
    %v474 = vpop.f32.mrf.mxu0
    %v475 = vpop.f32.mrf.mxu0
    %v476 = vpop.f32.mrf.mxu0
    %477 = vdwg.mxu0
    %s478 = scalar_lea.vmem %s0, 168
    %v479 = vld [vmem:[%s478] sm:$0xff]
    %v480 = vld [vmem:[%s478 + $0x8] sm:$0xff]
    %v481 = vld [vmem:[%s478 + $0x10] sm:$0xff]
    %v482 = vld [vmem:[%s478 + $0x18] sm:$0xff]
    %v483 = vld [vmem:[%s478 + $0x20] sm:$0xff]
    %v484 = vld [vmem:[%s478 + $0x28] sm:$0xff]
    %v485 = vld [vmem:[%s478 + $0x30] sm:$0x11]
    %v493 = vunpack.c.l.b16 %v479
    %v494 = vunpack.c.h.b16 %v479
    %v495 = vunpack.c.l.b16 %v480
    %v496 = vunpack.c.h.b16 %v480
    %v497 = vunpack.c.l.b16 %v481
    %v498 = vunpack.c.h.b16 %v481
    %v499 = vunpack.c.l.b16 %v482
    %v500 = vunpack.c.h.b16 %v482
    %v501 = vunpack.c.l.b16 %v483
    %v502 = vunpack.c.h.b16 %v483
    %v503 = vunpack.c.l.b16 %v484
    %v504 = vunpack.c.h.b16 %v484
    %v505 = vunpack.c.l.b16 %v485
    %v506 = vunpack.c.h.b16 %v485
    %v507 = vpack.c.b16 %v495, %v493
    %v508 = vpack.c.b16 %v496, %v494
    %v509 = vpack.c.b16 %v499, %v497
    %v510 = vpack.c.b16 %v500, %v498
    %v511 = vpack.c.b16 %v503, %v501
    %v512 = vpack.c.b16 %v504, %v502
    %v513 = vpack.c.b16 %v505, %v505
    %v514 = vpack.c.b16 %v506, %v506
    %v520 = vsel %vm163, %v508, 0
    %v523 = vsel %vm163, %v510, 0
    %v526 = vsel %vm163, %v512, 0
    %v529 = vsel %vm163, %v514, 0
    %531 = vmatprep.subr.bf16.mxu0 0
    %532 = vmatpush1.bf16.msra.mxu0 %v151
    %533 = vmatprep.subr.bf16.mxu0 0
    %534 = vmatpush1.bf16.msra.mxu0 %v150
    %535 = vmatprep.subr.bf16.mxu0 0
    %536 = vmatpush1.bf16.msra.mxu0 %v149
    %537 = vmatprep.subr.bf16.mxu0 0
    %538 = vmatpush1.bf16.msra.mxu0 %v148
    %539 = vmatprep.subr.bf16.mxu0 0
    %540 = vmatpush1.bf16.msra.mxu0 %v147
    %541 = vmatprep.subr.bf16.mxu0 0
    %542 = vmatpush1.bf16.msra.mxu0 %v146
    %543 = vmatprep.subr.bf16.mxu0 0
    %544 = vmatpush1.bf16.msra.mxu0 %v145
    %545 = vmatprep.subr.bf16.mxu0 0
    %546 = vmatpush1.bf16.msra.mxu0 %v144
    %547 = vmatprep.subr.bf16.mxu0 0
    %548 = vmatpush2.bf16.msra.mxu0 0
    %549 = vmatprep.subr.bf16.mxu0 0
    %550 = vmatpush2.bf16.msra.mxu0 0
    %551 = vmatprep.subr.bf16.mxu0 0
    %552 = vmatpush2.bf16.msra.mxu0 0
    %553 = vmatprep.subr.bf16.mxu0 0
    %554 = vmatpush2.bf16.msra.mxu0 0
    %555 = vmatprep.subr.bf16.mxu0 0
    %556 = vmatpush2.bf16.msra.mxu0 0
    %557 = vmatprep.subr.bf16.mxu0 0
    %558 = vmatpush2.bf16.msra.mxu0 0
    %559 = vmatprep.subr.bf16.mxu0 0
    %560 = vmatpush2.bf16.msra.mxu0 %v178
    %561 = vmatprep.subr.bf16.mxu0 0
    %562 = vmatpush2.bf16.msra.mxu0 %v152
    %563 = vmatprep.mubr.bf16.mxu0 %v520
    %564 = vmatmul.mubr.bf16.gmra.mxu0 %v507
    %v565 = vpop.f32.mrf.mxu0
    %v566 = vadd.f32 %v71, %v565
    %v567 = vpop.f32.mrf.mxu0
    %v568 = vpop.f32.mrf.mxu0
    %v569 = vadd.f32 %v71, %v568
    %v570 = vpop.f32.mrf.mxu0
    %571 = vmatprep.mubr.bf16.mxu0 %v523
    %572 = vmatmul.mubr.bf16.gmra.mxu0 %v509
    %v573 = vpop.f32.mrf.mxu0
    %v574 = vadd.f32 %v71, %v573
    %v575 = vpop.f32.mrf.mxu0
    %v576 = vpop.f32.mrf.mxu0
    %v577 = vadd.f32 %v71, %v576
    %v578 = vpop.f32.mrf.mxu0
    %579 = vmatprep.mubr.bf16.mxu0 %v526
    %580 = vmatmul.mubr.bf16.gmra.mxu0 %v511
    %v581 = vpop.f32.mrf.mxu0
    %v582 = vadd.f32 %v71, %v581
    %v583 = vpop.f32.mrf.mxu0
    %v584 = vpop.f32.mrf.mxu0
    %v585 = vadd.f32 %v71, %v584
    %v586 = vpop.f32.mrf.mxu0
    %587 = vmatprep.mubr.bf16.mxu0 %v529
    %588 = vmatmul.mubr.bf16.gmra.mxu0 %v513
    %v589 = vpop.f32.mrf.mxu0
    %v590 = vadd.f32 %v71, %v589
    %v591 = vpop.f32.mrf.mxu0
    %v592 = vpop.f32.mrf.mxu0
    %v593 = vpop.f32.mrf.mxu0
    %594 = vdwg.mxu0
    %vm595 = vcmask 130048
    %v596 = vsel %vm595, %v215, 0.0
    %v597 = vsel %vm595, %v218, 0.0
    %v598 = vadd.f32 %v596, %v597
    %v599 = vsel %vm595, %v223, 0.0
    %v600 = vadd.f32 %v598, %v599
    %v601 = vsel %vm595, %v226, 0.0
    %v602 = vadd.f32 %v600, %v601
    %v603 = vsel %vm595, %v231, 0.0
    %v604 = vadd.f32 %v602, %v603
    %v605 = vsel %vm595, %v234, 0.0
    %v606 = vadd.f32 %v604, %v605
    %vm607 = vcmask 123904
    %v608 = vsel %vm607, %v239, 0.0
    %v609 = vadd.f32 %v606, %v608
    %v610 = vrot.slane %v609, 4
    %v611 = vadd.f32 %v609, %v610
    %v612 = vrot.slane %v611, 2
    %v613 = vadd.f32 %v611, %v612
    %v614 = vrot.slane %v613, 1
    %v615 = vadd.f32 %v613, %v614
    %v616 = vsel %vm595, %v332, 0.0
    %v617 = vsel %vm595, %v335, 0.0
    %v618 = vadd.f32 %v616, %v617
    %v619 = vsel %vm595, %v340, 0.0
    %v620 = vadd.f32 %v618, %v619
    %v621 = vsel %vm595, %v343, 0.0
    %v622 = vadd.f32 %v620, %v621
    %v623 = vsel %vm595, %v348, 0.0
    %v624 = vadd.f32 %v622, %v623
    %v625 = vsel %vm595, %v351, 0.0
    %v626 = vadd.f32 %v624, %v625
    %v627 = vsel %vm607, %v356, 0.0
    %v628 = vadd.f32 %v626, %v627
    %v629 = vrot.slane %v628, 4
    %v630 = vadd.f32 %v628, %v629
    %v631 = vrot.slane %v630, 2
    %v632 = vadd.f32 %v630, %v631
    %v633 = vrot.slane %v632, 1
    %v634 = vadd.f32 %v632, %v633
    %v635 = vsel %vm595, %v449, 0.0
    %v636 = vsel %vm595, %v452, 0.0
    %v637 = vadd.f32 %v635, %v636
    %v638 = vsel %vm595, %v457, 0.0
    %v639 = vadd.f32 %v637, %v638
    %v640 = vsel %vm595, %v460, 0.0
    %v641 = vadd.f32 %v639, %v640
    %v642 = vsel %vm595, %v465, 0.0
    %v643 = vadd.f32 %v641, %v642
    %v644 = vsel %vm595, %v468, 0.0
    %v645 = vadd.f32 %v643, %v644
    %v646 = vsel %vm607, %v473, 0.0
    %v647 = vadd.f32 %v645, %v646
    %v648 = vrot.slane %v647, 4
    %v649 = vadd.f32 %v647, %v648
    %v650 = vrot.slane %v649, 2
    %v651 = vadd.f32 %v649, %v650
    %v652 = vrot.slane %v651, 1
    %v653 = vadd.f32 %v651, %v652
    %v654 = vsel %vm595, %v566, 0.0
    %v655 = vsel %vm595, %v569, 0.0
    %v656 = vadd.f32 %v654, %v655
    %v657 = vsel %vm595, %v574, 0.0
    %v658 = vadd.f32 %v656, %v657
    %v659 = vsel %vm595, %v577, 0.0
    %v660 = vadd.f32 %v658, %v659
    %v661 = vsel %vm595, %v582, 0.0
    %v662 = vadd.f32 %v660, %v661
    %v663 = vsel %vm595, %v585, 0.0
    %v664 = vadd.f32 %v662, %v663
    %v665 = vsel %vm607, %v590, 0.0
    %v666 = vadd.f32 %v664, %v665
    %v667 = vrot.slane %v666, 4
    %v668 = vadd.f32 %v666, %v667
    %v669 = vrot.slane %v668, 2
    %v670 = vadd.f32 %v668, %v669
    %v671 = vrot.slane %v670, 1
    %v672 = vadd.f32 %v670, %v671
    %v673 = vadd.f32 %v615, 0.0
    %v674 = vadd.f32 %v673, %v634
    %v675 = vadd.f32 %v674, %v653
    %v676 = vadd.f32 %v675, %v672
    %v677 = vrcp.pop 200.0
    %v678 = vmul.f32 %v676, %v677
    %v679 = vsub.f32 %v215, %v678
    %v680 = vsub.f32 %v218, %v678
    %v681 = vsub.f32 %v223, %v678
    %v682 = vsub.f32 %v226, %v678
    %v683 = vsub.f32 %v231, %v678
    %v684 = vsub.f32 %v234, %v678
    %v685 = vsub.f32 %v239, %v678
    %v686 = vmul.f32 %v679, %v679
    %v687 = vmul.f32 %v680, %v680
    %v688 = vmul.f32 %v681, %v681
    %v689 = vmul.f32 %v682, %v682
    %v690 = vmul.f32 %v683, %v683
    %v691 = vmul.f32 %v684, %v684
    %v692 = vmul.f32 %v685, %v685
    %v693 = vsel %vm595, %v686, 0.0
    %v694 = vsel %vm595, %v687, 0.0
    %v695 = vadd.f32 %v693, %v694
    %v696 = vsel %vm595, %v688, 0.0
    %v697 = vadd.f32 %v695, %v696
    %v698 = vsel %vm595, %v689, 0.0
    %v699 = vadd.f32 %v697, %v698
    %v700 = vsel %vm595, %v690, 0.0
    %v701 = vadd.f32 %v699, %v700
    %v702 = vsel %vm595, %v691, 0.0
    %v703 = vadd.f32 %v701, %v702
    %v704 = vsel %vm607, %v692, 0.0
    %v705 = vadd.f32 %v703, %v704
    %v706 = vrot.slane %v705, 4
    %v707 = vadd.f32 %v705, %v706
    %v708 = vrot.slane %v707, 2
    %v709 = vadd.f32 %v707, %v708
    %v710 = vrot.slane %v709, 1
    %v711 = vadd.f32 %v709, %v710
    %v712 = vsub.f32 %v332, %v678
    %v713 = vsub.f32 %v335, %v678
    %v714 = vsub.f32 %v340, %v678
    %v715 = vsub.f32 %v343, %v678
    %v716 = vsub.f32 %v348, %v678
    %v717 = vsub.f32 %v351, %v678
    %v718 = vsub.f32 %v356, %v678
    %v719 = vmul.f32 %v712, %v712
    %v720 = vmul.f32 %v713, %v713
    %v721 = vmul.f32 %v714, %v714
    %v722 = vmul.f32 %v715, %v715
    %v723 = vmul.f32 %v716, %v716
    %v724 = vmul.f32 %v717, %v717
    %v725 = vmul.f32 %v718, %v718
    %v726 = vsel %vm595, %v719, 0.0
    %v727 = vsel %vm595, %v720, 0.0
    %v728 = vadd.f32 %v726, %v727
    %v729 = vsel %vm595, %v721, 0.0
    %v730 = vadd.f32 %v728, %v729
    %v731 = vsel %vm595, %v722, 0.0
    %v732 = vadd.f32 %v730, %v731
    %v733 = vsel %vm595, %v723, 0.0
    %v734 = vadd.f32 %v732, %v733
    %v735 = vsel %vm595, %v724, 0.0
    %v736 = vadd.f32 %v734, %v735
    %v737 = vsel %vm607, %v725, 0.0
    %v738 = vadd.f32 %v736, %v737
    %v739 = vrot.slane %v738, 4
    %v740 = vadd.f32 %v738, %v739
    %v741 = vrot.slane %v740, 2
    %v742 = vadd.f32 %v740, %v741
    %v743 = vrot.slane %v742, 1
    %v744 = vadd.f32 %v742, %v743
    %v745 = vsub.f32 %v449, %v678
    %v746 = vsub.f32 %v452, %v678
    %v747 = vsub.f32 %v457, %v678
    %v748 = vsub.f32 %v460, %v678
    %v749 = vsub.f32 %v465, %v678
    %v750 = vsub.f32 %v468, %v678
    %v751 = vsub.f32 %v473, %v678
    %v752 = vmul.f32 %v745, %v745
    %v753 = vmul.f32 %v746, %v746
    %v754 = vmul.f32 %v747, %v747
    %v755 = vmul.f32 %v748, %v748
    %v756 = vmul.f32 %v749, %v749
    %v757 = vmul.f32 %v750, %v750
    %v758 = vmul.f32 %v751, %v751
    %v759 = vsel %vm595, %v752, 0.0
    %v760 = vsel %vm595, %v753, 0.0
    %v761 = vadd.f32 %v759, %v760
    %v762 = vsel %vm595, %v754, 0.0
    %v763 = vadd.f32 %v761, %v762
    %v764 = vsel %vm595, %v755, 0.0
    %v765 = vadd.f32 %v763, %v764
    %v766 = vsel %vm595, %v756, 0.0
    %v767 = vadd.f32 %v765, %v766
    %v768 = vsel %vm595, %v757, 0.0
    %v769 = vadd.f32 %v767, %v768
    %v770 = vsel %vm607, %v758, 0.0
    %v771 = vadd.f32 %v769, %v770
    %v772 = vrot.slane %v771, 4
    %v773 = vadd.f32 %v771, %v772
    %v774 = vrot.slane %v773, 2
    %v775 = vadd.f32 %v773, %v774
    %v776 = vrot.slane %v775, 1
    %v777 = vadd.f32 %v775, %v776
    %v778 = vsub.f32 %v566, %v678
    %v779 = vsub.f32 %v569, %v678
    %v780 = vsub.f32 %v574, %v678
    %v781 = vsub.f32 %v577, %v678
    %v782 = vsub.f32 %v582, %v678
    %v783 = vsub.f32 %v585, %v678
    %v784 = vsub.f32 %v590, %v678
    %v785 = vmul.f32 %v778, %v778
    %v786 = vmul.f32 %v779, %v779
    %v787 = vmul.f32 %v780, %v780
    %v788 = vmul.f32 %v781, %v781
    %v789 = vmul.f32 %v782, %v782
    %v790 = vmul.f32 %v783, %v783
    %v791 = vmul.f32 %v784, %v784
    %v792 = vsel %vm595, %v785, 0.0
    %v793 = vsel %vm595, %v786, 0.0
    %v794 = vadd.f32 %v792, %v793
    %v795 = vsel %vm595, %v787, 0.0
    %v796 = vadd.f32 %v794, %v795
    %v797 = vsel %vm595, %v788, 0.0
    %v798 = vadd.f32 %v796, %v797
    %v799 = vsel %vm595, %v789, 0.0
    %v800 = vadd.f32 %v798, %v799
    %v801 = vsel %vm595, %v790, 0.0
    %v802 = vadd.f32 %v800, %v801
    %v803 = vsel %vm607, %v791, 0.0
    %v804 = vadd.f32 %v802, %v803
    %v805 = vrot.slane %v804, 4
    %v806 = vadd.f32 %v804, %v805
    %v807 = vrot.slane %v806, 2
    %v808 = vadd.f32 %v806, %v807
    %v809 = vrot.slane %v808, 1
    %v810 = vadd.f32 %v808, %v809
    %v811 = vadd.f32 %v711, 0.0
    %v812 = vadd.f32 %v811, %v744
    %v813 = vadd.f32 %v812, %v777
    %v814 = vadd.f32 %v813, %v810
    %v815 = vmul.f32 %v814, %v677
    %v816 = vld [vmem:[%s3] sm:$0x1]
    %v817 = vadd.f32 %v815, 1e-05
    %v818 = vrsqrt.pop %v817
    %v819 = vmul.f32 %v816, %v818
    %v820 = vld [vmem:[%s4] sm:$0x1]
    %v822 = vlaneseq
    %v823 = vshrl.u32 %v822, 7
    %v824 = vsub.s32 0, %v823
    %v825 = vrot.slane %v819, %v824
    %v827 = vmul.f32 %v679, %v825
    %v828 = vmul.f32 %v680, %v825
    %v829 = vmul.f32 %v681, %v825
    %v830 = vmul.f32 %v682, %v825
    %v831 = vmul.f32 %v683, %v825
    %v832 = vmul.f32 %v684, %v825
    %v833 = vmul.f32 %v685, %v825
    %v835 = vlaneseq
    %v836 = vshrl.u32 %v835, 7
    %v837 = vsub.s32 0, %v836
    %v838 = vrot.slane %v820, %v837
    %v840 = vadd.f32 %v827, %v838
    %v841 = vadd.f32 %v828, %v838
    %v842 = vadd.f32 %v829, %v838
    %v843 = vadd.f32 %v830, %v838
    %v844 = vadd.f32 %v831, %v838
    %v845 = vadd.f32 %v832, %v838
    %v846 = vadd.f32 %v833, %v838
    %v847 = vmax.f32 %v840, 0.0
    %v848 = vmax.f32 %v841, 0.0
    %v849 = vmax.f32 %v842, 0.0
    %v850 = vmax.f32 %v843, 0.0
    %v851 = vmax.f32 %v844, 0.0
    %v852 = vmax.f32 %v845, 0.0
    %v853 = vmax.f32 %v846, 0.0
    %v854 = vmul.f32 %v712, %v825
    %v855 = vmul.f32 %v713, %v825
    %v856 = vmul.f32 %v714, %v825
    %v857 = vmul.f32 %v715, %v825
    %v858 = vmul.f32 %v716, %v825
    %v859 = vmul.f32 %v717, %v825
    %v860 = vmul.f32 %v718, %v825
    %v861 = vadd.f32 %v854, %v838
    %v862 = vadd.f32 %v855, %v838
    %v863 = vadd.f32 %v856, %v838
    %v864 = vadd.f32 %v857, %v838
    %v865 = vadd.f32 %v858, %v838
    %v866 = vadd.f32 %v859, %v838
    %v867 = vadd.f32 %v860, %v838
    %v868 = vmax.f32 %v861, 0.0
    %v869 = vmax.f32 %v862, 0.0
    %v870 = vmax.f32 %v863, 0.0
    %v871 = vmax.f32 %v864, 0.0
    %v872 = vmax.f32 %v865, 0.0
    %v873 = vmax.f32 %v866, 0.0
    %v874 = vmax.f32 %v867, 0.0
    %v875 = vmul.f32 %v745, %v825
    %v876 = vmul.f32 %v746, %v825
    %v877 = vmul.f32 %v747, %v825
    %v878 = vmul.f32 %v748, %v825
    %v879 = vmul.f32 %v749, %v825
    %v880 = vmul.f32 %v750, %v825
    %v881 = vmul.f32 %v751, %v825
    %v882 = vadd.f32 %v875, %v838
    %v883 = vadd.f32 %v876, %v838
    %v884 = vadd.f32 %v877, %v838
    %v885 = vadd.f32 %v878, %v838
    %v886 = vadd.f32 %v879, %v838
    %v887 = vadd.f32 %v880, %v838
    %v888 = vadd.f32 %v881, %v838
    %v889 = vmax.f32 %v882, 0.0
    %v890 = vmax.f32 %v883, 0.0
    %v891 = vmax.f32 %v884, 0.0
    %v892 = vmax.f32 %v885, 0.0
    %v893 = vmax.f32 %v886, 0.0
    %v894 = vmax.f32 %v887, 0.0
    %v895 = vmax.f32 %v888, 0.0
    %v896 = vmul.f32 %v778, %v825
    %v897 = vmul.f32 %v779, %v825
    %v898 = vmul.f32 %v780, %v825
    %v899 = vmul.f32 %v781, %v825
    %v900 = vmul.f32 %v782, %v825
    %v901 = vmul.f32 %v783, %v825
    %v902 = vmul.f32 %v784, %v825
    %v903 = vadd.f32 %v896, %v838
    %v904 = vadd.f32 %v897, %v838
    %v905 = vadd.f32 %v898, %v838
    %v906 = vadd.f32 %v899, %v838
    %v907 = vadd.f32 %v900, %v838
    %v908 = vadd.f32 %v901, %v838
    %v909 = vadd.f32 %v902, %v838
    %v910 = vmax.f32 %v903, 0.0
    %v911 = vmax.f32 %v904, 0.0
    %v912 = vmax.f32 %v905, 0.0
    %v913 = vmax.f32 %v906, 0.0
    %v914 = vmax.f32 %v907, 0.0
    %v915 = vmax.f32 %v908, 0.0
    %v916 = vmax.f32 %v909, 0.0
    %v917 = vmax.f32 %v847, %v868
    %v918 = vmax.f32 %v848, %v869
    %v919 = vmax.f32 %v849, %v870
    %v920 = vmax.f32 %v850, %v871
    %v921 = vmax.f32 %v851, %v872
    %v922 = vmax.f32 %v852, %v873
    %v923 = vmax.f32 %v853, %v874
    %v924 = vmax.f32 %v889, %v910
    %v925 = vmax.f32 %v890, %v911
    %v926 = vmax.f32 %v891, %v912
    %v927 = vmax.f32 %v892, %v913
    %v928 = vmax.f32 %v893, %v914
    %v929 = vmax.f32 %v894, %v915
    %v930 = vmax.f32 %v895, %v916
    %v931 = vmax.f32 %v917, %v924
    %v932 = vmax.f32 %v918, %v925
    %v933 = vmax.f32 %v919, %v926
    %v934 = vmax.f32 %v920, %v927
    %v935 = vmax.f32 %v921, %v928
    %v936 = vmax.f32 %v922, %v929
    %v937 = vmax.f32 %v923, %v930
    %v938 = vld [vmem:[%s5] sm:$0xff]
    %v939 = vld [vmem:[%s5 + $0x8] sm:$0xff]
    %s940 = scalar_lea.vmem %s5, 16
    %v941 = vld [vmem:[%s940] sm:$0xff]
    %v942 = vld [vmem:[%s940 + $0x8] sm:$0xff]
    %v944 = vrot.slane %v931, 2
    %v945 = vsel %vm595, %v944, 0
    %947 = vmatprep.subr.mxu0 0.0
    %948 = vmatpush1.msra.mxu0 0.0
    %949 = vmatprep.subr.mxu0 0.0
    %950 = vmatpush1.msra.mxu0 0.0
    %951 = vmatprep.subr.mxu0 0.0
    %952 = vmatpush1.msra.mxu0 0.0
    %953 = vmatprep.subr.mxu0 0.0
    %954 = vmatpush1.msra.mxu0 0.0
    %955 = vmatprep.subr.mxu0 0.0
    %956 = vmatpush1.msra.mxu0 0.0
    %957 = vmatprep.subr.mxu0 0.0
    %958 = vmatpush1.msra.mxu0 0.0
    %959 = vmatprep.subr.mxu0 0.0
    %960 = vmatpush1.msra.mxu0 0.0
    %961 = vmatprep.subr.mxu0 0.0
    %962 = vmatpush1.msra.mxu0 0.0
    %963 = vmatprep.subr.mxu0 0.0
    %964 = vmatpush1.msra.mxu0 0.0
    %965 = vmatprep.subr.mxu0 0.0
    %966 = vmatpush1.msra.mxu0 0.0
    %967 = vmatprep.subr.mxu0 0.0
    %968 = vmatpush1.msra.mxu0 0.0
    %969 = vmatprep.subr.mxu0 0.0
    %970 = vmatpush1.msra.mxu0 0.0
    %971 = vmatprep.subr.mxu0 0.0
    %972 = vmatpush1.msra.mxu0 0.0
    %973 = vmatprep.subr.mxu0 0.0
    %974 = vmatpush1.msra.mxu0 0.0
    %975 = vmatprep.subr.mxu0 0.0
    %976 = vmatpush1.msra.mxu0 %v942
    %977 = vmatprep.subr.mxu0 0.0
    %978 = vmatpush1.msra.mxu0 %v941
    %979 = vmatprep.subr.mxu0 0.0
    %980 = vmatpush2.msra.mxu0 0.0
    %981 = vmatprep.subr.mxu0 0.0
    %982 = vmatpush2.msra.mxu0 0.0
    %983 = vmatprep.subr.mxu0 0.0
    %984 = vmatpush2.msra.mxu0 0.0
    %985 = vmatprep.subr.mxu0 0.0
    %986 = vmatpush2.msra.mxu0 0.0
    %987 = vmatprep.subr.mxu0 0.0
    %988 = vmatpush2.msra.mxu0 0.0
    %989 = vmatprep.subr.mxu0 0.0
    %990 = vmatpush2.msra.mxu0 0.0
    %991 = vmatprep.subr.mxu0 0.0
    %992 = vmatpush2.msra.mxu0 0.0
    %993 = vmatprep.subr.mxu0 0.0
    %994 = vmatpush2.msra.mxu0 0.0
    %995 = vmatprep.subr.mxu0 0.0
    %996 = vmatpush2.msra.mxu0 0.0
    %997 = vmatprep.subr.mxu0 0.0
    %998 = vmatpush2.msra.mxu0 0.0
    %999 = vmatprep.subr.mxu0 0.0
    %1000 = vmatpush2.msra.mxu0 0.0
    %1001 = vmatprep.subr.mxu0 0.0
    %1002 = vmatpush2.msra.mxu0 0.0
    %1003 = vmatprep.subr.mxu0 0.0
    %1004 = vmatpush2.msra.mxu0 0.0
    %1005 = vmatprep.subr.mxu0 0.0
    %1006 = vmatpush2.msra.mxu0 0.0
    %1007 = vmatprep.subr.mxu0 0.0
    %1008 = vmatpush2.msra.mxu0 0.0
    %1009 = vmatprep.subr.mxu0 0.0
    %1010 = vmatpush2.msra.mxu0 0.0
    %1011 = vmatprep.mubr.f32.mxu0 0.0
    %1012 = vmatmul.mubr.f32.gmra.mxu0 %v945
    %v1013 = vpop.f32.mrf.mxu0
    %v1014 = vadd.f32 0.0, %v1013
    %v1015 = vpop.f32.mrf.mxu0
    %1016 = vdwg.mxu0
    %v1017 = vsel %vm595, %v931, 0
    %1019 = vmatprep.subr.mxu0 0.0
    %1020 = vmatpush1.msra.mxu0 0.0
    %1021 = vmatprep.subr.mxu0 0.0
    %1022 = vmatpush1.msra.mxu0 0.0
    %1023 = vmatprep.subr.mxu0 0.0
    %1024 = vmatpush1.msra.mxu0 0.0
    %1025 = vmatprep.subr.mxu0 0.0
    %1026 = vmatpush1.msra.mxu0 0.0
    %1027 = vmatprep.subr.mxu0 0.0
    %1028 = vmatpush1.msra.mxu0 0.0
    %1029 = vmatprep.subr.mxu0 0.0
    %1030 = vmatpush1.msra.mxu0 0.0
    %1031 = vmatprep.subr.mxu0 0.0
    %1032 = vmatpush1.msra.mxu0 0.0
    %1033 = vmatprep.subr.mxu0 0.0
    %1034 = vmatpush1.msra.mxu0 0.0
    %1035 = vmatprep.subr.mxu0 0.0
    %1036 = vmatpush1.msra.mxu0 0.0
    %1037 = vmatprep.subr.mxu0 0.0
    %1038 = vmatpush1.msra.mxu0 0.0
    %1039 = vmatprep.subr.mxu0 0.0
    %1040 = vmatpush1.msra.mxu0 0.0
    %1041 = vmatprep.subr.mxu0 0.0
    %1042 = vmatpush1.msra.mxu0 0.0
    %1043 = vmatprep.subr.mxu0 0.0
    %1044 = vmatpush1.msra.mxu0 0.0
    %1045 = vmatprep.subr.mxu0 0.0
    %1046 = vmatpush1.msra.mxu0 0.0
    %1047 = vmatprep.subr.mxu0 0.0
    %1048 = vmatpush1.msra.mxu0 %v939
    %1049 = vmatprep.subr.mxu0 0.0
    %1050 = vmatpush1.msra.mxu0 %v938
    %1051 = vmatprep.subr.mxu0 0.0
    %1052 = vmatpush2.msra.mxu0 0.0
    %1053 = vmatprep.subr.mxu0 0.0
    %1054 = vmatpush2.msra.mxu0 0.0
    %1055 = vmatprep.subr.mxu0 0.0
    %1056 = vmatpush2.msra.mxu0 0.0
    %1057 = vmatprep.subr.mxu0 0.0
    %1058 = vmatpush2.msra.mxu0 0.0
    %1059 = vmatprep.subr.mxu0 0.0
    %1060 = vmatpush2.msra.mxu0 0.0
    %1061 = vmatprep.subr.mxu0 0.0
    %1062 = vmatpush2.msra.mxu0 0.0
    %1063 = vmatprep.subr.mxu0 0.0
    %1064 = vmatpush2.msra.mxu0 0.0
    %1065 = vmatprep.subr.mxu0 0.0
    %1066 = vmatpush2.msra.mxu0 0.0
    %1067 = vmatprep.subr.mxu0 0.0
    %1068 = vmatpush2.msra.mxu0 0.0
    %1069 = vmatprep.subr.mxu0 0.0
    %1070 = vmatpush2.msra.mxu0 0.0
    %1071 = vmatprep.subr.mxu0 0.0
    %1072 = vmatpush2.msra.mxu0 0.0
    %1073 = vmatprep.subr.mxu0 0.0
    %1074 = vmatpush2.msra.mxu0 0.0
    %1075 = vmatprep.subr.mxu0 0.0
    %1076 = vmatpush2.msra.mxu0 0.0
    %1077 = vmatprep.subr.mxu0 0.0
    %1078 = vmatpush2.msra.mxu0 0.0
    %1079 = vmatprep.subr.mxu0 0.0
    %1080 = vmatpush2.msra.mxu0 0.0
    %1081 = vmatprep.subr.mxu0 0.0
    %1082 = vmatpush2.msra.mxu0 0.0
    %1083 = vmatprep.mubr.f32.mxu0 0.0
    %1084 = vmatmul.mubr.f32.gmra.mxu0 %v1017
    %v1085 = vpop.f32.mrf.mxu0
    %v1086 = vadd.f32 %v1014, %v1085
    %v1087 = vpop.f32.mrf.mxu0
    %1088 = vdwg.mxu0
    %s1089 = scalar_lea.vmem %s5, 32
    %v1090 = vld [vmem:[%s1089] sm:$0xff]
    %v1091 = vld [vmem:[%s1089 + $0x8] sm:$0xff]
    %v1092 = vrot.slane %v931, 4
    %v1093 = vsel %vm595, %v1092, 0
    %1095 = vmatprep.subr.mxu0 0.0
    %1096 = vmatpush1.msra.mxu0 0.0
    %1097 = vmatprep.subr.mxu0 0.0
    %1098 = vmatpush1.msra.mxu0 0.0
    %1099 = vmatprep.subr.mxu0 0.0
    %1100 = vmatpush1.msra.mxu0 0.0
    %1101 = vmatprep.subr.mxu0 0.0
    %1102 = vmatpush1.msra.mxu0 0.0
    %1103 = vmatprep.subr.mxu0 0.0
    %1104 = vmatpush1.msra.mxu0 0.0
    %1105 = vmatprep.subr.mxu0 0.0
    %1106 = vmatpush1.msra.mxu0 0.0
    %1107 = vmatprep.subr.mxu0 0.0
    %1108 = vmatpush1.msra.mxu0 0.0
    %1109 = vmatprep.subr.mxu0 0.0
    %1110 = vmatpush1.msra.mxu0 0.0
    %1111 = vmatprep.subr.mxu0 0.0
    %1112 = vmatpush1.msra.mxu0 0.0
    %1113 = vmatprep.subr.mxu0 0.0
    %1114 = vmatpush1.msra.mxu0 0.0
    %1115 = vmatprep.subr.mxu0 0.0
    %1116 = vmatpush1.msra.mxu0 0.0
    %1117 = vmatprep.subr.mxu0 0.0
    %1118 = vmatpush1.msra.mxu0 0.0
    %1119 = vmatprep.subr.mxu0 0.0
    %1120 = vmatpush1.msra.mxu0 0.0
    %1121 = vmatprep.subr.mxu0 0.0
    %1122 = vmatpush1.msra.mxu0 0.0
    %1123 = vmatprep.subr.mxu0 0.0
    %1124 = vmatpush1.msra.mxu0 %v1091
    %1125 = vmatprep.subr.mxu0 0.0
    %1126 = vmatpush1.msra.mxu0 %v1090
    %1127 = vmatprep.subr.mxu0 0.0
    %1128 = vmatpush2.msra.mxu0 0.0
    %1129 = vmatprep.subr.mxu0 0.0
    %1130 = vmatpush2.msra.mxu0 0.0
    %1131 = vmatprep.subr.mxu0 0.0
    %1132 = vmatpush2.msra.mxu0 0.0
    %1133 = vmatprep.subr.mxu0 0.0
    %1134 = vmatpush2.msra.mxu0 0.0
    %1135 = vmatprep.subr.mxu0 0.0
    %1136 = vmatpush2.msra.mxu0 0.0
    %1137 = vmatprep.subr.mxu0 0.0
    %1138 = vmatpush2.msra.mxu0 0.0
    %1139 = vmatprep.subr.mxu0 0.0
    %1140 = vmatpush2.msra.mxu0 0.0
    %1141 = vmatprep.subr.mxu0 0.0
    %1142 = vmatpush2.msra.mxu0 0.0
    %1143 = vmatprep.subr.mxu0 0.0
    %1144 = vmatpush2.msra.mxu0 0.0
    %1145 = vmatprep.subr.mxu0 0.0
    %1146 = vmatpush2.msra.mxu0 0.0
    %1147 = vmatprep.subr.mxu0 0.0
    %1148 = vmatpush2.msra.mxu0 0.0
    %1149 = vmatprep.subr.mxu0 0.0
    %1150 = vmatpush2.msra.mxu0 0.0
    %1151 = vmatprep.subr.mxu0 0.0
    %1152 = vmatpush2.msra.mxu0 0.0
    %1153 = vmatprep.subr.mxu0 0.0
    %1154 = vmatpush2.msra.mxu0 0.0
    %1155 = vmatprep.subr.mxu0 0.0
    %1156 = vmatpush2.msra.mxu0 0.0
    %1157 = vmatprep.subr.mxu0 0.0
    %1158 = vmatpush2.msra.mxu0 0.0
    %1159 = vmatprep.mubr.f32.mxu0 0.0
    %1160 = vmatmul.mubr.f32.gmra.mxu0 %v1093
    %v1161 = vpop.f32.mrf.mxu0
    %v1162 = vadd.f32 0.0, %v1161
    %v1163 = vpop.f32.mrf.mxu0
    %1164 = vdwg.mxu0
    %v1165 = vadd.f32 %v1086, %v1162
    %s1166 = scalar_lea.vmem %s5, 48
    %v1167 = vld [vmem:[%s1166] sm:$0xff]
    %v1168 = vld [vmem:[%s1166 + $0x8] sm:$0xff]
    %v1169 = vrot.slane %v931, 6
    %v1170 = vsel %vm595, %v1169, 0
    %1172 = vmatprep.subr.mxu0 0.0
    %1173 = vmatpush1.msra.mxu0 0.0
    %1174 = vmatprep.subr.mxu0 0.0
    %1175 = vmatpush1.msra.mxu0 0.0
    %1176 = vmatprep.subr.mxu0 0.0
    %1177 = vmatpush1.msra.mxu0 0.0
    %1178 = vmatprep.subr.mxu0 0.0
    %1179 = vmatpush1.msra.mxu0 0.0
    %1180 = vmatprep.subr.mxu0 0.0
    %1181 = vmatpush1.msra.mxu0 0.0
    %1182 = vmatprep.subr.mxu0 0.0
    %1183 = vmatpush1.msra.mxu0 0.0
    %1184 = vmatprep.subr.mxu0 0.0
    %1185 = vmatpush1.msra.mxu0 0.0
    %1186 = vmatprep.subr.mxu0 0.0
    %1187 = vmatpush1.msra.mxu0 0.0
    %1188 = vmatprep.subr.mxu0 0.0
    %1189 = vmatpush1.msra.mxu0 0.0
    %1190 = vmatprep.subr.mxu0 0.0
    %1191 = vmatpush1.msra.mxu0 0.0
    %1192 = vmatprep.subr.mxu0 0.0
    %1193 = vmatpush1.msra.mxu0 0.0
    %1194 = vmatprep.subr.mxu0 0.0
    %1195 = vmatpush1.msra.mxu0 0.0
    %1196 = vmatprep.subr.mxu0 0.0
    %1197 = vmatpush1.msra.mxu0 0.0
    %1198 = vmatprep.subr.mxu0 0.0
    %1199 = vmatpush1.msra.mxu0 0.0
    %1200 = vmatprep.subr.mxu0 0.0
    %1201 = vmatpush1.msra.mxu0 %v1168
    %1202 = vmatprep.subr.mxu0 0.0
    %1203 = vmatpush1.msra.mxu0 %v1167
    %1204 = vmatprep.subr.mxu0 0.0
    %1205 = vmatpush2.msra.mxu0 0.0
    %1206 = vmatprep.subr.mxu0 0.0
    %1207 = vmatpush2.msra.mxu0 0.0
    %1208 = vmatprep.subr.mxu0 0.0
    %1209 = vmatpush2.msra.mxu0 0.0
    %1210 = vmatprep.subr.mxu0 0.0
    %1211 = vmatpush2.msra.mxu0 0.0
    %1212 = vmatprep.subr.mxu0 0.0
    %1213 = vmatpush2.msra.mxu0 0.0
    %1214 = vmatprep.subr.mxu0 0.0
    %1215 = vmatpush2.msra.mxu0 0.0
    %1216 = vmatprep.subr.mxu0 0.0
    %1217 = vmatpush2.msra.mxu0 0.0
    %1218 = vmatprep.subr.mxu0 0.0
    %1219 = vmatpush2.msra.mxu0 0.0
    %1220 = vmatprep.subr.mxu0 0.0
    %1221 = vmatpush2.msra.mxu0 0.0
    %1222 = vmatprep.subr.mxu0 0.0
    %1223 = vmatpush2.msra.mxu0 0.0
    %1224 = vmatprep.subr.mxu0 0.0
    %1225 = vmatpush2.msra.mxu0 0.0
    %1226 = vmatprep.subr.mxu0 0.0
    %1227 = vmatpush2.msra.mxu0 0.0
    %1228 = vmatprep.subr.mxu0 0.0
    %1229 = vmatpush2.msra.mxu0 0.0
    %1230 = vmatprep.subr.mxu0 0.0
    %1231 = vmatpush2.msra.mxu0 0.0
    %1232 = vmatprep.subr.mxu0 0.0
    %1233 = vmatpush2.msra.mxu0 0.0
    %1234 = vmatprep.subr.mxu0 0.0
    %1235 = vmatpush2.msra.mxu0 0.0
    %1236 = vmatprep.mubr.f32.mxu0 0.0
    %1237 = vmatmul.mubr.f32.gmra.mxu0 %v1170
    %v1238 = vpop.f32.mrf.mxu0
    %v1239 = vadd.f32 0.0, %v1238
    %v1240 = vpop.f32.mrf.mxu0
    %1241 = vdwg.mxu0
    %v1242 = vadd.f32 %v1165, %v1239
    %s1243 = scalar_lea.vmem %s5, 64
    %v1244 = vld [vmem:[%s1243] sm:$0xff]
    %v1245 = vld [vmem:[%s1243 + $0x8] sm:$0xff]
    %v1247 = vsel %vm595, %v932, 0
    %1249 = vmatprep.subr.mxu0 0.0
    %1250 = vmatpush1.msra.mxu0 0.0
    %1251 = vmatprep.subr.mxu0 0.0
    %1252 = vmatpush1.msra.mxu0 0.0
    %1253 = vmatprep.subr.mxu0 0.0
    %1254 = vmatpush1.msra.mxu0 0.0
    %1255 = vmatprep.subr.mxu0 0.0
    %1256 = vmatpush1.msra.mxu0 0.0
    %1257 = vmatprep.subr.mxu0 0.0
    %1258 = vmatpush1.msra.mxu0 0.0
    %1259 = vmatprep.subr.mxu0 0.0
    %1260 = vmatpush1.msra.mxu0 0.0
    %1261 = vmatprep.subr.mxu0 0.0
    %1262 = vmatpush1.msra.mxu0 0.0
    %1263 = vmatprep.subr.mxu0 0.0
    %1264 = vmatpush1.msra.mxu0 0.0
    %1265 = vmatprep.subr.mxu0 0.0
    %1266 = vmatpush1.msra.mxu0 0.0
    %1267 = vmatprep.subr.mxu0 0.0
    %1268 = vmatpush1.msra.mxu0 0.0
    %1269 = vmatprep.subr.mxu0 0.0
    %1270 = vmatpush1.msra.mxu0 0.0
    %1271 = vmatprep.subr.mxu0 0.0
    %1272 = vmatpush1.msra.mxu0 0.0
    %1273 = vmatprep.subr.mxu0 0.0
    %1274 = vmatpush1.msra.mxu0 0.0
    %1275 = vmatprep.subr.mxu0 0.0
    %1276 = vmatpush1.msra.mxu0 0.0
    %1277 = vmatprep.subr.mxu0 0.0
    %1278 = vmatpush1.msra.mxu0 %v1245
    %1279 = vmatprep.subr.mxu0 0.0
    %1280 = vmatpush1.msra.mxu0 %v1244
    %1281 = vmatprep.subr.mxu0 0.0
    %1282 = vmatpush2.msra.mxu0 0.0
    %1283 = vmatprep.subr.mxu0 0.0
    %1284 = vmatpush2.msra.mxu0 0.0
    %1285 = vmatprep.subr.mxu0 0.0
    %1286 = vmatpush2.msra.mxu0 0.0
    %1287 = vmatprep.subr.mxu0 0.0
    %1288 = vmatpush2.msra.mxu0 0.0
    %1289 = vmatprep.subr.mxu0 0.0
    %1290 = vmatpush2.msra.mxu0 0.0
    %1291 = vmatprep.subr.mxu0 0.0
    %1292 = vmatpush2.msra.mxu0 0.0
    %1293 = vmatprep.subr.mxu0 0.0
    %1294 = vmatpush2.msra.mxu0 0.0
    %1295 = vmatprep.subr.mxu0 0.0
    %1296 = vmatpush2.msra.mxu0 0.0
    %1297 = vmatprep.subr.mxu0 0.0
    %1298 = vmatpush2.msra.mxu0 0.0
    %1299 = vmatprep.subr.mxu0 0.0
    %1300 = vmatpush2.msra.mxu0 0.0
    %1301 = vmatprep.subr.mxu0 0.0
    %1302 = vmatpush2.msra.mxu0 0.0
    %1303 = vmatprep.subr.mxu0 0.0
    %1304 = vmatpush2.msra.mxu0 0.0
    %1305 = vmatprep.subr.mxu0 0.0
    %1306 = vmatpush2.msra.mxu0 0.0
    %1307 = vmatprep.subr.mxu0 0.0
    %1308 = vmatpush2.msra.mxu0 0.0
    %1309 = vmatprep.subr.mxu0 0.0
    %1310 = vmatpush2.msra.mxu0 0.0
    %1311 = vmatprep.subr.mxu0 0.0
    %1312 = vmatpush2.msra.mxu0 0.0
    %1313 = vmatprep.mubr.f32.mxu0 0.0
    %1314 = vmatmul.mubr.f32.gmra.mxu0 %v1247
    %v1315 = vpop.f32.mrf.mxu0
    %v1316 = vadd.f32 0.0, %v1315
    %v1317 = vpop.f32.mrf.mxu0
    %1318 = vdwg.mxu0
    %v1319 = vadd.f32 %v1242, %v1316
    %s1320 = scalar_lea.vmem %s5, 80
    %v1321 = vld [vmem:[%s1320] sm:$0xff]
    %v1322 = vld [vmem:[%s1320 + $0x8] sm:$0xff]
    %v1323 = vrot.slane %v932, 2
    %v1324 = vsel %vm595, %v1323, 0
    %1326 = vmatprep.subr.mxu0 0.0
    %1327 = vmatpush1.msra.mxu0 0.0
    %1328 = vmatprep.subr.mxu0 0.0
    %1329 = vmatpush1.msra.mxu0 0.0
    %1330 = vmatprep.subr.mxu0 0.0
    %1331 = vmatpush1.msra.mxu0 0.0
    %1332 = vmatprep.subr.mxu0 0.0
    %1333 = vmatpush1.msra.mxu0 0.0
    %1334 = vmatprep.subr.mxu0 0.0
    %1335 = vmatpush1.msra.mxu0 0.0
    %1336 = vmatprep.subr.mxu0 0.0
    %1337 = vmatpush1.msra.mxu0 0.0
    %1338 = vmatprep.subr.mxu0 0.0
    %1339 = vmatpush1.msra.mxu0 0.0
    %1340 = vmatprep.subr.mxu0 0.0
    %1341 = vmatpush1.msra.mxu0 0.0
    %1342 = vmatprep.subr.mxu0 0.0
    %1343 = vmatpush1.msra.mxu0 0.0
    %1344 = vmatprep.subr.mxu0 0.0
    %1345 = vmatpush1.msra.mxu0 0.0
    %1346 = vmatprep.subr.mxu0 0.0
    %1347 = vmatpush1.msra.mxu0 0.0
    %1348 = vmatprep.subr.mxu0 0.0
    %1349 = vmatpush1.msra.mxu0 0.0
    %1350 = vmatprep.subr.mxu0 0.0
    %1351 = vmatpush1.msra.mxu0 0.0
    %1352 = vmatprep.subr.mxu0 0.0
    %1353 = vmatpush1.msra.mxu0 0.0
    %1354 = vmatprep.subr.mxu0 0.0
    %1355 = vmatpush1.msra.mxu0 %v1322
    %1356 = vmatprep.subr.mxu0 0.0
    %1357 = vmatpush1.msra.mxu0 %v1321
    %1358 = vmatprep.subr.mxu0 0.0
    %1359 = vmatpush2.msra.mxu0 0.0
    %1360 = vmatprep.subr.mxu0 0.0
    %1361 = vmatpush2.msra.mxu0 0.0
    %1362 = vmatprep.subr.mxu0 0.0
    %1363 = vmatpush2.msra.mxu0 0.0
    %1364 = vmatprep.subr.mxu0 0.0
    %1365 = vmatpush2.msra.mxu0 0.0
    %1366 = vmatprep.subr.mxu0 0.0
    %1367 = vmatpush2.msra.mxu0 0.0
    %1368 = vmatprep.subr.mxu0 0.0
    %1369 = vmatpush2.msra.mxu0 0.0
    %1370 = vmatprep.subr.mxu0 0.0
    %1371 = vmatpush2.msra.mxu0 0.0
    %1372 = vmatprep.subr.mxu0 0.0
    %1373 = vmatpush2.msra.mxu0 0.0
    %1374 = vmatprep.subr.mxu0 0.0
    %1375 = vmatpush2.msra.mxu0 0.0
    %1376 = vmatprep.subr.mxu0 0.0
    %1377 = vmatpush2.msra.mxu0 0.0
    %1378 = vmatprep.subr.mxu0 0.0
    %1379 = vmatpush2.msra.mxu0 0.0
    %1380 = vmatprep.subr.mxu0 0.0
    %1381 = vmatpush2.msra.mxu0 0.0
    %1382 = vmatprep.subr.mxu0 0.0
    %1383 = vmatpush2.msra.mxu0 0.0
    %1384 = vmatprep.subr.mxu0 0.0
    %1385 = vmatpush2.msra.mxu0 0.0
    %1386 = vmatprep.subr.mxu0 0.0
    %1387 = vmatpush2.msra.mxu0 0.0
    %1388 = vmatprep.subr.mxu0 0.0
    %1389 = vmatpush2.msra.mxu0 0.0
    %1390 = vmatprep.mubr.f32.mxu0 0.0
    %1391 = vmatmul.mubr.f32.gmra.mxu0 %v1324
    %v1392 = vpop.f32.mrf.mxu0
    %v1393 = vadd.f32 0.0, %v1392
    %v1394 = vpop.f32.mrf.mxu0
    %1395 = vdwg.mxu0
    %v1396 = vadd.f32 %v1319, %v1393
    %s1397 = scalar_lea.vmem %s5, 96
    %v1398 = vld [vmem:[%s1397] sm:$0xff]
    %v1399 = vld [vmem:[%s1397 + $0x8] sm:$0xff]
    %v1400 = vrot.slane %v932, 4
    %v1401 = vsel %vm595, %v1400, 0
    %1403 = vmatprep.subr.mxu0 0.0
    %1404 = vmatpush1.msra.mxu0 0.0
    %1405 = vmatprep.subr.mxu0 0.0
    %1406 = vmatpush1.msra.mxu0 0.0
    %1407 = vmatprep.subr.mxu0 0.0
    %1408 = vmatpush1.msra.mxu0 0.0
    %1409 = vmatprep.subr.mxu0 0.0
    %1410 = vmatpush1.msra.mxu0 0.0
    %1411 = vmatprep.subr.mxu0 0.0
    %1412 = vmatpush1.msra.mxu0 0.0
    %1413 = vmatprep.subr.mxu0 0.0
    %1414 = vmatpush1.msra.mxu0 0.0
    %1415 = vmatprep.subr.mxu0 0.0
    %1416 = vmatpush1.msra.mxu0 0.0
    %1417 = vmatprep.subr.mxu0 0.0
    %1418 = vmatpush1.msra.mxu0 0.0
    %1419 = vmatprep.subr.mxu0 0.0
    %1420 = vmatpush1.msra.mxu0 0.0
    %1421 = vmatprep.subr.mxu0 0.0
    %1422 = vmatpush1.msra.mxu0 0.0
    %1423 = vmatprep.subr.mxu0 0.0
    %1424 = vmatpush1.msra.mxu0 0.0
    %1425 = vmatprep.subr.mxu0 0.0
    %1426 = vmatpush1.msra.mxu0 0.0
    %1427 = vmatprep.subr.mxu0 0.0
    %1428 = vmatpush1.msra.mxu0 0.0
    %1429 = vmatprep.subr.mxu0 0.0
    %1430 = vmatpush1.msra.mxu0 0.0
    %1431 = vmatprep.subr.mxu0 0.0
    %1432 = vmatpush1.msra.mxu0 %v1399
    %1433 = vmatprep.subr.mxu0 0.0
    %1434 = vmatpush1.msra.mxu0 %v1398
    %1435 = vmatprep.subr.mxu0 0.0
    %1436 = vmatpush2.msra.mxu0 0.0
    %1437 = vmatprep.subr.mxu0 0.0
    %1438 = vmatpush2.msra.mxu0 0.0
    %1439 = vmatprep.subr.mxu0 0.0
    %1440 = vmatpush2.msra.mxu0 0.0
    %1441 = vmatprep.subr.mxu0 0.0
    %1442 = vmatpush2.msra.mxu0 0.0
    %1443 = vmatprep.subr.mxu0 0.0
    %1444 = vmatpush2.msra.mxu0 0.0
    %1445 = vmatprep.subr.mxu0 0.0
    %1446 = vmatpush2.msra.mxu0 0.0
    %1447 = vmatprep.subr.mxu0 0.0
    %1448 = vmatpush2.msra.mxu0 0.0
    %1449 = vmatprep.subr.mxu0 0.0
    %1450 = vmatpush2.msra.mxu0 0.0
    %1451 = vmatprep.subr.mxu0 0.0
    %1452 = vmatpush2.msra.mxu0 0.0
    %1453 = vmatprep.subr.mxu0 0.0
    %1454 = vmatpush2.msra.mxu0 0.0
    %1455 = vmatprep.subr.mxu0 0.0
    %1456 = vmatpush2.msra.mxu0 0.0
    %1457 = vmatprep.subr.mxu0 0.0
    %1458 = vmatpush2.msra.mxu0 0.0
    %1459 = vmatprep.subr.mxu0 0.0
    %1460 = vmatpush2.msra.mxu0 0.0
    %1461 = vmatprep.subr.mxu0 0.0
    %1462 = vmatpush2.msra.mxu0 0.0
    %1463 = vmatprep.subr.mxu0 0.0
    %1464 = vmatpush2.msra.mxu0 0.0
    %1465 = vmatprep.subr.mxu0 0.0
    %1466 = vmatpush2.msra.mxu0 0.0
    %1467 = vmatprep.mubr.f32.mxu0 0.0
    %1468 = vmatmul.mubr.f32.gmra.mxu0 %v1401
    %v1469 = vpop.f32.mrf.mxu0
    %v1470 = vadd.f32 0.0, %v1469
    %v1471 = vpop.f32.mrf.mxu0
    %1472 = vdwg.mxu0
    %v1473 = vadd.f32 %v1396, %v1470
    %s1474 = scalar_lea.vmem %s5, 112
    %v1475 = vld [vmem:[%s1474] sm:$0xff]
    %v1476 = vld [vmem:[%s1474 + $0x8] sm:$0xff]
    %v1477 = vrot.slane %v932, 6
    %v1478 = vsel %vm595, %v1477, 0
    %1480 = vmatprep.subr.mxu0 0.0
    %1481 = vmatpush1.msra.mxu0 0.0
    %1482 = vmatprep.subr.mxu0 0.0
    %1483 = vmatpush1.msra.mxu0 0.0
    %1484 = vmatprep.subr.mxu0 0.0
    %1485 = vmatpush1.msra.mxu0 0.0
    %1486 = vmatprep.subr.mxu0 0.0
    %1487 = vmatpush1.msra.mxu0 0.0
    %1488 = vmatprep.subr.mxu0 0.0
    %1489 = vmatpush1.msra.mxu0 0.0
    %1490 = vmatprep.subr.mxu0 0.0
    %1491 = vmatpush1.msra.mxu0 0.0
    %1492 = vmatprep.subr.mxu0 0.0
    %1493 = vmatpush1.msra.mxu0 0.0
    %1494 = vmatprep.subr.mxu0 0.0
    %1495 = vmatpush1.msra.mxu0 0.0
    %1496 = vmatprep.subr.mxu0 0.0
    %1497 = vmatpush1.msra.mxu0 0.0
    %1498 = vmatprep.subr.mxu0 0.0
    %1499 = vmatpush1.msra.mxu0 0.0
    %1500 = vmatprep.subr.mxu0 0.0
    %1501 = vmatpush1.msra.mxu0 0.0
    %1502 = vmatprep.subr.mxu0 0.0
    %1503 = vmatpush1.msra.mxu0 0.0
    %1504 = vmatprep.subr.mxu0 0.0
    %1505 = vmatpush1.msra.mxu0 0.0
    %1506 = vmatprep.subr.mxu0 0.0
    %1507 = vmatpush1.msra.mxu0 0.0
    %1508 = vmatprep.subr.mxu0 0.0
    %1509 = vmatpush1.msra.mxu0 %v1476
    %1510 = vmatprep.subr.mxu0 0.0
    %1511 = vmatpush1.msra.mxu0 %v1475
    %1512 = vmatprep.subr.mxu0 0.0
    %1513 = vmatpush2.msra.mxu0 0.0
    %1514 = vmatprep.subr.mxu0 0.0
    %1515 = vmatpush2.msra.mxu0 0.0
    %1516 = vmatprep.subr.mxu0 0.0
    %1517 = vmatpush2.msra.mxu0 0.0
    %1518 = vmatprep.subr.mxu0 0.0
    %1519 = vmatpush2.msra.mxu0 0.0
    %1520 = vmatprep.subr.mxu0 0.0
    %1521 = vmatpush2.msra.mxu0 0.0
    %1522 = vmatprep.subr.mxu0 0.0
    %1523 = vmatpush2.msra.mxu0 0.0
    %1524 = vmatprep.subr.mxu0 0.0
    %1525 = vmatpush2.msra.mxu0 0.0
    %1526 = vmatprep.subr.mxu0 0.0
    %1527 = vmatpush2.msra.mxu0 0.0
    %1528 = vmatprep.subr.mxu0 0.0
    %1529 = vmatpush2.msra.mxu0 0.0
    %1530 = vmatprep.subr.mxu0 0.0
    %1531 = vmatpush2.msra.mxu0 0.0
    %1532 = vmatprep.subr.mxu0 0.0
    %1533 = vmatpush2.msra.mxu0 0.0
    %1534 = vmatprep.subr.mxu0 0.0
    %1535 = vmatpush2.msra.mxu0 0.0
    %1536 = vmatprep.subr.mxu0 0.0
    %1537 = vmatpush2.msra.mxu0 0.0
    %1538 = vmatprep.subr.mxu0 0.0
    %1539 = vmatpush2.msra.mxu0 0.0
    %1540 = vmatprep.subr.mxu0 0.0
    %1541 = vmatpush2.msra.mxu0 0.0
    %1542 = vmatprep.subr.mxu0 0.0
    %1543 = vmatpush2.msra.mxu0 0.0
    %1544 = vmatprep.mubr.f32.mxu0 0.0
    %1545 = vmatmul.mubr.f32.gmra.mxu0 %v1478
    %v1546 = vpop.f32.mrf.mxu0
    %v1547 = vadd.f32 0.0, %v1546
    %v1548 = vpop.f32.mrf.mxu0
    %1549 = vdwg.mxu0
    %v1550 = vadd.f32 %v1473, %v1547
    %s1551 = scalar_lea.vmem %s5, 128
    %v1552 = vld [vmem:[%s1551] sm:$0xff]
    %v1553 = vld [vmem:[%s1551 + $0x8] sm:$0xff]
    %v1555 = vsel %vm595, %v933, 0
    %1557 = vmatprep.subr.mxu0 0.0
    %1558 = vmatpush1.msra.mxu0 0.0
    %1559 = vmatprep.subr.mxu0 0.0
    %1560 = vmatpush1.msra.mxu0 0.0
    %1561 = vmatprep.subr.mxu0 0.0
    %1562 = vmatpush1.msra.mxu0 0.0
    %1563 = vmatprep.subr.mxu0 0.0
    %1564 = vmatpush1.msra.mxu0 0.0
    %1565 = vmatprep.subr.mxu0 0.0
    %1566 = vmatpush1.msra.mxu0 0.0
    %1567 = vmatprep.subr.mxu0 0.0
    %1568 = vmatpush1.msra.mxu0 0.0
    %1569 = vmatprep.subr.mxu0 0.0
    %1570 = vmatpush1.msra.mxu0 0.0
    %1571 = vmatprep.subr.mxu0 0.0
    %1572 = vmatpush1.msra.mxu0 0.0
    %1573 = vmatprep.subr.mxu0 0.0
    %1574 = vmatpush1.msra.mxu0 0.0
    %1575 = vmatprep.subr.mxu0 0.0
    %1576 = vmatpush1.msra.mxu0 0.0
    %1577 = vmatprep.subr.mxu0 0.0
    %1578 = vmatpush1.msra.mxu0 0.0
    %1579 = vmatprep.subr.mxu0 0.0
    %1580 = vmatpush1.msra.mxu0 0.0
    %1581 = vmatprep.subr.mxu0 0.0
    %1582 = vmatpush1.msra.mxu0 0.0
    %1583 = vmatprep.subr.mxu0 0.0
    %1584 = vmatpush1.msra.mxu0 0.0
    %1585 = vmatprep.subr.mxu0 0.0
    %1586 = vmatpush1.msra.mxu0 %v1553
    %1587 = vmatprep.subr.mxu0 0.0
    %1588 = vmatpush1.msra.mxu0 %v1552
    %1589 = vmatprep.subr.mxu0 0.0
    %1590 = vmatpush2.msra.mxu0 0.0
    %1591 = vmatprep.subr.mxu0 0.0
    %1592 = vmatpush2.msra.mxu0 0.0
    %1593 = vmatprep.subr.mxu0 0.0
    %1594 = vmatpush2.msra.mxu0 0.0
    %1595 = vmatprep.subr.mxu0 0.0
    %1596 = vmatpush2.msra.mxu0 0.0
    %1597 = vmatprep.subr.mxu0 0.0
    %1598 = vmatpush2.msra.mxu0 0.0
    %1599 = vmatprep.subr.mxu0 0.0
    %1600 = vmatpush2.msra.mxu0 0.0
    %1601 = vmatprep.subr.mxu0 0.0
    %1602 = vmatpush2.msra.mxu0 0.0
    %1603 = vmatprep.subr.mxu0 0.0
    %1604 = vmatpush2.msra.mxu0 0.0
    %1605 = vmatprep.subr.mxu0 0.0
    %1606 = vmatpush2.msra.mxu0 0.0
    %1607 = vmatprep.subr.mxu0 0.0
    %1608 = vmatpush2.msra.mxu0 0.0
    %1609 = vmatprep.subr.mxu0 0.0
    %1610 = vmatpush2.msra.mxu0 0.0
    %1611 = vmatprep.subr.mxu0 0.0
    %1612 = vmatpush2.msra.mxu0 0.0
    %1613 = vmatprep.subr.mxu0 0.0
    %1614 = vmatpush2.msra.mxu0 0.0
    %1615 = vmatprep.subr.mxu0 0.0
    %1616 = vmatpush2.msra.mxu0 0.0
    %1617 = vmatprep.subr.mxu0 0.0
    %1618 = vmatpush2.msra.mxu0 0.0
    %1619 = vmatprep.subr.mxu0 0.0
    %1620 = vmatpush2.msra.mxu0 0.0
    %1621 = vmatprep.mubr.f32.mxu0 0.0
    %1622 = vmatmul.mubr.f32.gmra.mxu0 %v1555
    %v1623 = vpop.f32.mrf.mxu0
    %v1624 = vadd.f32 0.0, %v1623
    %v1625 = vpop.f32.mrf.mxu0
    %1626 = vdwg.mxu0
    %v1627 = vadd.f32 %v1550, %v1624
    %s1628 = scalar_lea.vmem %s5, 144
    %v1629 = vld [vmem:[%s1628] sm:$0xff]
    %v1630 = vld [vmem:[%s1628 + $0x8] sm:$0xff]
    %v1631 = vrot.slane %v933, 2
    %v1632 = vsel %vm595, %v1631, 0
    %1634 = vmatprep.subr.mxu0 0.0
    %1635 = vmatpush1.msra.mxu0 0.0
    %1636 = vmatprep.subr.mxu0 0.0
    %1637 = vmatpush1.msra.mxu0 0.0
    %1638 = vmatprep.subr.mxu0 0.0
    %1639 = vmatpush1.msra.mxu0 0.0
    %1640 = vmatprep.subr.mxu0 0.0
    %1641 = vmatpush1.msra.mxu0 0.0
    %1642 = vmatprep.subr.mxu0 0.0
    %1643 = vmatpush1.msra.mxu0 0.0
    %1644 = vmatprep.subr.mxu0 0.0
    %1645 = vmatpush1.msra.mxu0 0.0
    %1646 = vmatprep.subr.mxu0 0.0
    %1647 = vmatpush1.msra.mxu0 0.0
    %1648 = vmatprep.subr.mxu0 0.0
    %1649 = vmatpush1.msra.mxu0 0.0
    %1650 = vmatprep.subr.mxu0 0.0
    %1651 = vmatpush1.msra.mxu0 0.0
    %1652 = vmatprep.subr.mxu0 0.0
    %1653 = vmatpush1.msra.mxu0 0.0
    %1654 = vmatprep.subr.mxu0 0.0
    %1655 = vmatpush1.msra.mxu0 0.0
    %1656 = vmatprep.subr.mxu0 0.0
    %1657 = vmatpush1.msra.mxu0 0.0
    %1658 = vmatprep.subr.mxu0 0.0
    %1659 = vmatpush1.msra.mxu0 0.0
    %1660 = vmatprep.subr.mxu0 0.0
    %1661 = vmatpush1.msra.mxu0 0.0
    %1662 = vmatprep.subr.mxu0 0.0
    %1663 = vmatpush1.msra.mxu0 %v1630
    %1664 = vmatprep.subr.mxu0 0.0
    %1665 = vmatpush1.msra.mxu0 %v1629
    %1666 = vmatprep.subr.mxu0 0.0
    %1667 = vmatpush2.msra.mxu0 0.0
    %1668 = vmatprep.subr.mxu0 0.0
    %1669 = vmatpush2.msra.mxu0 0.0
    %1670 = vmatprep.subr.mxu0 0.0
    %1671 = vmatpush2.msra.mxu0 0.0
    %1672 = vmatprep.subr.mxu0 0.0
    %1673 = vmatpush2.msra.mxu0 0.0
    %1674 = vmatprep.subr.mxu0 0.0
    %1675 = vmatpush2.msra.mxu0 0.0
    %1676 = vmatprep.subr.mxu0 0.0
    %1677 = vmatpush2.msra.mxu0 0.0
    %1678 = vmatprep.subr.mxu0 0.0
    %1679 = vmatpush2.msra.mxu0 0.0
    %1680 = vmatprep.subr.mxu0 0.0
    %1681 = vmatpush2.msra.mxu0 0.0
    %1682 = vmatprep.subr.mxu0 0.0
    %1683 = vmatpush2.msra.mxu0 0.0
    %1684 = vmatprep.subr.mxu0 0.0
    %1685 = vmatpush2.msra.mxu0 0.0
    %1686 = vmatprep.subr.mxu0 0.0
    %1687 = vmatpush2.msra.mxu0 0.0
    %1688 = vmatprep.subr.mxu0 0.0
    %1689 = vmatpush2.msra.mxu0 0.0
    %1690 = vmatprep.subr.mxu0 0.0
    %1691 = vmatpush2.msra.mxu0 0.0
    %1692 = vmatprep.subr.mxu0 0.0
    %1693 = vmatpush2.msra.mxu0 0.0
    %1694 = vmatprep.subr.mxu0 0.0
    %1695 = vmatpush2.msra.mxu0 0.0
    %1696 = vmatprep.subr.mxu0 0.0
    %1697 = vmatpush2.msra.mxu0 0.0
    %1698 = vmatprep.mubr.f32.mxu0 0.0
    %1699 = vmatmul.mubr.f32.gmra.mxu0 %v1632
    %v1700 = vpop.f32.mrf.mxu0
    %v1701 = vadd.f32 0.0, %v1700
    %v1702 = vpop.f32.mrf.mxu0
    %1703 = vdwg.mxu0
    %v1704 = vadd.f32 %v1627, %v1701
    %s1705 = scalar_lea.vmem %s5, 160
    %v1706 = vld [vmem:[%s1705] sm:$0xff]
    %v1707 = vld [vmem:[%s1705 + $0x8] sm:$0xff]
    %v1708 = vrot.slane %v933, 4
    %v1709 = vsel %vm595, %v1708, 0
    %1711 = vmatprep.subr.mxu0 0.0
    %1712 = vmatpush1.msra.mxu0 0.0
    %1713 = vmatprep.subr.mxu0 0.0
    %1714 = vmatpush1.msra.mxu0 0.0
    %1715 = vmatprep.subr.mxu0 0.0
    %1716 = vmatpush1.msra.mxu0 0.0
    %1717 = vmatprep.subr.mxu0 0.0
    %1718 = vmatpush1.msra.mxu0 0.0
    %1719 = vmatprep.subr.mxu0 0.0
    %1720 = vmatpush1.msra.mxu0 0.0
    %1721 = vmatprep.subr.mxu0 0.0
    %1722 = vmatpush1.msra.mxu0 0.0
    %1723 = vmatprep.subr.mxu0 0.0
    %1724 = vmatpush1.msra.mxu0 0.0
    %1725 = vmatprep.subr.mxu0 0.0
    %1726 = vmatpush1.msra.mxu0 0.0
    %1727 = vmatprep.subr.mxu0 0.0
    %1728 = vmatpush1.msra.mxu0 0.0
    %1729 = vmatprep.subr.mxu0 0.0
    %1730 = vmatpush1.msra.mxu0 0.0
    %1731 = vmatprep.subr.mxu0 0.0
    %1732 = vmatpush1.msra.mxu0 0.0
    %1733 = vmatprep.subr.mxu0 0.0
    %1734 = vmatpush1.msra.mxu0 0.0
    %1735 = vmatprep.subr.mxu0 0.0
    %1736 = vmatpush1.msra.mxu0 0.0
    %1737 = vmatprep.subr.mxu0 0.0
    %1738 = vmatpush1.msra.mxu0 0.0
    %1739 = vmatprep.subr.mxu0 0.0
    %1740 = vmatpush1.msra.mxu0 %v1707
    %1741 = vmatprep.subr.mxu0 0.0
    %1742 = vmatpush1.msra.mxu0 %v1706
    %1743 = vmatprep.subr.mxu0 0.0
    %1744 = vmatpush2.msra.mxu0 0.0
    %1745 = vmatprep.subr.mxu0 0.0
    %1746 = vmatpush2.msra.mxu0 0.0
    %1747 = vmatprep.subr.mxu0 0.0
    %1748 = vmatpush2.msra.mxu0 0.0
    %1749 = vmatprep.subr.mxu0 0.0
    %1750 = vmatpush2.msra.mxu0 0.0
    %1751 = vmatprep.subr.mxu0 0.0
    %1752 = vmatpush2.msra.mxu0 0.0
    %1753 = vmatprep.subr.mxu0 0.0
    %1754 = vmatpush2.msra.mxu0 0.0
    %1755 = vmatprep.subr.mxu0 0.0
    %1756 = vmatpush2.msra.mxu0 0.0
    %1757 = vmatprep.subr.mxu0 0.0
    %1758 = vmatpush2.msra.mxu0 0.0
    %1759 = vmatprep.subr.mxu0 0.0
    %1760 = vmatpush2.msra.mxu0 0.0
    %1761 = vmatprep.subr.mxu0 0.0
    %1762 = vmatpush2.msra.mxu0 0.0
    %1763 = vmatprep.subr.mxu0 0.0
    %1764 = vmatpush2.msra.mxu0 0.0
    %1765 = vmatprep.subr.mxu0 0.0
    %1766 = vmatpush2.msra.mxu0 0.0
    %1767 = vmatprep.subr.mxu0 0.0
    %1768 = vmatpush2.msra.mxu0 0.0
    %1769 = vmatprep.subr.mxu0 0.0
    %1770 = vmatpush2.msra.mxu0 0.0
    %1771 = vmatprep.subr.mxu0 0.0
    %1772 = vmatpush2.msra.mxu0 0.0
    %1773 = vmatprep.subr.mxu0 0.0
    %1774 = vmatpush2.msra.mxu0 0.0
    %1775 = vmatprep.mubr.f32.mxu0 0.0
    %1776 = vmatmul.mubr.f32.gmra.mxu0 %v1709
    %v1777 = vpop.f32.mrf.mxu0
    %v1778 = vadd.f32 0.0, %v1777
    %v1779 = vpop.f32.mrf.mxu0
    %1780 = vdwg.mxu0
    %v1781 = vadd.f32 %v1704, %v1778
    %s1782 = scalar_lea.vmem %s5, 176
    %v1783 = vld [vmem:[%s1782] sm:$0xff]
    %v1784 = vld [vmem:[%s1782 + $0x8] sm:$0xff]
    %v1785 = vrot.slane %v933, 6
    %v1786 = vsel %vm595, %v1785, 0
    %1788 = vmatprep.subr.mxu0 0.0
    %1789 = vmatpush1.msra.mxu0 0.0
    %1790 = vmatprep.subr.mxu0 0.0
    %1791 = vmatpush1.msra.mxu0 0.0
    %1792 = vmatprep.subr.mxu0 0.0
    %1793 = vmatpush1.msra.mxu0 0.0
    %1794 = vmatprep.subr.mxu0 0.0
    %1795 = vmatpush1.msra.mxu0 0.0
    %1796 = vmatprep.subr.mxu0 0.0
    %1797 = vmatpush1.msra.mxu0 0.0
    %1798 = vmatprep.subr.mxu0 0.0
    %1799 = vmatpush1.msra.mxu0 0.0
    %1800 = vmatprep.subr.mxu0 0.0
    %1801 = vmatpush1.msra.mxu0 0.0
    %1802 = vmatprep.subr.mxu0 0.0
    %1803 = vmatpush1.msra.mxu0 0.0
    %1804 = vmatprep.subr.mxu0 0.0
    %1805 = vmatpush1.msra.mxu0 0.0
    %1806 = vmatprep.subr.mxu0 0.0
    %1807 = vmatpush1.msra.mxu0 0.0
    %1808 = vmatprep.subr.mxu0 0.0
    %1809 = vmatpush1.msra.mxu0 0.0
    %1810 = vmatprep.subr.mxu0 0.0
    %1811 = vmatpush1.msra.mxu0 0.0
    %1812 = vmatprep.subr.mxu0 0.0
    %1813 = vmatpush1.msra.mxu0 0.0
    %1814 = vmatprep.subr.mxu0 0.0
    %1815 = vmatpush1.msra.mxu0 0.0
    %1816 = vmatprep.subr.mxu0 0.0
    %1817 = vmatpush1.msra.mxu0 %v1784
    %1818 = vmatprep.subr.mxu0 0.0
    %1819 = vmatpush1.msra.mxu0 %v1783
    %1820 = vmatprep.subr.mxu0 0.0
    %1821 = vmatpush2.msra.mxu0 0.0
    %1822 = vmatprep.subr.mxu0 0.0
    %1823 = vmatpush2.msra.mxu0 0.0
    %1824 = vmatprep.subr.mxu0 0.0
    %1825 = vmatpush2.msra.mxu0 0.0
    %1826 = vmatprep.subr.mxu0 0.0
    %1827 = vmatpush2.msra.mxu0 0.0
    %1828 = vmatprep.subr.mxu0 0.0
    %1829 = vmatpush2.msra.mxu0 0.0
    %1830 = vmatprep.subr.mxu0 0.0
    %1831 = vmatpush2.msra.mxu0 0.0
    %1832 = vmatprep.subr.mxu0 0.0
    %1833 = vmatpush2.msra.mxu0 0.0
    %1834 = vmatprep.subr.mxu0 0.0
    %1835 = vmatpush2.msra.mxu0 0.0
    %1836 = vmatprep.subr.mxu0 0.0
    %1837 = vmatpush2.msra.mxu0 0.0
    %1838 = vmatprep.subr.mxu0 0.0
    %1839 = vmatpush2.msra.mxu0 0.0
    %1840 = vmatprep.subr.mxu0 0.0
    %1841 = vmatpush2.msra.mxu0 0.0
    %1842 = vmatprep.subr.mxu0 0.0
    %1843 = vmatpush2.msra.mxu0 0.0
    %1844 = vmatprep.subr.mxu0 0.0
    %1845 = vmatpush2.msra.mxu0 0.0
    %1846 = vmatprep.subr.mxu0 0.0
    %1847 = vmatpush2.msra.mxu0 0.0
    %1848 = vmatprep.subr.mxu0 0.0
    %1849 = vmatpush2.msra.mxu0 0.0
    %1850 = vmatprep.subr.mxu0 0.0
    %1851 = vmatpush2.msra.mxu0 0.0
    %1852 = vmatprep.mubr.f32.mxu0 0.0
    %1853 = vmatmul.mubr.f32.gmra.mxu0 %v1786
    %v1854 = vpop.f32.mrf.mxu0
    %v1855 = vadd.f32 0.0, %v1854
    %v1856 = vpop.f32.mrf.mxu0
    %1857 = vdwg.mxu0
    %v1858 = vadd.f32 %v1781, %v1855
    %s1859 = scalar_lea.vmem %s5, 192
    %v1860 = vld [vmem:[%s1859] sm:$0xff]
    %v1861 = vld [vmem:[%s1859 + $0x8] sm:$0xff]
    %v1863 = vsel %vm595, %v934, 0
    %1865 = vmatprep.subr.mxu0 0.0
    %1866 = vmatpush1.msra.mxu0 0.0
    %1867 = vmatprep.subr.mxu0 0.0
    %1868 = vmatpush1.msra.mxu0 0.0
    %1869 = vmatprep.subr.mxu0 0.0
    %1870 = vmatpush1.msra.mxu0 0.0
    %1871 = vmatprep.subr.mxu0 0.0
    %1872 = vmatpush1.msra.mxu0 0.0
    %1873 = vmatprep.subr.mxu0 0.0
    %1874 = vmatpush1.msra.mxu0 0.0
    %1875 = vmatprep.subr.mxu0 0.0
    %1876 = vmatpush1.msra.mxu0 0.0
    %1877 = vmatprep.subr.mxu0 0.0
    %1878 = vmatpush1.msra.mxu0 0.0
    %1879 = vmatprep.subr.mxu0 0.0
    %1880 = vmatpush1.msra.mxu0 0.0
    %1881 = vmatprep.subr.mxu0 0.0
    %1882 = vmatpush1.msra.mxu0 0.0
    %1883 = vmatprep.subr.mxu0 0.0
    %1884 = vmatpush1.msra.mxu0 0.0
    %1885 = vmatprep.subr.mxu0 0.0
    %1886 = vmatpush1.msra.mxu0 0.0
    %1887 = vmatprep.subr.mxu0 0.0
    %1888 = vmatpush1.msra.mxu0 0.0
    %1889 = vmatprep.subr.mxu0 0.0
    %1890 = vmatpush1.msra.mxu0 0.0
    %1891 = vmatprep.subr.mxu0 0.0
    %1892 = vmatpush1.msra.mxu0 0.0
    %1893 = vmatprep.subr.mxu0 0.0
    %1894 = vmatpush1.msra.mxu0 %v1861
    %1895 = vmatprep.subr.mxu0 0.0
    %1896 = vmatpush1.msra.mxu0 %v1860
    %1897 = vmatprep.subr.mxu0 0.0
    %1898 = vmatpush2.msra.mxu0 0.0
    %1899 = vmatprep.subr.mxu0 0.0
    %1900 = vmatpush2.msra.mxu0 0.0
    %1901 = vmatprep.subr.mxu0 0.0
    %1902 = vmatpush2.msra.mxu0 0.0
    %1903 = vmatprep.subr.mxu0 0.0
    %1904 = vmatpush2.msra.mxu0 0.0
    %1905 = vmatprep.subr.mxu0 0.0
    %1906 = vmatpush2.msra.mxu0 0.0
    %1907 = vmatprep.subr.mxu0 0.0
    %1908 = vmatpush2.msra.mxu0 0.0
    %1909 = vmatprep.subr.mxu0 0.0
    %1910 = vmatpush2.msra.mxu0 0.0
    %1911 = vmatprep.subr.mxu0 0.0
    %1912 = vmatpush2.msra.mxu0 0.0
    %1913 = vmatprep.subr.mxu0 0.0
    %1914 = vmatpush2.msra.mxu0 0.0
    %1915 = vmatprep.subr.mxu0 0.0
    %1916 = vmatpush2.msra.mxu0 0.0
    %1917 = vmatprep.subr.mxu0 0.0
    %1918 = vmatpush2.msra.mxu0 0.0
    %1919 = vmatprep.subr.mxu0 0.0
    %1920 = vmatpush2.msra.mxu0 0.0
    %1921 = vmatprep.subr.mxu0 0.0
    %1922 = vmatpush2.msra.mxu0 0.0
    %1923 = vmatprep.subr.mxu0 0.0
    %1924 = vmatpush2.msra.mxu0 0.0
    %1925 = vmatprep.subr.mxu0 0.0
    %1926 = vmatpush2.msra.mxu0 0.0
    %1927 = vmatprep.subr.mxu0 0.0
    %1928 = vmatpush2.msra.mxu0 0.0
    %1929 = vmatprep.mubr.f32.mxu0 0.0
    %1930 = vmatmul.mubr.f32.gmra.mxu0 %v1863
    %v1931 = vpop.f32.mrf.mxu0
    %v1932 = vadd.f32 0.0, %v1931
    %v1933 = vpop.f32.mrf.mxu0
    %1934 = vdwg.mxu0
    %v1935 = vadd.f32 %v1858, %v1932
    %s1936 = scalar_lea.vmem %s5, 208
    %v1937 = vld [vmem:[%s1936] sm:$0xff]
    %v1938 = vld [vmem:[%s1936 + $0x8] sm:$0xff]
    %v1939 = vrot.slane %v934, 2
    %v1940 = vsel %vm595, %v1939, 0
    %1942 = vmatprep.subr.mxu0 0.0
    %1943 = vmatpush1.msra.mxu0 0.0
    %1944 = vmatprep.subr.mxu0 0.0
    %1945 = vmatpush1.msra.mxu0 0.0
    %1946 = vmatprep.subr.mxu0 0.0
    %1947 = vmatpush1.msra.mxu0 0.0
    %1948 = vmatprep.subr.mxu0 0.0
    %1949 = vmatpush1.msra.mxu0 0.0
    %1950 = vmatprep.subr.mxu0 0.0
    %1951 = vmatpush1.msra.mxu0 0.0
    %1952 = vmatprep.subr.mxu0 0.0
    %1953 = vmatpush1.msra.mxu0 0.0
    %1954 = vmatprep.subr.mxu0 0.0
    %1955 = vmatpush1.msra.mxu0 0.0
    %1956 = vmatprep.subr.mxu0 0.0
    %1957 = vmatpush1.msra.mxu0 0.0
    %1958 = vmatprep.subr.mxu0 0.0
    %1959 = vmatpush1.msra.mxu0 0.0
    %1960 = vmatprep.subr.mxu0 0.0
    %1961 = vmatpush1.msra.mxu0 0.0
    %1962 = vmatprep.subr.mxu0 0.0
    %1963 = vmatpush1.msra.mxu0 0.0
    %1964 = vmatprep.subr.mxu0 0.0
    %1965 = vmatpush1.msra.mxu0 0.0
    %1966 = vmatprep.subr.mxu0 0.0
    %1967 = vmatpush1.msra.mxu0 0.0
    %1968 = vmatprep.subr.mxu0 0.0
    %1969 = vmatpush1.msra.mxu0 0.0
    %1970 = vmatprep.subr.mxu0 0.0
    %1971 = vmatpush1.msra.mxu0 %v1938
    %1972 = vmatprep.subr.mxu0 0.0
    %1973 = vmatpush1.msra.mxu0 %v1937
    %1974 = vmatprep.subr.mxu0 0.0
    %1975 = vmatpush2.msra.mxu0 0.0
    %1976 = vmatprep.subr.mxu0 0.0
    %1977 = vmatpush2.msra.mxu0 0.0
    %1978 = vmatprep.subr.mxu0 0.0
    %1979 = vmatpush2.msra.mxu0 0.0
    %1980 = vmatprep.subr.mxu0 0.0
    %1981 = vmatpush2.msra.mxu0 0.0
    %1982 = vmatprep.subr.mxu0 0.0
    %1983 = vmatpush2.msra.mxu0 0.0
    %1984 = vmatprep.subr.mxu0 0.0
    %1985 = vmatpush2.msra.mxu0 0.0
    %1986 = vmatprep.subr.mxu0 0.0
    %1987 = vmatpush2.msra.mxu0 0.0
    %1988 = vmatprep.subr.mxu0 0.0
    %1989 = vmatpush2.msra.mxu0 0.0
    %1990 = vmatprep.subr.mxu0 0.0
    %1991 = vmatpush2.msra.mxu0 0.0
    %1992 = vmatprep.subr.mxu0 0.0
    %1993 = vmatpush2.msra.mxu0 0.0
    %1994 = vmatprep.subr.mxu0 0.0
    %1995 = vmatpush2.msra.mxu0 0.0
    %1996 = vmatprep.subr.mxu0 0.0
    %1997 = vmatpush2.msra.mxu0 0.0
    %1998 = vmatprep.subr.mxu0 0.0
    %1999 = vmatpush2.msra.mxu0 0.0
    %2000 = vmatprep.subr.mxu0 0.0
    %2001 = vmatpush2.msra.mxu0 0.0
    %2002 = vmatprep.subr.mxu0 0.0
    %2003 = vmatpush2.msra.mxu0 0.0
    %2004 = vmatprep.subr.mxu0 0.0
    %2005 = vmatpush2.msra.mxu0 0.0
    %2006 = vmatprep.mubr.f32.mxu0 0.0
    %2007 = vmatmul.mubr.f32.gmra.mxu0 %v1940
    %v2008 = vpop.f32.mrf.mxu0
    %v2009 = vadd.f32 0.0, %v2008
    %v2010 = vpop.f32.mrf.mxu0
    %2011 = vdwg.mxu0
    %v2012 = vadd.f32 %v1935, %v2009
    %s2013 = scalar_lea.vmem %s5, 224
    %v2014 = vld [vmem:[%s2013] sm:$0xff]
    %v2015 = vld [vmem:[%s2013 + $0x8] sm:$0xff]
    %v2016 = vrot.slane %v934, 4
    %v2017 = vsel %vm595, %v2016, 0
    %2019 = vmatprep.subr.mxu0 0.0
    %2020 = vmatpush1.msra.mxu0 0.0
    %2021 = vmatprep.subr.mxu0 0.0
    %2022 = vmatpush1.msra.mxu0 0.0
    %2023 = vmatprep.subr.mxu0 0.0
    %2024 = vmatpush1.msra.mxu0 0.0
    %2025 = vmatprep.subr.mxu0 0.0
    %2026 = vmatpush1.msra.mxu0 0.0
    %2027 = vmatprep.subr.mxu0 0.0
    %2028 = vmatpush1.msra.mxu0 0.0
    %2029 = vmatprep.subr.mxu0 0.0
    %2030 = vmatpush1.msra.mxu0 0.0
    %2031 = vmatprep.subr.mxu0 0.0
    %2032 = vmatpush1.msra.mxu0 0.0
    %2033 = vmatprep.subr.mxu0 0.0
    %2034 = vmatpush1.msra.mxu0 0.0
    %2035 = vmatprep.subr.mxu0 0.0
    %2036 = vmatpush1.msra.mxu0 0.0
    %2037 = vmatprep.subr.mxu0 0.0
    %2038 = vmatpush1.msra.mxu0 0.0
    %2039 = vmatprep.subr.mxu0 0.0
    %2040 = vmatpush1.msra.mxu0 0.0
    %2041 = vmatprep.subr.mxu0 0.0
    %2042 = vmatpush1.msra.mxu0 0.0
    %2043 = vmatprep.subr.mxu0 0.0
    %2044 = vmatpush1.msra.mxu0 0.0
    %2045 = vmatprep.subr.mxu0 0.0
    %2046 = vmatpush1.msra.mxu0 0.0
    %2047 = vmatprep.subr.mxu0 0.0
    %2048 = vmatpush1.msra.mxu0 %v2015
    %2049 = vmatprep.subr.mxu0 0.0
    %2050 = vmatpush1.msra.mxu0 %v2014
    %2051 = vmatprep.subr.mxu0 0.0
    %2052 = vmatpush2.msra.mxu0 0.0
    %2053 = vmatprep.subr.mxu0 0.0
    %2054 = vmatpush2.msra.mxu0 0.0
    %2055 = vmatprep.subr.mxu0 0.0
    %2056 = vmatpush2.msra.mxu0 0.0
    %2057 = vmatprep.subr.mxu0 0.0
    %2058 = vmatpush2.msra.mxu0 0.0
    %2059 = vmatprep.subr.mxu0 0.0
    %2060 = vmatpush2.msra.mxu0 0.0
    %2061 = vmatprep.subr.mxu0 0.0
    %2062 = vmatpush2.msra.mxu0 0.0
    %2063 = vmatprep.subr.mxu0 0.0
    %2064 = vmatpush2.msra.mxu0 0.0
    %2065 = vmatprep.subr.mxu0 0.0
    %2066 = vmatpush2.msra.mxu0 0.0
    %2067 = vmatprep.subr.mxu0 0.0
    %2068 = vmatpush2.msra.mxu0 0.0
    %2069 = vmatprep.subr.mxu0 0.0
    %2070 = vmatpush2.msra.mxu0 0.0
    %2071 = vmatprep.subr.mxu0 0.0
    %2072 = vmatpush2.msra.mxu0 0.0
    %2073 = vmatprep.subr.mxu0 0.0
    %2074 = vmatpush2.msra.mxu0 0.0
    %2075 = vmatprep.subr.mxu0 0.0
    %2076 = vmatpush2.msra.mxu0 0.0
    %2077 = vmatprep.subr.mxu0 0.0
    %2078 = vmatpush2.msra.mxu0 0.0
    %2079 = vmatprep.subr.mxu0 0.0
    %2080 = vmatpush2.msra.mxu0 0.0
    %2081 = vmatprep.subr.mxu0 0.0
    %2082 = vmatpush2.msra.mxu0 0.0
    %2083 = vmatprep.mubr.f32.mxu0 0.0
    %2084 = vmatmul.mubr.f32.gmra.mxu0 %v2017
    %v2085 = vpop.f32.mrf.mxu0
    %v2086 = vadd.f32 0.0, %v2085
    %v2087 = vpop.f32.mrf.mxu0
    %2088 = vdwg.mxu0
    %v2089 = vadd.f32 %v2012, %v2086
    %s2090 = scalar_lea.vmem %s5, 240
    %v2091 = vld [vmem:[%s2090] sm:$0xff]
    %v2092 = vld [vmem:[%s2090 + $0x8] sm:$0xff]
    %v2093 = vrot.slane %v934, 6
    %v2094 = vsel %vm595, %v2093, 0
    %2096 = vmatprep.subr.mxu0 0.0
    %2097 = vmatpush1.msra.mxu0 0.0
    %2098 = vmatprep.subr.mxu0 0.0
    %2099 = vmatpush1.msra.mxu0 0.0
    %2100 = vmatprep.subr.mxu0 0.0
    %2101 = vmatpush1.msra.mxu0 0.0
    %2102 = vmatprep.subr.mxu0 0.0
    %2103 = vmatpush1.msra.mxu0 0.0
    %2104 = vmatprep.subr.mxu0 0.0
    %2105 = vmatpush1.msra.mxu0 0.0
    %2106 = vmatprep.subr.mxu0 0.0
    %2107 = vmatpush1.msra.mxu0 0.0
    %2108 = vmatprep.subr.mxu0 0.0
    %2109 = vmatpush1.msra.mxu0 0.0
    %2110 = vmatprep.subr.mxu0 0.0
    %2111 = vmatpush1.msra.mxu0 0.0
    %2112 = vmatprep.subr.mxu0 0.0
    %2113 = vmatpush1.msra.mxu0 0.0
    %2114 = vmatprep.subr.mxu0 0.0
    %2115 = vmatpush1.msra.mxu0 0.0
    %2116 = vmatprep.subr.mxu0 0.0
    %2117 = vmatpush1.msra.mxu0 0.0
    %2118 = vmatprep.subr.mxu0 0.0
    %2119 = vmatpush1.msra.mxu0 0.0
    %2120 = vmatprep.subr.mxu0 0.0
    %2121 = vmatpush1.msra.mxu0 0.0
    %2122 = vmatprep.subr.mxu0 0.0
    %2123 = vmatpush1.msra.mxu0 0.0
    %2124 = vmatprep.subr.mxu0 0.0
    %2125 = vmatpush1.msra.mxu0 %v2092
    %2126 = vmatprep.subr.mxu0 0.0
    %2127 = vmatpush1.msra.mxu0 %v2091
    %2128 = vmatprep.subr.mxu0 0.0
    %2129 = vmatpush2.msra.mxu0 0.0
    %2130 = vmatprep.subr.mxu0 0.0
    %2131 = vmatpush2.msra.mxu0 0.0
    %2132 = vmatprep.subr.mxu0 0.0
    %2133 = vmatpush2.msra.mxu0 0.0
    %2134 = vmatprep.subr.mxu0 0.0
    %2135 = vmatpush2.msra.mxu0 0.0
    %2136 = vmatprep.subr.mxu0 0.0
    %2137 = vmatpush2.msra.mxu0 0.0
    %2138 = vmatprep.subr.mxu0 0.0
    %2139 = vmatpush2.msra.mxu0 0.0
    %2140 = vmatprep.subr.mxu0 0.0
    %2141 = vmatpush2.msra.mxu0 0.0
    %2142 = vmatprep.subr.mxu0 0.0
    %2143 = vmatpush2.msra.mxu0 0.0
    %2144 = vmatprep.subr.mxu0 0.0
    %2145 = vmatpush2.msra.mxu0 0.0
    %2146 = vmatprep.subr.mxu0 0.0
    %2147 = vmatpush2.msra.mxu0 0.0
    %2148 = vmatprep.subr.mxu0 0.0
    %2149 = vmatpush2.msra.mxu0 0.0
    %2150 = vmatprep.subr.mxu0 0.0
    %2151 = vmatpush2.msra.mxu0 0.0
    %2152 = vmatprep.subr.mxu0 0.0
    %2153 = vmatpush2.msra.mxu0 0.0
    %2154 = vmatprep.subr.mxu0 0.0
    %2155 = vmatpush2.msra.mxu0 0.0
    %2156 = vmatprep.subr.mxu0 0.0
    %2157 = vmatpush2.msra.mxu0 0.0
    %2158 = vmatprep.subr.mxu0 0.0
    %2159 = vmatpush2.msra.mxu0 0.0
    %2160 = vmatprep.mubr.f32.mxu0 0.0
    %2161 = vmatmul.mubr.f32.gmra.mxu0 %v2094
    %v2162 = vpop.f32.mrf.mxu0
    %v2163 = vadd.f32 0.0, %v2162
    %v2164 = vpop.f32.mrf.mxu0
    %2165 = vdwg.mxu0
    %v2166 = vadd.f32 %v2089, %v2163
    %s2167 = scalar_lea.vmem %s5, 256
    %v2168 = vld [vmem:[%s2167] sm:$0xff]
    %v2169 = vld [vmem:[%s2167 + $0x8] sm:$0xff]
    %v2171 = vsel %vm595, %v935, 0
    %2173 = vmatprep.subr.mxu0 0.0
    %2174 = vmatpush1.msra.mxu0 0.0
    %2175 = vmatprep.subr.mxu0 0.0
    %2176 = vmatpush1.msra.mxu0 0.0
    %2177 = vmatprep.subr.mxu0 0.0
    %2178 = vmatpush1.msra.mxu0 0.0
    %2179 = vmatprep.subr.mxu0 0.0
    %2180 = vmatpush1.msra.mxu0 0.0
    %2181 = vmatprep.subr.mxu0 0.0
    %2182 = vmatpush1.msra.mxu0 0.0
    %2183 = vmatprep.subr.mxu0 0.0
    %2184 = vmatpush1.msra.mxu0 0.0
    %2185 = vmatprep.subr.mxu0 0.0
    %2186 = vmatpush1.msra.mxu0 0.0
    %2187 = vmatprep.subr.mxu0 0.0
    %2188 = vmatpush1.msra.mxu0 0.0
    %2189 = vmatprep.subr.mxu0 0.0
    %2190 = vmatpush1.msra.mxu0 0.0
    %2191 = vmatprep.subr.mxu0 0.0
    %2192 = vmatpush1.msra.mxu0 0.0
    %2193 = vmatprep.subr.mxu0 0.0
    %2194 = vmatpush1.msra.mxu0 0.0
    %2195 = vmatprep.subr.mxu0 0.0
    %2196 = vmatpush1.msra.mxu0 0.0
    %2197 = vmatprep.subr.mxu0 0.0
    %2198 = vmatpush1.msra.mxu0 0.0
    %2199 = vmatprep.subr.mxu0 0.0
    %2200 = vmatpush1.msra.mxu0 0.0
    %2201 = vmatprep.subr.mxu0 0.0
    %2202 = vmatpush1.msra.mxu0 %v2169
    %2203 = vmatprep.subr.mxu0 0.0
    %2204 = vmatpush1.msra.mxu0 %v2168
    %2205 = vmatprep.subr.mxu0 0.0
    %2206 = vmatpush2.msra.mxu0 0.0
    %2207 = vmatprep.subr.mxu0 0.0
    %2208 = vmatpush2.msra.mxu0 0.0
    %2209 = vmatprep.subr.mxu0 0.0
    %2210 = vmatpush2.msra.mxu0 0.0
    %2211 = vmatprep.subr.mxu0 0.0
    %2212 = vmatpush2.msra.mxu0 0.0
    %2213 = vmatprep.subr.mxu0 0.0
    %2214 = vmatpush2.msra.mxu0 0.0
    %2215 = vmatprep.subr.mxu0 0.0
    %2216 = vmatpush2.msra.mxu0 0.0
    %2217 = vmatprep.subr.mxu0 0.0
    %2218 = vmatpush2.msra.mxu0 0.0
    %2219 = vmatprep.subr.mxu0 0.0
    %2220 = vmatpush2.msra.mxu0 0.0
    %2221 = vmatprep.subr.mxu0 0.0
    %2222 = vmatpush2.msra.mxu0 0.0
    %2223 = vmatprep.subr.mxu0 0.0
    %2224 = vmatpush2.msra.mxu0 0.0
    %2225 = vmatprep.subr.mxu0 0.0
    %2226 = vmatpush2.msra.mxu0 0.0
    %2227 = vmatprep.subr.mxu0 0.0
    %2228 = vmatpush2.msra.mxu0 0.0
    %2229 = vmatprep.subr.mxu0 0.0
    %2230 = vmatpush2.msra.mxu0 0.0
    %2231 = vmatprep.subr.mxu0 0.0
    %2232 = vmatpush2.msra.mxu0 0.0
    %2233 = vmatprep.subr.mxu0 0.0
    %2234 = vmatpush2.msra.mxu0 0.0
    %2235 = vmatprep.subr.mxu0 0.0
    %2236 = vmatpush2.msra.mxu0 0.0
    %2237 = vmatprep.mubr.f32.mxu0 0.0
    %2238 = vmatmul.mubr.f32.gmra.mxu0 %v2171
    %v2239 = vpop.f32.mrf.mxu0
    %v2240 = vadd.f32 0.0, %v2239
    %v2241 = vpop.f32.mrf.mxu0
    %2242 = vdwg.mxu0
    %v2243 = vadd.f32 %v2166, %v2240
    %s2244 = scalar_lea.vmem %s5, 272
    %v2245 = vld [vmem:[%s2244] sm:$0xff]
    %v2246 = vld [vmem:[%s2244 + $0x8] sm:$0xff]
    %v2247 = vrot.slane %v935, 2
    %v2248 = vsel %vm595, %v2247, 0
    %2250 = vmatprep.subr.mxu0 0.0
    %2251 = vmatpush1.msra.mxu0 0.0
    %2252 = vmatprep.subr.mxu0 0.0
    %2253 = vmatpush1.msra.mxu0 0.0
    %2254 = vmatprep.subr.mxu0 0.0
    %2255 = vmatpush1.msra.mxu0 0.0
    %2256 = vmatprep.subr.mxu0 0.0
    %2257 = vmatpush1.msra.mxu0 0.0
    %2258 = vmatprep.subr.mxu0 0.0
    %2259 = vmatpush1.msra.mxu0 0.0
    %2260 = vmatprep.subr.mxu0 0.0
    %2261 = vmatpush1.msra.mxu0 0.0
    %2262 = vmatprep.subr.mxu0 0.0
    %2263 = vmatpush1.msra.mxu0 0.0
    %2264 = vmatprep.subr.mxu0 0.0
    %2265 = vmatpush1.msra.mxu0 0.0
    %2266 = vmatprep.subr.mxu0 0.0
    %2267 = vmatpush1.msra.mxu0 0.0
    %2268 = vmatprep.subr.mxu0 0.0
    %2269 = vmatpush1.msra.mxu0 0.0
    %2270 = vmatprep.subr.mxu0 0.0
    %2271 = vmatpush1.msra.mxu0 0.0
    %2272 = vmatprep.subr.mxu0 0.0
    %2273 = vmatpush1.msra.mxu0 0.0
    %2274 = vmatprep.subr.mxu0 0.0
    %2275 = vmatpush1.msra.mxu0 0.0
    %2276 = vmatprep.subr.mxu0 0.0
    %2277 = vmatpush1.msra.mxu0 0.0
    %2278 = vmatprep.subr.mxu0 0.0
    %2279 = vmatpush1.msra.mxu0 %v2246
    %2280 = vmatprep.subr.mxu0 0.0
    %2281 = vmatpush1.msra.mxu0 %v2245
    %2282 = vmatprep.subr.mxu0 0.0
    %2283 = vmatpush2.msra.mxu0 0.0
    %2284 = vmatprep.subr.mxu0 0.0
    %2285 = vmatpush2.msra.mxu0 0.0
    %2286 = vmatprep.subr.mxu0 0.0
    %2287 = vmatpush2.msra.mxu0 0.0
    %2288 = vmatprep.subr.mxu0 0.0
    %2289 = vmatpush2.msra.mxu0 0.0
    %2290 = vmatprep.subr.mxu0 0.0
    %2291 = vmatpush2.msra.mxu0 0.0
    %2292 = vmatprep.subr.mxu0 0.0
    %2293 = vmatpush2.msra.mxu0 0.0
    %2294 = vmatprep.subr.mxu0 0.0
    %2295 = vmatpush2.msra.mxu0 0.0
    %2296 = vmatprep.subr.mxu0 0.0
    %2297 = vmatpush2.msra.mxu0 0.0
    %2298 = vmatprep.subr.mxu0 0.0
    %2299 = vmatpush2.msra.mxu0 0.0
    %2300 = vmatprep.subr.mxu0 0.0
    %2301 = vmatpush2.msra.mxu0 0.0
    %2302 = vmatprep.subr.mxu0 0.0
    %2303 = vmatpush2.msra.mxu0 0.0
    %2304 = vmatprep.subr.mxu0 0.0
    %2305 = vmatpush2.msra.mxu0 0.0
    %2306 = vmatprep.subr.mxu0 0.0
    %2307 = vmatpush2.msra.mxu0 0.0
    %2308 = vmatprep.subr.mxu0 0.0
    %2309 = vmatpush2.msra.mxu0 0.0
    %2310 = vmatprep.subr.mxu0 0.0
    %2311 = vmatpush2.msra.mxu0 0.0
    %2312 = vmatprep.subr.mxu0 0.0
    %2313 = vmatpush2.msra.mxu0 0.0
    %2314 = vmatprep.mubr.f32.mxu0 0.0
    %2315 = vmatmul.mubr.f32.gmra.mxu0 %v2248
    %v2316 = vpop.f32.mrf.mxu0
    %v2317 = vadd.f32 0.0, %v2316
    %v2318 = vpop.f32.mrf.mxu0
    %2319 = vdwg.mxu0
    %v2320 = vadd.f32 %v2243, %v2317
    %s2321 = scalar_lea.vmem %s5, 288
    %v2322 = vld [vmem:[%s2321] sm:$0xff]
    %v2323 = vld [vmem:[%s2321 + $0x8] sm:$0xff]
    %v2324 = vrot.slane %v935, 4
    %v2325 = vsel %vm595, %v2324, 0
    %2327 = vmatprep.subr.mxu0 0.0
    %2328 = vmatpush1.msra.mxu0 0.0
    %2329 = vmatprep.subr.mxu0 0.0
    %2330 = vmatpush1.msra.mxu0 0.0
    %2331 = vmatprep.subr.mxu0 0.0
    %2332 = vmatpush1.msra.mxu0 0.0
    %2333 = vmatprep.subr.mxu0 0.0
    %2334 = vmatpush1.msra.mxu0 0.0
    %2335 = vmatprep.subr.mxu0 0.0
    %2336 = vmatpush1.msra.mxu0 0.0
    %2337 = vmatprep.subr.mxu0 0.0
    %2338 = vmatpush1.msra.mxu0 0.0
    %2339 = vmatprep.subr.mxu0 0.0
    %2340 = vmatpush1.msra.mxu0 0.0
    %2341 = vmatprep.subr.mxu0 0.0
    %2342 = vmatpush1.msra.mxu0 0.0
    %2343 = vmatprep.subr.mxu0 0.0
    %2344 = vmatpush1.msra.mxu0 0.0
    %2345 = vmatprep.subr.mxu0 0.0
    %2346 = vmatpush1.msra.mxu0 0.0
    %2347 = vmatprep.subr.mxu0 0.0
    %2348 = vmatpush1.msra.mxu0 0.0
    %2349 = vmatprep.subr.mxu0 0.0
    %2350 = vmatpush1.msra.mxu0 0.0
    %2351 = vmatprep.subr.mxu0 0.0
    %2352 = vmatpush1.msra.mxu0 0.0
    %2353 = vmatprep.subr.mxu0 0.0
    %2354 = vmatpush1.msra.mxu0 0.0
    %2355 = vmatprep.subr.mxu0 0.0
    %2356 = vmatpush1.msra.mxu0 %v2323
    %2357 = vmatprep.subr.mxu0 0.0
    %2358 = vmatpush1.msra.mxu0 %v2322
    %2359 = vmatprep.subr.mxu0 0.0
    %2360 = vmatpush2.msra.mxu0 0.0
    %2361 = vmatprep.subr.mxu0 0.0
    %2362 = vmatpush2.msra.mxu0 0.0
    %2363 = vmatprep.subr.mxu0 0.0
    %2364 = vmatpush2.msra.mxu0 0.0
    %2365 = vmatprep.subr.mxu0 0.0
    %2366 = vmatpush2.msra.mxu0 0.0
    %2367 = vmatprep.subr.mxu0 0.0
    %2368 = vmatpush2.msra.mxu0 0.0
    %2369 = vmatprep.subr.mxu0 0.0
    %2370 = vmatpush2.msra.mxu0 0.0
    %2371 = vmatprep.subr.mxu0 0.0
    %2372 = vmatpush2.msra.mxu0 0.0
    %2373 = vmatprep.subr.mxu0 0.0
    %2374 = vmatpush2.msra.mxu0 0.0
    %2375 = vmatprep.subr.mxu0 0.0
    %2376 = vmatpush2.msra.mxu0 0.0
    %2377 = vmatprep.subr.mxu0 0.0
    %2378 = vmatpush2.msra.mxu0 0.0
    %2379 = vmatprep.subr.mxu0 0.0
    %2380 = vmatpush2.msra.mxu0 0.0
    %2381 = vmatprep.subr.mxu0 0.0
    %2382 = vmatpush2.msra.mxu0 0.0
    %2383 = vmatprep.subr.mxu0 0.0
    %2384 = vmatpush2.msra.mxu0 0.0
    %2385 = vmatprep.subr.mxu0 0.0
    %2386 = vmatpush2.msra.mxu0 0.0
    %2387 = vmatprep.subr.mxu0 0.0
    %2388 = vmatpush2.msra.mxu0 0.0
    %2389 = vmatprep.subr.mxu0 0.0
    %2390 = vmatpush2.msra.mxu0 0.0
    %2391 = vmatprep.mubr.f32.mxu0 0.0
    %2392 = vmatmul.mubr.f32.gmra.mxu0 %v2325
    %v2393 = vpop.f32.mrf.mxu0
    %v2394 = vadd.f32 0.0, %v2393
    %v2395 = vpop.f32.mrf.mxu0
    %2396 = vdwg.mxu0
    %v2397 = vadd.f32 %v2320, %v2394
    %s2398 = scalar_lea.vmem %s5, 304
    %v2399 = vld [vmem:[%s2398] sm:$0xff]
    %v2400 = vld [vmem:[%s2398 + $0x8] sm:$0xff]
    %v2401 = vrot.slane %v935, 6
    %v2402 = vsel %vm595, %v2401, 0
    %2404 = vmatprep.subr.mxu0 0.0
    %2405 = vmatpush1.msra.mxu0 0.0
    %2406 = vmatprep.subr.mxu0 0.0
    %2407 = vmatpush1.msra.mxu0 0.0
    %2408 = vmatprep.subr.mxu0 0.0
    %2409 = vmatpush1.msra.mxu0 0.0
    %2410 = vmatprep.subr.mxu0 0.0
    %2411 = vmatpush1.msra.mxu0 0.0
    %2412 = vmatprep.subr.mxu0 0.0
    %2413 = vmatpush1.msra.mxu0 0.0
    %2414 = vmatprep.subr.mxu0 0.0
    %2415 = vmatpush1.msra.mxu0 0.0
    %2416 = vmatprep.subr.mxu0 0.0
    %2417 = vmatpush1.msra.mxu0 0.0
    %2418 = vmatprep.subr.mxu0 0.0
    %2419 = vmatpush1.msra.mxu0 0.0
    %2420 = vmatprep.subr.mxu0 0.0
    %2421 = vmatpush1.msra.mxu0 0.0
    %2422 = vmatprep.subr.mxu0 0.0
    %2423 = vmatpush1.msra.mxu0 0.0
    %2424 = vmatprep.subr.mxu0 0.0
    %2425 = vmatpush1.msra.mxu0 0.0
    %2426 = vmatprep.subr.mxu0 0.0
    %2427 = vmatpush1.msra.mxu0 0.0
    %2428 = vmatprep.subr.mxu0 0.0
    %2429 = vmatpush1.msra.mxu0 0.0
    %2430 = vmatprep.subr.mxu0 0.0
    %2431 = vmatpush1.msra.mxu0 0.0
    %2432 = vmatprep.subr.mxu0 0.0
    %2433 = vmatpush1.msra.mxu0 %v2400
    %2434 = vmatprep.subr.mxu0 0.0
    %2435 = vmatpush1.msra.mxu0 %v2399
    %2436 = vmatprep.subr.mxu0 0.0
    %2437 = vmatpush2.msra.mxu0 0.0
    %2438 = vmatprep.subr.mxu0 0.0
    %2439 = vmatpush2.msra.mxu0 0.0
    %2440 = vmatprep.subr.mxu0 0.0
    %2441 = vmatpush2.msra.mxu0 0.0
    %2442 = vmatprep.subr.mxu0 0.0
    %2443 = vmatpush2.msra.mxu0 0.0
    %2444 = vmatprep.subr.mxu0 0.0
    %2445 = vmatpush2.msra.mxu0 0.0
    %2446 = vmatprep.subr.mxu0 0.0
    %2447 = vmatpush2.msra.mxu0 0.0
    %2448 = vmatprep.subr.mxu0 0.0
    %2449 = vmatpush2.msra.mxu0 0.0
    %2450 = vmatprep.subr.mxu0 0.0
    %2451 = vmatpush2.msra.mxu0 0.0
    %2452 = vmatprep.subr.mxu0 0.0
    %2453 = vmatpush2.msra.mxu0 0.0
    %2454 = vmatprep.subr.mxu0 0.0
    %2455 = vmatpush2.msra.mxu0 0.0
    %2456 = vmatprep.subr.mxu0 0.0
    %2457 = vmatpush2.msra.mxu0 0.0
    %2458 = vmatprep.subr.mxu0 0.0
    %2459 = vmatpush2.msra.mxu0 0.0
    %2460 = vmatprep.subr.mxu0 0.0
    %2461 = vmatpush2.msra.mxu0 0.0
    %2462 = vmatprep.subr.mxu0 0.0
    %2463 = vmatpush2.msra.mxu0 0.0
    %2464 = vmatprep.subr.mxu0 0.0
    %2465 = vmatpush2.msra.mxu0 0.0
    %2466 = vmatprep.subr.mxu0 0.0
    %2467 = vmatpush2.msra.mxu0 0.0
    %2468 = vmatprep.mubr.f32.mxu0 0.0
    %2469 = vmatmul.mubr.f32.gmra.mxu0 %v2402
    %v2470 = vpop.f32.mrf.mxu0
    %v2471 = vadd.f32 0.0, %v2470
    %v2472 = vpop.f32.mrf.mxu0
    %2473 = vdwg.mxu0
    %v2474 = vadd.f32 %v2397, %v2471
    %s2475 = scalar_lea.vmem %s5, 320
    %v2476 = vld [vmem:[%s2475] sm:$0xff]
    %v2477 = vld [vmem:[%s2475 + $0x8] sm:$0xff]
    %v2479 = vsel %vm595, %v936, 0
    %2481 = vmatprep.subr.mxu0 0.0
    %2482 = vmatpush1.msra.mxu0 0.0
    %2483 = vmatprep.subr.mxu0 0.0
    %2484 = vmatpush1.msra.mxu0 0.0
    %2485 = vmatprep.subr.mxu0 0.0
    %2486 = vmatpush1.msra.mxu0 0.0
    %2487 = vmatprep.subr.mxu0 0.0
    %2488 = vmatpush1.msra.mxu0 0.0
    %2489 = vmatprep.subr.mxu0 0.0
    %2490 = vmatpush1.msra.mxu0 0.0
    %2491 = vmatprep.subr.mxu0 0.0
    %2492 = vmatpush1.msra.mxu0 0.0
    %2493 = vmatprep.subr.mxu0 0.0
    %2494 = vmatpush1.msra.mxu0 0.0
    %2495 = vmatprep.subr.mxu0 0.0
    %2496 = vmatpush1.msra.mxu0 0.0
    %2497 = vmatprep.subr.mxu0 0.0
    %2498 = vmatpush1.msra.mxu0 0.0
    %2499 = vmatprep.subr.mxu0 0.0
    %2500 = vmatpush1.msra.mxu0 0.0
    %2501 = vmatprep.subr.mxu0 0.0
    %2502 = vmatpush1.msra.mxu0 0.0
    %2503 = vmatprep.subr.mxu0 0.0
    %2504 = vmatpush1.msra.mxu0 0.0
    %2505 = vmatprep.subr.mxu0 0.0
    %2506 = vmatpush1.msra.mxu0 0.0
    %2507 = vmatprep.subr.mxu0 0.0
    %2508 = vmatpush1.msra.mxu0 0.0
    %2509 = vmatprep.subr.mxu0 0.0
    %2510 = vmatpush1.msra.mxu0 %v2477
    %2511 = vmatprep.subr.mxu0 0.0
    %2512 = vmatpush1.msra.mxu0 %v2476
    %2513 = vmatprep.subr.mxu0 0.0
    %2514 = vmatpush2.msra.mxu0 0.0
    %2515 = vmatprep.subr.mxu0 0.0
    %2516 = vmatpush2.msra.mxu0 0.0
    %2517 = vmatprep.subr.mxu0 0.0
    %2518 = vmatpush2.msra.mxu0 0.0
    %2519 = vmatprep.subr.mxu0 0.0
    %2520 = vmatpush2.msra.mxu0 0.0
    %2521 = vmatprep.subr.mxu0 0.0
    %2522 = vmatpush2.msra.mxu0 0.0
    %2523 = vmatprep.subr.mxu0 0.0
    %2524 = vmatpush2.msra.mxu0 0.0
    %2525 = vmatprep.subr.mxu0 0.0
    %2526 = vmatpush2.msra.mxu0 0.0
    %2527 = vmatprep.subr.mxu0 0.0
    %2528 = vmatpush2.msra.mxu0 0.0
    %2529 = vmatprep.subr.mxu0 0.0
    %2530 = vmatpush2.msra.mxu0 0.0
    %2531 = vmatprep.subr.mxu0 0.0
    %2532 = vmatpush2.msra.mxu0 0.0
    %2533 = vmatprep.subr.mxu0 0.0
    %2534 = vmatpush2.msra.mxu0 0.0
    %2535 = vmatprep.subr.mxu0 0.0
    %2536 = vmatpush2.msra.mxu0 0.0
    %2537 = vmatprep.subr.mxu0 0.0
    %2538 = vmatpush2.msra.mxu0 0.0
    %2539 = vmatprep.subr.mxu0 0.0
    %2540 = vmatpush2.msra.mxu0 0.0
    %2541 = vmatprep.subr.mxu0 0.0
    %2542 = vmatpush2.msra.mxu0 0.0
    %2543 = vmatprep.subr.mxu0 0.0
    %2544 = vmatpush2.msra.mxu0 0.0
    %2545 = vmatprep.mubr.f32.mxu0 0.0
    %2546 = vmatmul.mubr.f32.gmra.mxu0 %v2479
    %v2547 = vpop.f32.mrf.mxu0
    %v2548 = vadd.f32 0.0, %v2547
    %v2549 = vpop.f32.mrf.mxu0
    %2550 = vdwg.mxu0
    %v2551 = vadd.f32 %v2474, %v2548
    %s2552 = scalar_lea.vmem %s5, 336
    %v2553 = vld [vmem:[%s2552] sm:$0xff]
    %v2554 = vld [vmem:[%s2552 + $0x8] sm:$0xff]
    %v2555 = vrot.slane %v936, 2
    %v2556 = vsel %vm595, %v2555, 0
    %2558 = vmatprep.subr.mxu0 0.0
    %2559 = vmatpush1.msra.mxu0 0.0
    %2560 = vmatprep.subr.mxu0 0.0
    %2561 = vmatpush1.msra.mxu0 0.0
    %2562 = vmatprep.subr.mxu0 0.0
    %2563 = vmatpush1.msra.mxu0 0.0
    %2564 = vmatprep.subr.mxu0 0.0
    %2565 = vmatpush1.msra.mxu0 0.0
    %2566 = vmatprep.subr.mxu0 0.0
    %2567 = vmatpush1.msra.mxu0 0.0
    %2568 = vmatprep.subr.mxu0 0.0
    %2569 = vmatpush1.msra.mxu0 0.0
    %2570 = vmatprep.subr.mxu0 0.0
    %2571 = vmatpush1.msra.mxu0 0.0
    %2572 = vmatprep.subr.mxu0 0.0
    %2573 = vmatpush1.msra.mxu0 0.0
    %2574 = vmatprep.subr.mxu0 0.0
    %2575 = vmatpush1.msra.mxu0 0.0
    %2576 = vmatprep.subr.mxu0 0.0
    %2577 = vmatpush1.msra.mxu0 0.0
    %2578 = vmatprep.subr.mxu0 0.0
    %2579 = vmatpush1.msra.mxu0 0.0
    %2580 = vmatprep.subr.mxu0 0.0
    %2581 = vmatpush1.msra.mxu0 0.0
    %2582 = vmatprep.subr.mxu0 0.0
    %2583 = vmatpush1.msra.mxu0 0.0
    %2584 = vmatprep.subr.mxu0 0.0
    %2585 = vmatpush1.msra.mxu0 0.0
    %2586 = vmatprep.subr.mxu0 0.0
    %2587 = vmatpush1.msra.mxu0 %v2554
    %2588 = vmatprep.subr.mxu0 0.0
    %2589 = vmatpush1.msra.mxu0 %v2553
    %2590 = vmatprep.subr.mxu0 0.0
    %2591 = vmatpush2.msra.mxu0 0.0
    %2592 = vmatprep.subr.mxu0 0.0
    %2593 = vmatpush2.msra.mxu0 0.0
    %2594 = vmatprep.subr.mxu0 0.0
    %2595 = vmatpush2.msra.mxu0 0.0
    %2596 = vmatprep.subr.mxu0 0.0
    %2597 = vmatpush2.msra.mxu0 0.0
    %2598 = vmatprep.subr.mxu0 0.0
    %2599 = vmatpush2.msra.mxu0 0.0
    %2600 = vmatprep.subr.mxu0 0.0
    %2601 = vmatpush2.msra.mxu0 0.0
    %2602 = vmatprep.subr.mxu0 0.0
    %2603 = vmatpush2.msra.mxu0 0.0
    %2604 = vmatprep.subr.mxu0 0.0
    %2605 = vmatpush2.msra.mxu0 0.0
    %2606 = vmatprep.subr.mxu0 0.0
    %2607 = vmatpush2.msra.mxu0 0.0
    %2608 = vmatprep.subr.mxu0 0.0
    %2609 = vmatpush2.msra.mxu0 0.0
    %2610 = vmatprep.subr.mxu0 0.0
    %2611 = vmatpush2.msra.mxu0 0.0
    %2612 = vmatprep.subr.mxu0 0.0
    %2613 = vmatpush2.msra.mxu0 0.0
    %2614 = vmatprep.subr.mxu0 0.0
    %2615 = vmatpush2.msra.mxu0 0.0
    %2616 = vmatprep.subr.mxu0 0.0
    %2617 = vmatpush2.msra.mxu0 0.0
    %2618 = vmatprep.subr.mxu0 0.0
    %2619 = vmatpush2.msra.mxu0 0.0
    %2620 = vmatprep.subr.mxu0 0.0
    %2621 = vmatpush2.msra.mxu0 0.0
    %2622 = vmatprep.mubr.f32.mxu0 0.0
    %2623 = vmatmul.mubr.f32.gmra.mxu0 %v2556
    %v2624 = vpop.f32.mrf.mxu0
    %v2625 = vadd.f32 0.0, %v2624
    %v2626 = vpop.f32.mrf.mxu0
    %2627 = vdwg.mxu0
    %v2628 = vadd.f32 %v2551, %v2625
    %s2629 = scalar_lea.vmem %s5, 352
    %v2630 = vld [vmem:[%s2629] sm:$0xff]
    %v2631 = vld [vmem:[%s2629 + $0x8] sm:$0xff]
    %v2632 = vrot.slane %v936, 4
    %v2633 = vsel %vm595, %v2632, 0
    %2635 = vmatprep.subr.mxu0 0.0
    %2636 = vmatpush1.msra.mxu0 0.0
    %2637 = vmatprep.subr.mxu0 0.0
    %2638 = vmatpush1.msra.mxu0 0.0
    %2639 = vmatprep.subr.mxu0 0.0
    %2640 = vmatpush1.msra.mxu0 0.0
    %2641 = vmatprep.subr.mxu0 0.0
    %2642 = vmatpush1.msra.mxu0 0.0
    %2643 = vmatprep.subr.mxu0 0.0
    %2644 = vmatpush1.msra.mxu0 0.0
    %2645 = vmatprep.subr.mxu0 0.0
    %2646 = vmatpush1.msra.mxu0 0.0
    %2647 = vmatprep.subr.mxu0 0.0
    %2648 = vmatpush1.msra.mxu0 0.0
    %2649 = vmatprep.subr.mxu0 0.0
    %2650 = vmatpush1.msra.mxu0 0.0
    %2651 = vmatprep.subr.mxu0 0.0
    %2652 = vmatpush1.msra.mxu0 0.0
    %2653 = vmatprep.subr.mxu0 0.0
    %2654 = vmatpush1.msra.mxu0 0.0
    %2655 = vmatprep.subr.mxu0 0.0
    %2656 = vmatpush1.msra.mxu0 0.0
    %2657 = vmatprep.subr.mxu0 0.0
    %2658 = vmatpush1.msra.mxu0 0.0
    %2659 = vmatprep.subr.mxu0 0.0
    %2660 = vmatpush1.msra.mxu0 0.0
    %2661 = vmatprep.subr.mxu0 0.0
    %2662 = vmatpush1.msra.mxu0 0.0
    %2663 = vmatprep.subr.mxu0 0.0
    %2664 = vmatpush1.msra.mxu0 %v2631
    %2665 = vmatprep.subr.mxu0 0.0
    %2666 = vmatpush1.msra.mxu0 %v2630
    %2667 = vmatprep.subr.mxu0 0.0
    %2668 = vmatpush2.msra.mxu0 0.0
    %2669 = vmatprep.subr.mxu0 0.0
    %2670 = vmatpush2.msra.mxu0 0.0
    %2671 = vmatprep.subr.mxu0 0.0
    %2672 = vmatpush2.msra.mxu0 0.0
    %2673 = vmatprep.subr.mxu0 0.0
    %2674 = vmatpush2.msra.mxu0 0.0
    %2675 = vmatprep.subr.mxu0 0.0
    %2676 = vmatpush2.msra.mxu0 0.0
    %2677 = vmatprep.subr.mxu0 0.0
    %2678 = vmatpush2.msra.mxu0 0.0
    %2679 = vmatprep.subr.mxu0 0.0
    %2680 = vmatpush2.msra.mxu0 0.0
    %2681 = vmatprep.subr.mxu0 0.0
    %2682 = vmatpush2.msra.mxu0 0.0
    %2683 = vmatprep.subr.mxu0 0.0
    %2684 = vmatpush2.msra.mxu0 0.0
    %2685 = vmatprep.subr.mxu0 0.0
    %2686 = vmatpush2.msra.mxu0 0.0
    %2687 = vmatprep.subr.mxu0 0.0
    %2688 = vmatpush2.msra.mxu0 0.0
    %2689 = vmatprep.subr.mxu0 0.0
    %2690 = vmatpush2.msra.mxu0 0.0
    %2691 = vmatprep.subr.mxu0 0.0
    %2692 = vmatpush2.msra.mxu0 0.0
    %2693 = vmatprep.subr.mxu0 0.0
    %2694 = vmatpush2.msra.mxu0 0.0
    %2695 = vmatprep.subr.mxu0 0.0
    %2696 = vmatpush2.msra.mxu0 0.0
    %2697 = vmatprep.subr.mxu0 0.0
    %2698 = vmatpush2.msra.mxu0 0.0
    %2699 = vmatprep.mubr.f32.mxu0 0.0
    %2700 = vmatmul.mubr.f32.gmra.mxu0 %v2633
    %v2701 = vpop.f32.mrf.mxu0
    %v2702 = vadd.f32 0.0, %v2701
    %v2703 = vpop.f32.mrf.mxu0
    %2704 = vdwg.mxu0
    %v2705 = vadd.f32 %v2628, %v2702
    %s2706 = scalar_lea.vmem %s5, 368
    %v2707 = vld [vmem:[%s2706] sm:$0xff]
    %v2708 = vld [vmem:[%s2706 + $0x8] sm:$0xff]
    %v2709 = vrot.slane %v936, 6
    %v2710 = vsel %vm595, %v2709, 0
    %2712 = vmatprep.subr.mxu0 0.0
    %2713 = vmatpush1.msra.mxu0 0.0
    %2714 = vmatprep.subr.mxu0 0.0
    %2715 = vmatpush1.msra.mxu0 0.0
    %2716 = vmatprep.subr.mxu0 0.0
    %2717 = vmatpush1.msra.mxu0 0.0
    %2718 = vmatprep.subr.mxu0 0.0
    %2719 = vmatpush1.msra.mxu0 0.0
    %2720 = vmatprep.subr.mxu0 0.0
    %2721 = vmatpush1.msra.mxu0 0.0
    %2722 = vmatprep.subr.mxu0 0.0
    %2723 = vmatpush1.msra.mxu0 0.0
    %2724 = vmatprep.subr.mxu0 0.0
    %2725 = vmatpush1.msra.mxu0 0.0
    %2726 = vmatprep.subr.mxu0 0.0
    %2727 = vmatpush1.msra.mxu0 0.0
    %2728 = vmatprep.subr.mxu0 0.0
    %2729 = vmatpush1.msra.mxu0 0.0
    %2730 = vmatprep.subr.mxu0 0.0
    %2731 = vmatpush1.msra.mxu0 0.0
    %2732 = vmatprep.subr.mxu0 0.0
    %2733 = vmatpush1.msra.mxu0 0.0
    %2734 = vmatprep.subr.mxu0 0.0
    %2735 = vmatpush1.msra.mxu0 0.0
    %2736 = vmatprep.subr.mxu0 0.0
    %2737 = vmatpush1.msra.mxu0 0.0
    %2738 = vmatprep.subr.mxu0 0.0
    %2739 = vmatpush1.msra.mxu0 0.0
    %2740 = vmatprep.subr.mxu0 0.0
    %2741 = vmatpush1.msra.mxu0 %v2708
    %2742 = vmatprep.subr.mxu0 0.0
    %2743 = vmatpush1.msra.mxu0 %v2707
    %2744 = vmatprep.subr.mxu0 0.0
    %2745 = vmatpush2.msra.mxu0 0.0
    %2746 = vmatprep.subr.mxu0 0.0
    %2747 = vmatpush2.msra.mxu0 0.0
    %2748 = vmatprep.subr.mxu0 0.0
    %2749 = vmatpush2.msra.mxu0 0.0
    %2750 = vmatprep.subr.mxu0 0.0
    %2751 = vmatpush2.msra.mxu0 0.0
    %2752 = vmatprep.subr.mxu0 0.0
    %2753 = vmatpush2.msra.mxu0 0.0
    %2754 = vmatprep.subr.mxu0 0.0
    %2755 = vmatpush2.msra.mxu0 0.0
    %2756 = vmatprep.subr.mxu0 0.0
    %2757 = vmatpush2.msra.mxu0 0.0
    %2758 = vmatprep.subr.mxu0 0.0
    %2759 = vmatpush2.msra.mxu0 0.0
    %2760 = vmatprep.subr.mxu0 0.0
    %2761 = vmatpush2.msra.mxu0 0.0
    %2762 = vmatprep.subr.mxu0 0.0
    %2763 = vmatpush2.msra.mxu0 0.0
    %2764 = vmatprep.subr.mxu0 0.0
    %2765 = vmatpush2.msra.mxu0 0.0
    %2766 = vmatprep.subr.mxu0 0.0
    %2767 = vmatpush2.msra.mxu0 0.0
    %2768 = vmatprep.subr.mxu0 0.0
    %2769 = vmatpush2.msra.mxu0 0.0
    %2770 = vmatprep.subr.mxu0 0.0
    %2771 = vmatpush2.msra.mxu0 0.0
    %2772 = vmatprep.subr.mxu0 0.0
    %2773 = vmatpush2.msra.mxu0 0.0
    %2774 = vmatprep.subr.mxu0 0.0
    %2775 = vmatpush2.msra.mxu0 0.0
    %2776 = vmatprep.mubr.f32.mxu0 0.0
    %2777 = vmatmul.mubr.f32.gmra.mxu0 %v2710
    %v2778 = vpop.f32.mrf.mxu0
    %v2779 = vadd.f32 0.0, %v2778
    %v2780 = vpop.f32.mrf.mxu0
    %2781 = vdwg.mxu0
    %v2782 = vadd.f32 %v2705, %v2779
    %s2783 = scalar_lea.vmem %s5, 384
    %v2784 = vld [vmem:[%s2783] sm:$0xff]
    %v2785 = vld [vmem:[%s2783 + $0x8] sm:$0xff]
    %v2787 = vsel %vm595, %v937, 0
    %2789 = vmatprep.subr.mxu0 0.0
    %2790 = vmatpush1.msra.mxu0 0.0
    %2791 = vmatprep.subr.mxu0 0.0
    %2792 = vmatpush1.msra.mxu0 0.0
    %2793 = vmatprep.subr.mxu0 0.0
    %2794 = vmatpush1.msra.mxu0 0.0
    %2795 = vmatprep.subr.mxu0 0.0
    %2796 = vmatpush1.msra.mxu0 0.0
    %2797 = vmatprep.subr.mxu0 0.0
    %2798 = vmatpush1.msra.mxu0 0.0
    %2799 = vmatprep.subr.mxu0 0.0
    %2800 = vmatpush1.msra.mxu0 0.0
    %2801 = vmatprep.subr.mxu0 0.0
    %2802 = vmatpush1.msra.mxu0 0.0
    %2803 = vmatprep.subr.mxu0 0.0
    %2804 = vmatpush1.msra.mxu0 0.0
    %2805 = vmatprep.subr.mxu0 0.0
    %2806 = vmatpush1.msra.mxu0 0.0
    %2807 = vmatprep.subr.mxu0 0.0
    %2808 = vmatpush1.msra.mxu0 0.0
    %2809 = vmatprep.subr.mxu0 0.0
    %2810 = vmatpush1.msra.mxu0 0.0
    %2811 = vmatprep.subr.mxu0 0.0
    %2812 = vmatpush1.msra.mxu0 0.0
    %2813 = vmatprep.subr.mxu0 0.0
    %2814 = vmatpush1.msra.mxu0 0.0
    %2815 = vmatprep.subr.mxu0 0.0
    %2816 = vmatpush1.msra.mxu0 0.0
    %2817 = vmatprep.subr.mxu0 0.0
    %2818 = vmatpush1.msra.mxu0 %v2785
    %2819 = vmatprep.subr.mxu0 0.0
    %2820 = vmatpush1.msra.mxu0 %v2784
    %2821 = vmatprep.subr.mxu0 0.0
    %2822 = vmatpush2.msra.mxu0 0.0
    %2823 = vmatprep.subr.mxu0 0.0
    %2824 = vmatpush2.msra.mxu0 0.0
    %2825 = vmatprep.subr.mxu0 0.0
    %2826 = vmatpush2.msra.mxu0 0.0
    %2827 = vmatprep.subr.mxu0 0.0
    %2828 = vmatpush2.msra.mxu0 0.0
    %2829 = vmatprep.subr.mxu0 0.0
    %2830 = vmatpush2.msra.mxu0 0.0
    %2831 = vmatprep.subr.mxu0 0.0
    %2832 = vmatpush2.msra.mxu0 0.0
    %2833 = vmatprep.subr.mxu0 0.0
    %2834 = vmatpush2.msra.mxu0 0.0
    %2835 = vmatprep.subr.mxu0 0.0
    %2836 = vmatpush2.msra.mxu0 0.0
    %2837 = vmatprep.subr.mxu0 0.0
    %2838 = vmatpush2.msra.mxu0 0.0
    %2839 = vmatprep.subr.mxu0 0.0
    %2840 = vmatpush2.msra.mxu0 0.0
    %2841 = vmatprep.subr.mxu0 0.0
    %2842 = vmatpush2.msra.mxu0 0.0
    %2843 = vmatprep.subr.mxu0 0.0
    %2844 = vmatpush2.msra.mxu0 0.0
    %2845 = vmatprep.subr.mxu0 0.0
    %2846 = vmatpush2.msra.mxu0 0.0
    %2847 = vmatprep.subr.mxu0 0.0
    %2848 = vmatpush2.msra.mxu0 0.0
    %2849 = vmatprep.subr.mxu0 0.0
    %2850 = vmatpush2.msra.mxu0 0.0
    %2851 = vmatprep.subr.mxu0 0.0
    %2852 = vmatpush2.msra.mxu0 0.0
    %2853 = vmatprep.mubr.f32.mxu0 0.0
    %2854 = vmatmul.mubr.f32.gmra.mxu0 %v2787
    %v2855 = vpop.f32.mrf.mxu0
    %v2856 = vadd.f32 0.0, %v2855
    %v2857 = vpop.f32.mrf.mxu0
    %2858 = vdwg.mxu0
    %v2859 = vadd.f32 %v2782, %v2856
    %v2860 = vld [vmem:[%s6] sm:$0x1]
    %v2862 = vlaneseq
    %v2863 = vshrl.u32 %v2862, 7
    %v2864 = vsub.s32 0, %v2863
    %v2865 = vrot.slane %v2860, %v2864
    %v2867 = vadd.f32 %v2859, %v2865
    %v2868 = vmax.f32 %v2867, 0.0
    %v2869 = vld [vmem:[%s7] sm:$0xff]
    %v2870 = vld [vmem:[%s7 + $0x8] sm:$0xff]
    %v2871 = vld [vmem:[%s7 + $0x10] sm:$0xff]
    %v2872 = vld [vmem:[%s7 + $0x18] sm:$0xff]
    %v2873 = vld [vmem:[%s7 + $0x20] sm:$0xff]
    %v2874 = vld [vmem:[%s7 + $0x28] sm:$0xff]
    %v2875 = vld [vmem:[%s7 + $0x30] sm:$0xff]
    %v2876 = vld [vmem:[%s7 + $0x38] sm:$0xff]
    %v2877 = vld [vmem:[%s7 + $0x40] sm:$0xff]
    %v2878 = vld [vmem:[%s7 + $0x48] sm:$0xff]
    %v2879 = vld [vmem:[%s7 + $0x50] sm:$0xff]
    %v2880 = vld [vmem:[%s7 + $0x58] sm:$0xff]
    %v2881 = vld [vmem:[%s7 + $0x60] sm:$0xff]
    %v2882 = vld [vmem:[%s7 + $0x68] sm:$0xff]
    %v2883 = vld [vmem:[%s7 + $0x70] sm:$0xff]
    %v2884 = vld [vmem:[%s8] sm:$0x1]
    %v2886 = vlaneseq
    %v2887 = vshrl.u32 %v2886, 7
    %v2888 = vsub.s32 0, %v2887
    %v2889 = vrot.slane %v2884, %v2888
    %vm2891 = vcmask 982016
    %v2893 = vsel %vm2891, %v2868, 0
    %2895 = vmatprep.subr.mxu0 0.0
    %2896 = vmatpush1.msra.mxu0 0.0
    %2897 = vmatprep.subr.mxu0 0.0
    %2898 = vmatpush1.msra.mxu0 %v2883
    %2899 = vmatprep.subr.mxu0 0.0
    %2900 = vmatpush1.msra.mxu0 %v2882
    %2901 = vmatprep.subr.mxu0 0.0
    %2902 = vmatpush1.msra.mxu0 %v2881
    %2903 = vmatprep.subr.mxu0 0.0
    %2904 = vmatpush1.msra.mxu0 %v2880
    %2905 = vmatprep.subr.mxu0 0.0
    %2906 = vmatpush1.msra.mxu0 %v2879
    %2907 = vmatprep.subr.mxu0 0.0
    %2908 = vmatpush1.msra.mxu0 %v2878
    %2909 = vmatprep.subr.mxu0 0.0
    %2910 = vmatpush1.msra.mxu0 %v2877
    %2911 = vmatprep.subr.mxu0 0.0
    %2912 = vmatpush1.msra.mxu0 %v2876
    %2913 = vmatprep.subr.mxu0 0.0
    %2914 = vmatpush1.msra.mxu0 %v2875
    %2915 = vmatprep.subr.mxu0 0.0
    %2916 = vmatpush1.msra.mxu0 %v2874
    %2917 = vmatprep.subr.mxu0 0.0
    %2918 = vmatpush1.msra.mxu0 %v2873
    %2919 = vmatprep.subr.mxu0 0.0
    %2920 = vmatpush1.msra.mxu0 %v2872
    %2921 = vmatprep.subr.mxu0 0.0
    %2922 = vmatpush1.msra.mxu0 %v2871
    %2923 = vmatprep.subr.mxu0 0.0
    %2924 = vmatpush1.msra.mxu0 %v2870
    %2925 = vmatprep.subr.mxu0 0.0
    %2926 = vmatpush1.msra.mxu0 %v2869
    %2927 = vmatprep.subr.mxu0 0.0
    %2928 = vmatpush2.msra.mxu0 0.0
    %2929 = vmatprep.subr.mxu0 0.0
    %2930 = vmatpush2.msra.mxu0 0.0
    %2931 = vmatprep.subr.mxu0 0.0
    %2932 = vmatpush2.msra.mxu0 0.0
    %2933 = vmatprep.subr.mxu0 0.0
    %2934 = vmatpush2.msra.mxu0 0.0
    %2935 = vmatprep.subr.mxu0 0.0
    %2936 = vmatpush2.msra.mxu0 0.0
    %2937 = vmatprep.subr.mxu0 0.0
    %2938 = vmatpush2.msra.mxu0 0.0
    %2939 = vmatprep.subr.mxu0 0.0
    %2940 = vmatpush2.msra.mxu0 0.0
    %2941 = vmatprep.subr.mxu0 0.0
    %2942 = vmatpush2.msra.mxu0 0.0
    %2943 = vmatprep.subr.mxu0 0.0
    %2944 = vmatpush2.msra.mxu0 0.0
    %2945 = vmatprep.subr.mxu0 0.0
    %2946 = vmatpush2.msra.mxu0 0.0
    %2947 = vmatprep.subr.mxu0 0.0
    %2948 = vmatpush2.msra.mxu0 0.0
    %2949 = vmatprep.subr.mxu0 0.0
    %2950 = vmatpush2.msra.mxu0 0.0
    %2951 = vmatprep.subr.mxu0 0.0
    %2952 = vmatpush2.msra.mxu0 0.0
    %2953 = vmatprep.subr.mxu0 0.0
    %2954 = vmatpush2.msra.mxu0 0.0
    %2955 = vmatprep.subr.mxu0 0.0
    %2956 = vmatpush2.msra.mxu0 0.0
    %2957 = vmatprep.subr.mxu0 0.0
    %2958 = vmatpush2.msra.mxu0 0.0
    %2959 = vmatprep.mubr.f32.mxu0 0.0
    %2960 = vmatmul.mubr.f32.gmra.mxu0 %v2893
    %v2961 = vpop.f32.mrf.mxu0
    %v2962 = vadd.f32 %v2889, %v2961
    %v2963 = vpop.f32.mrf.mxu0
    %2964 = vdwg.mxu0
    %v2965 = vmax.f32 %v2962, 0.0
    %v2966 = vld [vmem:[%s9] sm:$0xff]
    %v2967 = vld [vmem:[%s9 + $0x8] sm:$0xff]
    %v2968 = vld [vmem:[%s9 + $0x10] sm:$0xff]
    %v2969 = vld [vmem:[%s9 + $0x18] sm:$0xff]
    %v2970 = vld [vmem:[%s9 + $0x20] sm:$0xff]
    %v2971 = vld [vmem:[%s9 + $0x28] sm:$0xff]
    %v2972 = vld [vmem:[%s9 + $0x30] sm:$0xff]
    %v2973 = vld [vmem:[%s9 + $0x38] sm:$0xff]
    %v2974 = vld [vmem:[%s9 + $0x40] sm:$0xff]
    %v2975 = vld [vmem:[%s9 + $0x48] sm:$0xff]
    %v2976 = vld [vmem:[%s9 + $0x50] sm:$0xf]
    %v2977 = vld [vmem:[%s10] sm:$0x1]
    %v2979 = vlaneseq
    %v2980 = vshrl.u32 %v2979, 7
    %v2981 = vsub.s32 0, %v2980
    %v2982 = vrot.slane %v2977, %v2981
    %vm2984 = vcmask 687104
    %v2986 = vsel %vm2984, %v2965, 0
    %vm2988 = vcmask 1043456
    %v2990 = vsel %vm2988, %v2976, 0
    %2992 = vmatprep.subr.mxu0 0.0
    %2993 = vmatpush1.msra.mxu0 0.0
    %2994 = vmatprep.subr.mxu0 0.0
    %2995 = vmatpush1.msra.mxu0 0.0
    %2996 = vmatprep.subr.mxu0 0.0
    %2997 = vmatpush1.msra.mxu0 0.0
    %2998 = vmatprep.subr.mxu0 0.0
    %2999 = vmatpush1.msra.mxu0 0.0
    %3000 = vmatprep.subr.mxu0 0.0
    %3001 = vmatpush1.msra.mxu0 0.0
    %3002 = vmatprep.subr.mxu0 0.0
    %3003 = vmatpush1.msra.mxu0 %v2990
    %3004 = vmatprep.subr.mxu0 0.0
    %3005 = vmatpush1.msra.mxu0 %v2975
    %3006 = vmatprep.subr.mxu0 0.0
    %3007 = vmatpush1.msra.mxu0 %v2974
    %3008 = vmatprep.subr.mxu0 0.0
    %3009 = vmatpush1.msra.mxu0 %v2973
    %3010 = vmatprep.subr.mxu0 0.0
    %3011 = vmatpush1.msra.mxu0 %v2972
    %3012 = vmatprep.subr.mxu0 0.0
    %3013 = vmatpush1.msra.mxu0 %v2971
    %3014 = vmatprep.subr.mxu0 0.0
    %3015 = vmatpush1.msra.mxu0 %v2970
    %3016 = vmatprep.subr.mxu0 0.0
    %3017 = vmatpush1.msra.mxu0 %v2969
    %3018 = vmatprep.subr.mxu0 0.0
    %3019 = vmatpush1.msra.mxu0 %v2968
    %3020 = vmatprep.subr.mxu0 0.0
    %3021 = vmatpush1.msra.mxu0 %v2967
    %3022 = vmatprep.subr.mxu0 0.0
    %3023 = vmatpush1.msra.mxu0 %v2966
    %3024 = vmatprep.subr.mxu0 0.0
    %3025 = vmatpush2.msra.mxu0 0.0
    %3026 = vmatprep.subr.mxu0 0.0
    %3027 = vmatpush2.msra.mxu0 0.0
    %3028 = vmatprep.subr.mxu0 0.0
    %3029 = vmatpush2.msra.mxu0 0.0
    %3030 = vmatprep.subr.mxu0 0.0
    %3031 = vmatpush2.msra.mxu0 0.0
    %3032 = vmatprep.subr.mxu0 0.0
    %3033 = vmatpush2.msra.mxu0 0.0
    %3034 = vmatprep.subr.mxu0 0.0
    %3035 = vmatpush2.msra.mxu0 0.0
    %3036 = vmatprep.subr.mxu0 0.0
    %3037 = vmatpush2.msra.mxu0 0.0
    %3038 = vmatprep.subr.mxu0 0.0
    %3039 = vmatpush2.msra.mxu0 0.0
    %3040 = vmatprep.subr.mxu0 0.0
    %3041 = vmatpush2.msra.mxu0 0.0
    %3042 = vmatprep.subr.mxu0 0.0
    %3043 = vmatpush2.msra.mxu0 0.0
    %3044 = vmatprep.subr.mxu0 0.0
    %3045 = vmatpush2.msra.mxu0 0.0
    %3046 = vmatprep.subr.mxu0 0.0
    %3047 = vmatpush2.msra.mxu0 0.0
    %3048 = vmatprep.subr.mxu0 0.0
    %3049 = vmatpush2.msra.mxu0 0.0
    %3050 = vmatprep.subr.mxu0 0.0
    %3051 = vmatpush2.msra.mxu0 0.0
    %3052 = vmatprep.subr.mxu0 0.0
    %3053 = vmatpush2.msra.mxu0 0.0
    %3054 = vmatprep.subr.mxu0 0.0
    %3055 = vmatpush2.msra.mxu0 0.0
    %3056 = vmatprep.mubr.f32.mxu0 0.0
    %3057 = vmatmul.mubr.f32.gmra.mxu0 %v2986
    %v3058 = vpop.f32.mrf.mxu0
    %v3059 = vadd.f32 %v2982, %v3058
    %v3060 = vpop.f32.mrf.mxu0
    %3061 = vdwg.mxu0
    %vm3062 = vcmask 74752
    %3063 = vst.msk [vmem:[#allocation2] sm:$0x3] %vm3062, %v3059
    // Predicated region
    $region46: #{mnist_toy_forward.3} parent=1 // pred_check
      _
    $region47: #{mnist_toy_forward.3} parent=1 // pred_check_branch
      %3065 = sbr.rel (0) target = $region49
    $region48: #{mnist_toy_forward.3} parent=1 // pred_region
      %s3067 = ssub.s32 32, 32
      %3068 = vsyncadd [#allocation3], %s3067
      %s3070 = sshll.u32 [#allocation2], 4
      %s3071 = int_to_ptr.vmem [resolvable:$true] %s3070
      %3073 = dma.vmem_to_hbm [thread:$0]  %s3071, 32, %s11, [#allocation3]
    $region49: #{mnist_toy_forward.3} parent=1 // pred_fallthru
      _
    // Predicated region
    $region50: #{mnist_toy_forward.3} parent=1 // pred_check
      _
    $region51: #{mnist_toy_forward.3} parent=1 // pred_check_branch
      %3075 = sbr.rel (0) target = $region53
    $region52: #{mnist_toy_forward.3} parent=1 // pred_region
      %3076 = dma.done [#allocation3], 32
    $region53: #{mnist_toy_forward.3} parent=1 // pred_fallthru
      _
    %3077 = vsyncpa [#allocation3], 1

</llo_original>
